<compile_context>
chip_gen: v6e
topology: v6e:2x2x1
jax: 0.10.0
libtpu: 0.0.40
codegen_flags: <defaults>
</compile_context>

<pallas_src>
import functools

import jax
import jax.numpy as jnp
from jax import lax
from jax.experimental import pallas as pl
from jax.experimental.pallas import tpu as pltpu

C_CNN = 128   # Conv1d out_channels (fixed by the module)
LANE = 128


def _round_up(x, m):
    return (x + m - 1) // m * m


def _mish(x):
    # x * tanh(softplus(x)); numerically-stable softplus.
    sp = jnp.maximum(x, 0.0) + jnp.log(1.0 + jnp.exp(-jnp.abs(x)))
    return x * jnp.tanh(sp)


# ------------------------------ Pallas kernel --------------------------------
def _make_kernel(L, TB, d_model, kernel_size, num_lstm_layers, Hp, Ppad):
    pad = kernel_size // 2

    def _sigmoid(x):
        # EUP exp + approx reciprocal (off the VALU critical path).
        return pl.reciprocal(1.0 + jnp.exp(-x), approx=True)

    def kernel(*refs):
        idx = 0
        x_ref = refs[idx]; idx += 1                      # (L, TB, d_model) f32
        cw_ref = refs[idx]; idx += 1                     # (k, d_model, 128) bf16
        cb_ref = refs[idx]; idx += 1                     # (1, 128) f32
        lstm_refs = []
        for _ in range(num_lstm_layers):                 # (in,4Hp)bf16,(Hp,4Hp)bf16,(1,4Hp)f32
            lstm_refs.append((refs[idx], refs[idx + 1], refs[idx + 2]))
            idx += 3
        fcw_ref, fcb_ref = refs[idx], refs[idx + 1]; idx += 2
        p1w_ref, p1b_ref, p2w_ref, p2b_ref, p3w_ref, p3b_ref = refs[idx:idx + 6]
        idx += 6
        out_ref = refs[idx]; idx += 1                    # (L, TB, Ppad) f32
        pad_ref, gx_ref, seq_ref = refs[idx:idx + 3]     # VMEM scratch

        # ---- Conv1d as k tap-wise matmuls on a time-major padded buffer + ReLU.
        # MaxPool1d(kernel_size=1) is the identity. Only the halo rows are
        # zeroed (tiny) — body rows are always overwritten below.
        if pad > 0:
            halo = jnp.zeros((pad * TB, d_model), jnp.float32)
            pad_ref[0:pad * TB, :] = halo
            pad_ref[(pad + L) * TB:(2 * pad + L) * TB, :] = halo
        for l in range(L):                               # static, tile-aligned stores
            pad_ref[(pad + l) * TB:(pad + l + 1) * TB, :] = x_ref[l]

        acc = jnp.zeros((L * TB, C_CNN), jnp.float32)
        for t in range(kernel_size):                     # static unroll; aligned slices
            lhs = pad_ref[t * TB:(t + L) * TB, :].astype(jnp.bfloat16)
            acc = acc + jnp.dot(lhs, cw_ref[t], preferred_element_type=jnp.float32)
        layer_in = jnp.maximum(acc + cb_ref[...], 0.0)   # (L*TB, 128) f32

        # --------------------------- stacked LSTM ------------------------------
        for layer in range(num_lstm_layers):
            w_ih_ref, w_hh_ref, b_ref = lstm_refs[layer]

            # Hoisted input projection: one big MXU matmul per layer (+ bias).
            gx_ref[...] = jnp.dot(layer_in.astype(jnp.bfloat16), w_ih_ref[...],
                                  preferred_element_type=jnp.float32) + b_ref[...]
            w_hh = w_hh_ref[...]                         # (Hp, 4Hp) bf16

            def step(t, carry, w_hh=w_hh):
                h, c = carry
                row = t * TB if isinstance(t, int) else pl.multiple_of(t * TB, TB)
                gates = gx_ref[pl.ds(row, TB), :] + jnp.dot(
                    h.astype(jnp.bfloat16), w_hh, preferred_element_type=jnp.float32)
                # gate order i, f, g, o; each gate is a 128-lane-aligned block.
                ig = _sigmoid(gates[:, 0 * Hp:1 * Hp])
                fg = _sigmoid(gates[:, 1 * Hp:2 * Hp])
                gg = jnp.tanh(gates[:, 2 * Hp:3 * Hp])
                og = _sigmoid(gates[:, 3 * Hp:4 * Hp])
                c_new = fg * c + ig * gg
                h_new = og * jnp.tanh(c_new)
                seq_ref[pl.ds(row, TB), :] = h_new       # full (TB, Hp) slab store
                return (h_new, c_new)

            carry = (jnp.zeros((TB, Hp), jnp.float32),
                     jnp.zeros((TB, Hp), jnp.float32))
            if L <= 64:
                # Full unroll: gives the LLO scheduler cross-step visibility.
                for t in range(L):
                    carry = step(t, carry)
            else:
                carry = lax.fori_loop(0, L, step, carry)

            layer_in = seq_ref[...]                      # (L*TB, Hp) f32

        # ------------------------- fc + projection head ------------------------
        y = jnp.dot(layer_in.astype(jnp.bfloat16), fcw_ref[...],
                    preferred_element_type=jnp.float32) + fcb_ref[...]
        z = _mish(jnp.dot(y.astype(jnp.bfloat16), p1w_ref[...],
                          preferred_element_type=jnp.float32) + p1b_ref[...])
        z = _mish(jnp.dot(z.astype(jnp.bfloat16), p2w_ref[...],
                          preferred_element_type=jnp.float32) + p2b_ref[...])
        z = jnp.dot(z.astype(jnp.bfloat16), p3w_ref[...],
                    preferred_element_type=jnp.float32) + p3b_ref[...]   # (L*TB, Ppad)

        for l in range(L):                               # lane-dense (TB, 128) stores
            out_ref[l] = z[l * TB:(l + 1) * TB, :]

    return kernel


# ------------------------------- wrapper -------------------------------------
def cnn_lstm_decoder(x, params, *, kernel_size, num_lstm_layers, pred_len,
                     batch_tile=None):
    (conv_w, conv_b, lstm_params, fc_w, fc_b,
     p1w, p1b, p2w, p2b, p3w, p3b) = params
    assert kernel_size % 2 == 1, "odd kernel_size required for same-length conv"
    B, L, d_model = x.shape
    H = d_model
    Hp = _round_up(H, LANE)           # lane-aligned hidden width
    Ppad = _round_up(pred_len, LANE)  # lane-dense output width
    pad = kernel_size // 2

    if batch_tile is None:
        batch_tile = min(_round_up(B, 8), 128)
    TB = batch_tile
    B_pad = _round_up(B, TB)
    nb = B_pad // TB

    f32, bf16 = jnp.float32, jnp.bfloat16

    # Time-major, batch-padded input: (L, B_pad, d_model).
    xp = jnp.pad(x.astype(f32), ((0, B_pad - B), (0, 0), (0, 0)))
    xt = jnp.transpose(xp, (1, 0, 2))

    # Pad LSTM weights so every gate occupies a 128-lane-aligned block; the
    # padded lanes carry exactly-zero hidden state through the recurrence.
    def pad_gate_cols(w):
        parts = jnp.split(w, 4, axis=-1)
        parts = [jnp.pad(p, [(0, 0)] * (w.ndim - 1) + [(0, Hp - H)]) for p in parts]
        return jnp.concatenate(parts, axis=-1)

    lstm_padded = []
    for layer, (w_ih, w_hh, bias) in enumerate(lstm_params):
        in_size = C_CNN if layer == 0 else H
        in_pad = C_CNN if layer == 0 else Hp
        w_ih_p = jnp.pad(pad_gate_cols(w_ih), ((0, in_pad - in_size), (0, 0)))
        w_hh_p = jnp.pad(pad_gate_cols(w_hh), ((0, Hp - H), (0, 0)))
        lstm_padded.append((w_ih_p.astype(bf16), w_hh_p.astype(bf16),
                            pad_gate_cols(bias).astype(f32)))

    fc_w_p = jnp.pad(fc_w, ((0, Hp - H), (0, 0))).astype(bf16)
    p3w_p = jnp.pad(p3w, ((0, 0), (0, Ppad - pred_len))).astype(bf16)
    p3b_p = jnp.pad(p3b, ((0, 0), (0, Ppad - pred_len))).astype(f32)

    kernel = _make_kernel(L, TB, d_model, kernel_size, num_lstm_layers, Hp, Ppad)

    def full_spec(arr):
        nd = arr.ndim
        return pl.BlockSpec(arr.shape, lambda b, nd=nd: (0,) * nd)

    flat_inputs = [xt, conv_w.astype(bf16), conv_b.astype(f32)]
    in_specs = [pl.BlockSpec((L, TB, d_model), lambda b: (0, b, 0)),
                full_spec(conv_w), full_spec(conv_b)]
    for (w_ih, w_hh, bias) in lstm_padded:
        flat_inputs += [w_ih, w_hh, bias]
        in_specs += [full_spec(w_ih), full_spec(w_hh), full_spec(bias)]
    for arr in (fc_w_p, fc_b.astype(f32), p1w.astype(bf16), p1b.astype(f32),
                p2w.astype(bf16), p2b.astype(f32), p3w_p, p3b_p):
        flat_inputs.append(arr)
        in_specs.append(full_spec(arr))

    out = pl.pallas_call(
        kernel,
        out_shape=jax.ShapeDtypeStruct((L, B_pad, Ppad), f32),
        grid_spec=pltpu.PrefetchScalarGridSpec(
            num_scalar_prefetch=0,
            grid=(nb,),
            in_specs=in_specs,
            out_specs=pl.BlockSpec((L, TB, Ppad), lambda b: (0, b, 0)),
            scratch_shapes=[
                pltpu.VMEM(((L + 2 * pad) * TB, d_model), f32),  # padded conv input
                pltpu.VMEM((L * TB, 4 * Hp), f32),               # hoisted gate proj.
                pltpu.VMEM((L * TB, Hp), f32),                   # LSTM layer output
            ],
        ),
        # Batch tiles are independent -> megacore/v7x can shard them across TCs.
        compiler_params=pltpu.CompilerParams(dimension_semantics=("parallel",)),
    )(*flat_inputs)

    # (L, B_pad, Ppad) -> (B, L, pred_len)
    return jnp.transpose(out, (1, 0, 2))[:B, :, :pred_len]


# --------------------------- pure-JAX reference -------------------------------
def reference(x, params, *, kernel_size, num_lstm_layers, pred_len):
    (conv_w, conv_b, lstm_params, fc_w, fc_b,
     p1w, p1b, p2w, p2b, p3w, p3b) = params
    B, L, D = x.shape
    H = D
    pad = kernel_size // 2
    xp = jnp.pad(x, ((0, 0), (pad, pad), (0, 0)))
    conv = jnp.zeros((B, L, C_CNN), jnp.float32)
    for t in range(kernel_size):
        conv = conv + jnp.einsum('bld,do->blo', xp[:, t:t + L, :], conv_w[t])
    seq = jnp.maximum(conv + conv_b, 0.0)

    def sigmoid(v):
        return 1.0 / (1.0 + jnp.exp(-v))

    for (w_ih, w_hh, bias) in lstm_params:
        def step(carry, x_t, w_ih=w_ih, w_hh=w_hh, bias=bias):
            h, c = carry
            gates = x_t @ w_ih + h @ w_hh + bias
            ig = sigmoid(gates[:, 0:H]); fg = sigmoid(gates[:, H:2 * H])
            gg = jnp.tanh(gates[:, 2 * H:3 * H]); og = sigmoid(gates[:, 3 * H:4 * H])
            c = fg * c + ig * gg
            h = og * jnp.tanh(c)
            return (h, c), h
        init = (jnp.zeros((B, H), jnp.float32), jnp.zeros((B, H), jnp.float32))
        _, hs = lax.scan(step, init, jnp.swapaxes(seq, 0, 1))
        seq = jnp.swapaxes(hs, 0, 1)
    y = seq @ fc_w + fc_b
    z = _mish(y @ p1w + p1b)
    z = _mish(z @ p2w + p2b)
    return z @ p3w + p3b


# ------------------------------ param init ------------------------------------
def init_params(key, d_model, pred_len, kernel_size, num_lstm_layers, d_ff):
    H = d_model

    def uni(key, shape, fan_in):
        s = 1.0 / jnp.sqrt(jnp.float32(fan_in))
        return jax.random.uniform(key, shape, jnp.float32, -s, s)

    keys = iter(jax.random.split(key, 64))
    conv_w = uni(next(keys), (kernel_size, d_model, C_CNN), d_model * kernel_size)
    conv_b = uni(next(keys), (1, C_CNN), d_model * kernel_size)
    lstm_params = []
    for layer in range(num_lstm_layers):
        in_size = C_CNN if layer == 0 else H
        w_ih = uni(next(keys), (in_size, 4 * H), H)
        w_hh = uni(next(keys), (H, 4 * H), H)
        bias = uni(next(keys), (1, 4 * H), H) + uni(next(keys), (1, 4 * H), H)  # b_ih+b_hh
        lstm_params.append((w_ih, w_hh, bias))
    fc_w = uni(next(keys), (H, d_ff), H)
    fc_b = uni(next(keys), (1, d_ff), H)
    p1w = uni(next(keys), (d_ff, 128), d_ff)
    p1b = uni(next(keys), (1, 128), d_ff)
    p2w = uni(next(keys), (128, 64), 128)
    p2b = uni(next(keys), (1, 64), 128)
    p3w = uni(next(keys), (64, pred_len), 64)
    p3b = uni(next(keys), (1, pred_len), 64)
    return (conv_w, conv_b, lstm_params, fc_w, fc_b,
            p1w, p1b, p2w, p2b, p3w, p3b)


# ---------------------------------- main --------------------------------------
if __name__ == "__main__":
    B, L = 2, 8
    d_model, pred_len, kernel_size, num_lstm_layers, d_ff = 32, 4, 3, 2, 64
    # dropout: eval-mode semantics; LSTM inter-layer dropout is a no-op here.

    key = jax.random.PRNGKey(0)
    kx, kp = jax.random.split(key)
    x = jax.random.normal(kx, (B, L, d_model), jnp.float32)
    params = init_params(kp, d_model, pred_len, kernel_size, num_lstm_layers, d_ff)

    run = jax.jit(functools.partial(cnn_lstm_decoder, kernel_size=kernel_size,
                                    num_lstm_layers=num_lstm_layers,
                                    pred_len=pred_len))
    out = jax.block_until_ready(run(x, params))

    ref = jax.block_until_ready(
        reference(x, params, kernel_size=kernel_size,
                  num_lstm_layers=num_lstm_layers, pred_len=pred_len))

    assert out.shape == (B, L, pred_len), out.shape
    max_err = float(jnp.max(jnp.abs(out - ref)))
    scale = 1.0 + float(jnp.max(jnp.abs(ref)))
    # Kernel uses bf16 MXU operands (f32 accumulate) + approx-recip sigmoid,
    # reference is pure f32 -> allow a bf16-level tolerance.
    assert max_err < 3e-2 * scale, f"mismatch: max_err={max_err}"
    print("KERNEL_OK")
</pallas_src>

<mosaic_0001>
module attributes {stable_mosaic.version = 11 : i64} {
  func.func @kernel(%arg0: i32, %arg1: memref<8x8x32xf32, #tpu.memory_space<vmem>>, %arg2: memref<3x32x128xbf16, #tpu.memory_space<vmem>>, %arg3: memref<1x128xf32, #tpu.memory_space<vmem>>, %arg4: memref<128x512xbf16, #tpu.memory_space<vmem>>, %arg5: memref<128x512xbf16, #tpu.memory_space<vmem>>, %arg6: memref<1x512xf32, #tpu.memory_space<vmem>>, %arg7: memref<128x512xbf16, #tpu.memory_space<vmem>>, %arg8: memref<128x512xbf16, #tpu.memory_space<vmem>>, %arg9: memref<1x512xf32, #tpu.memory_space<vmem>>, %arg10: memref<128x64xbf16, #tpu.memory_space<vmem>>, %arg11: memref<1x64xf32, #tpu.memory_space<vmem>>, %arg12: memref<64x128xbf16, #tpu.memory_space<vmem>>, %arg13: memref<1x128xf32, #tpu.memory_space<vmem>>, %arg14: memref<128x64xbf16, #tpu.memory_space<vmem>>, %arg15: memref<1x64xf32, #tpu.memory_space<vmem>>, %arg16: memref<64x128xbf16, #tpu.memory_space<vmem>>, %arg17: memref<1x128xf32, #tpu.memory_space<vmem>>, %arg18: memref<8x8x128xf32, #tpu.memory_space<vmem>>, %arg19: memref<80x32xf32, #tpu.memory_space<vmem>>, %arg20: memref<64x512xf32, #tpu.memory_space<vmem>>, %arg21: memref<64x128xf32, #tpu.memory_space<vmem>>) attributes {dimension_semantics = [#tpu.dimension_semantics<parallel>], iteration_bounds = array<i64: 1>, scalar_prefetch = 0 : i64, scratch_operands = 3 : i64, tpu.core_type = #tpu.core_type<tc>, window_params = [{transform_indices = @transform_0, window_bounds = array<i64: 8, 8, 32>}, {pipeline_mode = #tpu.pipeline_mode<synchronous>, transform_indices = @transform_1, window_bounds = array<i64: 3, 32, 128>}, {pipeline_mode = #tpu.pipeline_mode<synchronous>, transform_indices = @transform_2, window_bounds = array<i64: 1, 128>}, {pipeline_mode = #tpu.pipeline_mode<synchronous>, transform_indices = @transform_3, window_bounds = array<i64: 128, 512>}, {pipeline_mode = #tpu.pipeline_mode<synchronous>, transform_indices = @transform_4, window_bounds = array<i64: 128, 512>}, {pipeline_mode = #tpu.pipeline_mode<synchronous>, transform_indices = @transform_5, window_bounds = array<i64: 1, 512>}, {pipeline_mode = #tpu.pipeline_mode<synchronous>, transform_indices = @transform_6, window_bounds = array<i64: 128, 512>}, {pipeline_mode = #tpu.pipeline_mode<synchronous>, transform_indices = @transform_7, window_bounds = array<i64: 128, 512>}, {pipeline_mode = #tpu.pipeline_mode<synchronous>, transform_indices = @transform_8, window_bounds = array<i64: 1, 512>}, {pipeline_mode = #tpu.pipeline_mode<synchronous>, transform_indices = @transform_9, window_bounds = array<i64: 128, 64>}, {pipeline_mode = #tpu.pipeline_mode<synchronous>, transform_indices = @transform_10, window_bounds = array<i64: 1, 64>}, {pipeline_mode = #tpu.pipeline_mode<synchronous>, transform_indices = @transform_11, window_bounds = array<i64: 64, 128>}, {pipeline_mode = #tpu.pipeline_mode<synchronous>, transform_indices = @transform_12, window_bounds = array<i64: 1, 128>}, {pipeline_mode = #tpu.pipeline_mode<synchronous>, transform_indices = @transform_13, window_bounds = array<i64: 128, 64>}, {pipeline_mode = #tpu.pipeline_mode<synchronous>, transform_indices = @transform_14, window_bounds = array<i64: 1, 64>}, {pipeline_mode = #tpu.pipeline_mode<synchronous>, transform_indices = @transform_15, window_bounds = array<i64: 64, 128>}, {pipeline_mode = #tpu.pipeline_mode<synchronous>, transform_indices = @transform_16, window_bounds = array<i64: 1, 128>}, {transform_indices = @transform_17, window_bounds = array<i64: 8, 8, 128>}]} {
    %cst = arith.constant 0.000000e+00 : f32
    %0 = vector.broadcast %cst : f32 to vector<8x32xf32>
    %c0 = arith.constant 0 : index
    %c0_0 = arith.constant 0 : index
    %1 = vector.load %arg19[%c0, %c0_0] : memref<80x32xf32, #tpu.memory_space<vmem>>, vector<8x32xf32>
    tpu.vector_store %arg19[%c0, %c0_0], %0 {strides = array<i32>} : memref<80x32xf32, #tpu.memory_space<vmem>>, vector<8x32xf32>,
    %c72 = arith.constant 72 : index
    %c0_1 = arith.constant 0 : index
    %2 = vector.load %arg19[%c72, %c0_1] : memref<80x32xf32, #tpu.memory_space<vmem>>, vector<8x32xf32>
    tpu.vector_store %arg19[%c72, %c0_1], %0 {strides = array<i32>} : memref<80x32xf32, #tpu.memory_space<vmem>>, vector<8x32xf32>,
    %c0_2 = arith.constant 0 : index
    %c0_3 = arith.constant 0 : index
    %c0_4 = arith.constant 0 : index
    %3 = vector.load %arg1[%c0_2, %c0_3, %c0_4] : memref<8x8x32xf32, #tpu.memory_space<vmem>>, vector<1x8x32xf32>
    %4 = vector.shape_cast %3 : vector<1x8x32xf32> to vector<8x32xf32>
    %c8 = arith.constant 8 : index
    %c0_5 = arith.constant 0 : index
    %5 = vector.load %arg19[%c8, %c0_5] : memref<80x32xf32, #tpu.memory_space<vmem>>, vector<8x32xf32>
    tpu.vector_store %arg19[%c8, %c0_5], %4 {strides = array<i32>} : memref<80x32xf32, #tpu.memory_space<vmem>>, vector<8x32xf32>,
    %c1 = arith.constant 1 : index
    %c0_6 = arith.constant 0 : index
    %c0_7 = arith.constant 0 : index
    %6 = vector.load %arg1[%c1, %c0_6, %c0_7] : memref<8x8x32xf32, #tpu.memory_space<vmem>>, vector<1x8x32xf32>
    %7 = vector.shape_cast %6 : vector<1x8x32xf32> to vector<8x32xf32>
    %c16 = arith.constant 16 : index
    %c0_8 = arith.constant 0 : index
    %8 = vector.load %arg19[%c16, %c0_8] : memref<80x32xf32, #tpu.memory_space<vmem>>, vector<8x32xf32>
    tpu.vector_store %arg19[%c16, %c0_8], %7 {strides = array<i32>} : memref<80x32xf32, #tpu.memory_space<vmem>>, vector<8x32xf32>,
    %c2 = arith.constant 2 : index
    %c0_9 = arith.constant 0 : index
    %c0_10 = arith.constant 0 : index
    %9 = vector.load %arg1[%c2, %c0_9, %c0_10] : memref<8x8x32xf32, #tpu.memory_space<vmem>>, vector<1x8x32xf32>
    %10 = vector.shape_cast %9 : vector<1x8x32xf32> to vector<8x32xf32>
    %c24 = arith.constant 24 : index
    %c0_11 = arith.constant 0 : index
    %11 = vector.load %arg19[%c24, %c0_11] : memref<80x32xf32, #tpu.memory_space<vmem>>, vector<8x32xf32>
    tpu.vector_store %arg19[%c24, %c0_11], %10 {strides = array<i32>} : memref<80x32xf32, #tpu.memory_space<vmem>>, vector<8x32xf32>,
    %c3 = arith.constant 3 : index
    %c0_12 = arith.constant 0 : index
    %c0_13 = arith.constant 0 : index
    %12 = vector.load %arg1[%c3, %c0_12, %c0_13] : memref<8x8x32xf32, #tpu.memory_space<vmem>>, vector<1x8x32xf32>
    %13 = vector.shape_cast %12 : vector<1x8x32xf32> to vector<8x32xf32>
    %c32 = arith.constant 32 : index
    %c0_14 = arith.constant 0 : index
    %14 = vector.load %arg19[%c32, %c0_14] : memref<80x32xf32, #tpu.memory_space<vmem>>, vector<8x32xf32>
    tpu.vector_store %arg19[%c32, %c0_14], %13 {strides = array<i32>} : memref<80x32xf32, #tpu.memory_space<vmem>>, vector<8x32xf32>,
    %c4 = arith.constant 4 : index
    %c0_15 = arith.constant 0 : index
    %c0_16 = arith.constant 0 : index
    %15 = vector.load %arg1[%c4, %c0_15, %c0_16] : memref<8x8x32xf32, #tpu.memory_space<vmem>>, vector<1x8x32xf32>
    %16 = vector.shape_cast %15 : vector<1x8x32xf32> to vector<8x32xf32>
    %c40 = arith.constant 40 : index
    %c0_17 = arith.constant 0 : index
    %17 = vector.load %arg19[%c40, %c0_17] : memref<80x32xf32, #tpu.memory_space<vmem>>, vector<8x32xf32>
    tpu.vector_store %arg19[%c40, %c0_17], %16 {strides = array<i32>} : memref<80x32xf32, #tpu.memory_space<vmem>>, vector<8x32xf32>,
    %c5 = arith.constant 5 : index
    %c0_18 = arith.constant 0 : index
    %c0_19 = arith.constant 0 : index
    %18 = vector.load %arg1[%c5, %c0_18, %c0_19] : memref<8x8x32xf32, #tpu.memory_space<vmem>>, vector<1x8x32xf32>
    %19 = vector.shape_cast %18 : vector<1x8x32xf32> to vector<8x32xf32>
    %c48 = arith.constant 48 : index
    %c0_20 = arith.constant 0 : index
    %20 = vector.load %arg19[%c48, %c0_20] : memref<80x32xf32, #tpu.memory_space<vmem>>, vector<8x32xf32>
    tpu.vector_store %arg19[%c48, %c0_20], %19 {strides = array<i32>} : memref<80x32xf32, #tpu.memory_space<vmem>>, vector<8x32xf32>,
    %c6 = arith.constant 6 : index
    %c0_21 = arith.constant 0 : index
    %c0_22 = arith.constant 0 : index
    %21 = vector.load %arg1[%c6, %c0_21, %c0_22] : memref<8x8x32xf32, #tpu.memory_space<vmem>>, vector<1x8x32xf32>
    %22 = vector.shape_cast %21 : vector<1x8x32xf32> to vector<8x32xf32>
    %c56 = arith.constant 56 : index
    %c0_23 = arith.constant 0 : index
    %23 = vector.load %arg19[%c56, %c0_23] : memref<80x32xf32, #tpu.memory_space<vmem>>, vector<8x32xf32>
    tpu.vector_store %arg19[%c56, %c0_23], %22 {strides = array<i32>} : memref<80x32xf32, #tpu.memory_space<vmem>>, vector<8x32xf32>,
    %c7 = arith.constant 7 : index
    %c0_24 = arith.constant 0 : index
    %c0_25 = arith.constant 0 : index
    %24 = vector.load %arg1[%c7, %c0_24, %c0_25] : memref<8x8x32xf32, #tpu.memory_space<vmem>>, vector<1x8x32xf32>
    %25 = vector.shape_cast %24 : vector<1x8x32xf32> to vector<8x32xf32>
    %c64 = arith.constant 64 : index
    %c0_26 = arith.constant 0 : index
    %26 = vector.load %arg19[%c64, %c0_26] : memref<80x32xf32, #tpu.memory_space<vmem>>, vector<8x32xf32>
    tpu.vector_store %arg19[%c64, %c0_26], %25 {strides = array<i32>} : memref<80x32xf32, #tpu.memory_space<vmem>>, vector<8x32xf32>,
    %cst_27 = arith.constant 0.000000e+00 : f32
    %27 = vector.broadcast %cst_27 : f32 to vector<64x128xf32>
    %c0_28 = arith.constant 0 : index
    %c0_29 = arith.constant 0 : index
    %28 = vector.load %arg19[%c0_28, %c0_29] : memref<80x32xf32, #tpu.memory_space<vmem>>, vector<64x32xf32>
    %29 = arith.truncf %28 : vector<64x32xf32> to vector<64x32xbf16>
    %c0_30 = arith.constant 0 : index
    %c0_31 = arith.constant 0 : index
    %c0_32 = arith.constant 0 : index
    %30 = vector.load %arg2[%c0_30, %c0_31, %c0_32] : memref<3x32x128xbf16, #tpu.memory_space<vmem>>, vector<1x32x128xbf16>
    %31 = vector.shape_cast %30 : vector<1x32x128xbf16> to vector<32x128xbf16>
    %cst_33 = arith.constant dense<0.000000e+00> : vector<64x128xf32>
    %32 = tpu.matmul %29, %31, %cst_33 {dimension_numbers = #tpu.dot_dimension_numbers<[1], [0], [0], [1], [0, 0, 1, 1], [], []>} : vector<64x32xbf16>, vector<32x128xbf16>, vector<64x128xf32> -> vector<64x128xf32>
    %33 = arith.addf %27, %32 : vector<64x128xf32>
    %c8_34 = arith.constant 8 : index
    %c0_35 = arith.constant 0 : index
    %34 = vector.load %arg19[%c8_34, %c0_35] : memref<80x32xf32, #tpu.memory_space<vmem>>, vector<64x32xf32>
    %35 = arith.truncf %34 : vector<64x32xf32> to vector<64x32xbf16>
    %c1_36 = arith.constant 1 : index
    %c0_37 = arith.constant 0 : index
    %c0_38 = arith.constant 0 : index
    %36 = vector.load %arg2[%c1_36, %c0_37, %c0_38] : memref<3x32x128xbf16, #tpu.memory_space<vmem>>, vector<1x32x128xbf16>
    %37 = vector.shape_cast %36 : vector<1x32x128xbf16> to vector<32x128xbf16>
    %cst_39 = arith.constant dense<0.000000e+00> : vector<64x128xf32>
    %38 = tpu.matmul %35, %37, %cst_39 {dimension_numbers = #tpu.dot_dimension_numbers<[1], [0], [0], [1], [0, 0, 1, 1], [], []>} : vector<64x32xbf16>, vector<32x128xbf16>, vector<64x128xf32> -> vector<64x128xf32>
    %39 = arith.addf %33, %38 : vector<64x128xf32>
    %c16_40 = arith.constant 16 : index
    %c0_41 = arith.constant 0 : index
    %40 = vector.load %arg19[%c16_40, %c0_41] : memref<80x32xf32, #tpu.memory_space<vmem>>, vector<64x32xf32>
    %41 = arith.truncf %40 : vector<64x32xf32> to vector<64x32xbf16>
    %c2_42 = arith.constant 2 : index
    %c0_43 = arith.constant 0 : index
    %c0_44 = arith.constant 0 : index
    %42 = vector.load %arg2[%c2_42, %c0_43, %c0_44] : memref<3x32x128xbf16, #tpu.memory_space<vmem>>, vector<1x32x128xbf16>
    %43 = vector.shape_cast %42 : vector<1x32x128xbf16> to vector<32x128xbf16>
    %cst_45 = arith.constant dense<0.000000e+00> : vector<64x128xf32>
    %44 = tpu.matmul %41, %43, %cst_45 {dimension_numbers = #tpu.dot_dimension_numbers<[1], [0], [0], [1], [0, 0, 1, 1], [], []>} : vector<64x32xbf16>, vector<32x128xbf16>, vector<64x128xf32> -> vector<64x128xf32>
    %45 = arith.addf %39, %44 : vector<64x128xf32>
    %c0_46 = arith.constant 0 : index
    %c0_47 = arith.constant 0 : index
    %46 = vector.load %arg3[%c0_46, %c0_47] : memref<1x128xf32, #tpu.memory_space<vmem>>, vector<1x128xf32>
    %47 = vector.broadcast %46 : vector<1x128xf32> to vector<64x128xf32>
    %48 = arith.addf %45, %47 : vector<64x128xf32>
    %cst_48 = arith.constant 0.000000e+00 : f32
    %49 = vector.broadcast %cst_48 : f32 to vector<64x128xf32>
    %50 = arith.maximumf %48, %49 : vector<64x128xf32>
    %51 = arith.truncf %50 : vector<64x128xf32> to vector<64x128xbf16>
    %c0_49 = arith.constant 0 : index
    %c0_50 = arith.constant 0 : index
    %52 = vector.load %arg4[%c0_49, %c0_50] : memref<128x512xbf16, #tpu.memory_space<vmem>>, vector<128x512xbf16>
    %cst_51 = arith.constant dense<0.000000e+00> : vector<64x512xf32>
    %53 = tpu.matmul %51, %52, %cst_51 {dimension_numbers = #tpu.dot_dimension_numbers<[1], [0], [0], [1], [0, 0, 1, 1], [], []>} : vector<64x128xbf16>, vector<128x512xbf16>, vector<64x512xf32> -> vector<64x512xf32>
    %c0_52 = arith.constant 0 : index
    %c0_53 = arith.constant 0 : index
    %54 = vector.load %arg6[%c0_52, %c0_53] : memref<1x512xf32, #tpu.memory_space<vmem>>, vector<1x512xf32>
    %55 = vector.broadcast %54 : vector<1x512xf32> to vector<64x512xf32>
    %56 = arith.addf %53, %55 : vector<64x512xf32>
    %c0_54 = arith.constant 0 : index
    %c0_55 = arith.constant 0 : index
    %57 = vector.load %arg20[%c0_54, %c0_55] : memref<64x512xf32, #tpu.memory_space<vmem>>, vector<64x512xf32>
    tpu.vector_store %arg20[%c0_54, %c0_55], %56 {strides = array<i32>} : memref<64x512xf32, #tpu.memory_space<vmem>>, vector<64x512xf32>,
    %c0_56 = arith.constant 0 : index
    %c0_57 = arith.constant 0 : index
    %58 = vector.load %arg5[%c0_56, %c0_57] : memref<128x512xbf16, #tpu.memory_space<vmem>>, vector<128x512xbf16>
    %cst_58 = arith.constant 0.000000e+00 : f32
    %59 = vector.broadcast %cst_58 : f32 to vector<8x128xf32>
    %cst_59 = arith.constant 0.000000e+00 : f32
    %60 = vector.broadcast %cst_59 : f32 to vector<8x128xf32>
    %c0_60 = arith.constant 0 : index
    %c0_61 = arith.constant 0 : index
    %61 = vector.load %arg20[%c0_60, %c0_61] : memref<64x512xf32, #tpu.memory_space<vmem>>, vector<8x512xf32>
    %62 = arith.truncf %59 : vector<8x128xf32> to vector<8x128xbf16>
    %cst_62 = arith.constant dense<0.000000e+00> : vector<8x512xf32>
    %63 = tpu.matmul %62, %58, %cst_62 {dimension_numbers = #tpu.dot_dimension_numbers<[1], [0], [0], [1], [0, 0, 1, 1], [], []>} : vector<8x128xbf16>, vector<128x512xbf16>, vector<8x512xf32> -> vector<8x512xf32>
    %64 = arith.addf %61, %63 : vector<8x512xf32>
    %65 = vector.extract_strided_slice %64 {offsets = [0, 0], sizes = [8, 128], strides = [1, 1]} : vector<8x512xf32> to vector<8x128xf32>
    %cst_63 = arith.constant 0.000000e+00 : f32
    %66 = vector.broadcast %cst_63 : f32 to vector<8x128xf32>
    %67 = arith.subf %66, %65 : vector<8x128xf32>
    %68 = math.exp %67 : vector<8x128xf32>
    %cst_64 = arith.constant 1.000000e+00 : f32
    %69 = vector.broadcast %cst_64 : f32 to vector<8x128xf32>
    %70 = arith.addf %69, %68 : vector<8x128xf32>
    %71 = tpu.reciprocal %70 {approx = true} : vector<8x128xf32> -> vector<8x128xf32>
    %72 = vector.extract_strided_slice %64 {offsets = [0, 128], sizes = [8, 128], strides = [1, 1]} : vector<8x512xf32> to vector<8x128xf32>
    %cst_65 = arith.constant 0.000000e+00 : f32
    %73 = vector.broadcast %cst_65 : f32 to vector<8x128xf32>
    %74 = arith.subf %73, %72 : vector<8x128xf32>
    %75 = math.exp %74 : vector<8x128xf32>
    %cst_66 = arith.constant 1.000000e+00 : f32
    %76 = vector.broadcast %cst_66 : f32 to vector<8x128xf32>
    %77 = arith.addf %76, %75 : vector<8x128xf32>
    %78 = tpu.reciprocal %77 {approx = true} : vector<8x128xf32> -> vector<8x128xf32>
    %79 = vector.extract_strided_slice %64 {offsets = [0, 256], sizes = [8, 128], strides = [1, 1]} : vector<8x512xf32> to vector<8x128xf32>
    %80 = math.tanh %79 : vector<8x128xf32>
    %81 = vector.extract_strided_slice %64 {offsets = [0, 384], sizes = [8, 128], strides = [1, 1]} : vector<8x512xf32> to vector<8x128xf32>
    %cst_67 = arith.constant 0.000000e+00 : f32
    %82 = vector.broadcast %cst_67 : f32 to vector<8x128xf32>
    %83 = arith.subf %82, %81 : vector<8x128xf32>
    %84 = math.exp %83 : vector<8x128xf32>
    %cst_68 = arith.constant 1.000000e+00 : f32
    %85 = vector.broadcast %cst_68 : f32 to vector<8x128xf32>
    %86 = arith.addf %85, %84 : vector<8x128xf32>
    %87 = tpu.reciprocal %86 {approx = true} : vector<8x128xf32> -> vector<8x128xf32>
    %88 = arith.mulf %78, %60 : vector<8x128xf32>
    %89 = arith.mulf %71, %80 : vector<8x128xf32>
    %90 = arith.addf %88, %89 : vector<8x128xf32>
    %91 = math.tanh %90 : vector<8x128xf32>
    %92 = arith.mulf %87, %91 : vector<8x128xf32>
    %c0_69 = arith.constant 0 : index
    %c0_70 = arith.constant 0 : index
    %93 = vector.load %arg21[%c0_69, %c0_70] : memref<64x128xf32, #tpu.memory_space<vmem>>, vector<8x128xf32>
    tpu.vector_store %arg21[%c0_69, %c0_70], %92 {strides = array<i32>} : memref<64x128xf32, #tpu.memory_space<vmem>>, vector<8x128xf32>,
    %c8_71 = arith.constant 8 : index
    %c0_72 = arith.constant 0 : index
    %94 = vector.load %arg20[%c8_71, %c0_72] : memref<64x512xf32, #tpu.memory_space<vmem>>, vector<8x512xf32>
    %95 = arith.truncf %92 : vector<8x128xf32> to vector<8x128xbf16>
    %cst_73 = arith.constant dense<0.000000e+00> : vector<8x512xf32>
    %96 = tpu.matmul %95, %58, %cst_73 {dimension_numbers = #tpu.dot_dimension_numbers<[1], [0], [0], [1], [0, 0, 1, 1], [], []>} : vector<8x128xbf16>, vector<128x512xbf16>, vector<8x512xf32> -> vector<8x512xf32>
    %97 = arith.addf %94, %96 : vector<8x512xf32>
    %98 = vector.extract_strided_slice %97 {offsets = [0, 0], sizes = [8, 128], strides = [1, 1]} : vector<8x512xf32> to vector<8x128xf32>
    %cst_74 = arith.constant 0.000000e+00 : f32
    %99 = vector.broadcast %cst_74 : f32 to vector<8x128xf32>
    %100 = arith.subf %99, %98 : vector<8x128xf32>
    %101 = math.exp %100 : vector<8x128xf32>
    %cst_75 = arith.constant 1.000000e+00 : f32
    %102 = vector.broadcast %cst_75 : f32 to vector<8x128xf32>
    %103 = arith.addf %102, %101 : vector<8x128xf32>
    %104 = tpu.reciprocal %103 {approx = true} : vector<8x128xf32> -> vector<8x128xf32>
    %105 = vector.extract_strided_slice %97 {offsets = [0, 128], sizes = [8, 128], strides = [1, 1]} : vector<8x512xf32> to vector<8x128xf32>
    %cst_76 = arith.constant 0.000000e+00 : f32
    %106 = vector.broadcast %cst_76 : f32 to vector<8x128xf32>
    %107 = arith.subf %106, %105 : vector<8x128xf32>
    %108 = math.exp %107 : vector<8x128xf32>
    %cst_77 = arith.constant 1.000000e+00 : f32
    %109 = vector.broadcast %cst_77 : f32 to vector<8x128xf32>
    %110 = arith.addf %109, %108 : vector<8x128xf32>
    %111 = tpu.reciprocal %110 {approx = true} : vector<8x128xf32> -> vector<8x128xf32>
    %112 = vector.extract_strided_slice %97 {offsets = [0, 256], sizes = [8, 128], strides = [1, 1]} : vector<8x512xf32> to vector<8x128xf32>
    %113 = math.tanh %112 : vector<8x128xf32>
    %114 = vector.extract_strided_slice %97 {offsets = [0, 384], sizes = [8, 128], strides = [1, 1]} : vector<8x512xf32> to vector<8x128xf32>
    %cst_78 = arith.constant 0.000000e+00 : f32
    %115 = vector.broadcast %cst_78 : f32 to vector<8x128xf32>
    %116 = arith.subf %115, %114 : vector<8x128xf32>
    %117 = math.exp %116 : vector<8x128xf32>
    %cst_79 = arith.constant 1.000000e+00 : f32
    %118 = vector.broadcast %cst_79 : f32 to vector<8x128xf32>
    %119 = arith.addf %118, %117 : vector<8x128xf32>
    %120 = tpu.reciprocal %119 {approx = true} : vector<8x128xf32> -> vector<8x128xf32>
    %121 = arith.mulf %111, %90 : vector<8x128xf32>
    %122 = arith.mulf %104, %113 : vector<8x128xf32>
    %123 = arith.addf %121, %122 : vector<8x128xf32>
    %124 = math.tanh %123 : vector<8x128xf32>
    %125 = arith.mulf %120, %124 : vector<8x128xf32>
    %c8_80 = arith.constant 8 : index
    %c0_81 = arith.constant 0 : index
    %126 = vector.load %arg21[%c8_80, %c0_81] : memref<64x128xf32, #tpu.memory_space<vmem>>, vector<8x128xf32>
    tpu.vector_store %arg21[%c8_80, %c0_81], %125 {strides = array<i32>} : memref<64x128xf32, #tpu.memory_space<vmem>>, vector<8x128xf32>,
    %c16_82 = arith.constant 16 : index
    %c0_83 = arith.constant 0 : index
    %127 = vector.load %arg20[%c16_82, %c0_83] : memref<64x512xf32, #tpu.memory_space<vmem>>, vector<8x512xf32>
    %128 = arith.truncf %125 : vector<8x128xf32> to vector<8x128xbf16>
    %cst_84 = arith.constant dense<0.000000e+00> : vector<8x512xf32>
    %129 = tpu.matmul %128, %58, %cst_84 {dimension_numbers = #tpu.dot_dimension_numbers<[1], [0], [0], [1], [0, 0, 1, 1], [], []>} : vector<8x128xbf16>, vector<128x512xbf16>, vector<8x512xf32> -> vector<8x512xf32>
    %130 = arith.addf %127, %129 : vector<8x512xf32>
    %131 = vector.extract_strided_slice %130 {offsets = [0, 0], sizes = [8, 128], strides = [1, 1]} : vector<8x512xf32> to vector<8x128xf32>
    %cst_85 = arith.constant 0.000000e+00 : f32
    %132 = vector.broadcast %cst_85 : f32 to vector<8x128xf32>
    %133 = arith.subf %132, %131 : vector<8x128xf32>
    %134 = math.exp %133 : vector<8x128xf32>
    %cst_86 = arith.constant 1.000000e+00 : f32
    %135 = vector.broadcast %cst_86 : f32 to vector<8x128xf32>
    %136 = arith.addf %135, %134 : vector<8x128xf32>
    %137 = tpu.reciprocal %136 {approx = true} : vector<8x128xf32> -> vector<8x128xf32>
    %138 = vector.extract_strided_slice %130 {offsets = [0, 128], sizes = [8, 128], strides = [1, 1]} : vector<8x512xf32> to vector<8x128xf32>
    %cst_87 = arith.constant 0.000000e+00 : f32
    %139 = vector.broadcast %cst_87 : f32 to vector<8x128xf32>
    %140 = arith.subf %139, %138 : vector<8x128xf32>
    %141 = math.exp %140 : vector<8x128xf32>
    %cst_88 = arith.constant 1.000000e+00 : f32
    %142 = vector.broadcast %cst_88 : f32 to vector<8x128xf32>
    %143 = arith.addf %142, %141 : vector<8x128xf32>
    %144 = tpu.reciprocal %143 {approx = true} : vector<8x128xf32> -> vector<8x128xf32>
    %145 = vector.extract_strided_slice %130 {offsets = [0, 256], sizes = [8, 128], strides = [1, 1]} : vector<8x512xf32> to vector<8x128xf32>
    %146 = math.tanh %145 : vector<8x128xf32>
    %147 = vector.extract_strided_slice %130 {offsets = [0, 384], sizes = [8, 128], strides = [1, 1]} : vector<8x512xf32> to vector<8x128xf32>
    %cst_89 = arith.constant 0.000000e+00 : f32
    %148 = vector.broadcast %cst_89 : f32 to vector<8x128xf32>
    %149 = arith.subf %148, %147 : vector<8x128xf32>
    %150 = math.exp %149 : vector<8x128xf32>
    %cst_90 = arith.constant 1.000000e+00 : f32
    %151 = vector.broadcast %cst_90 : f32 to vector<8x128xf32>
    %152 = arith.addf %151, %150 : vector<8x128xf32>
    %153 = tpu.reciprocal %152 {approx = true} : vector<8x128xf32> -> vector<8x128xf32>
    %154 = arith.mulf %144, %123 : vector<8x128xf32>
    %155 = arith.mulf %137, %146 : vector<8x128xf32>
    %156 = arith.addf %154, %155 : vector<8x128xf32>
    %157 = math.tanh %156 : vector<8x128xf32>
    %158 = arith.mulf %153, %157 : vector<8x128xf32>
    %c16_91 = arith.constant 16 : index
    %c0_92 = arith.constant 0 : index
    %159 = vector.load %arg21[%c16_91, %c0_92] : memref<64x128xf32, #tpu.memory_space<vmem>>, vector<8x128xf32>
    tpu.vector_store %arg21[%c16_91, %c0_92], %158 {strides = array<i32>} : memref<64x128xf32, #tpu.memory_space<vmem>>, vector<8x128xf32>,
    %c24_93 = arith.constant 24 : index
    %c0_94 = arith.constant 0 : index
    %160 = vector.load %arg20[%c24_93, %c0_94] : memref<64x512xf32, #tpu.memory_space<vmem>>, vector<8x512xf32>
    %161 = arith.truncf %158 : vector<8x128xf32> to vector<8x128xbf16>
    %cst_95 = arith.constant dense<0.000000e+00> : vector<8x512xf32>
    %162 = tpu.matmul %161, %58, %cst_95 {dimension_numbers = #tpu.dot_dimension_numbers<[1], [0], [0], [1], [0, 0, 1, 1], [], []>} : vector<8x128xbf16>, vector<128x512xbf16>, vector<8x512xf32> -> vector<8x512xf32>
    %163 = arith.addf %160, %162 : vector<8x512xf32>
    %164 = vector.extract_strided_slice %163 {offsets = [0, 0], sizes = [8, 128], strides = [1, 1]} : vector<8x512xf32> to vector<8x128xf32>
    %cst_96 = arith.constant 0.000000e+00 : f32
    %165 = vector.broadcast %cst_96 : f32 to vector<8x128xf32>
    %166 = arith.subf %165, %164 : vector<8x128xf32>
    %167 = math.exp %166 : vector<8x128xf32>
    %cst_97 = arith.constant 1.000000e+00 : f32
    %168 = vector.broadcast %cst_97 : f32 to vector<8x128xf32>
    %169 = arith.addf %168, %167 : vector<8x128xf32>
    %170 = tpu.reciprocal %169 {approx = true} : vector<8x128xf32> -> vector<8x128xf32>
    %171 = vector.extract_strided_slice %163 {offsets = [0, 128], sizes = [8, 128], strides = [1, 1]} : vector<8x512xf32> to vector<8x128xf32>
    %cst_98 = arith.constant 0.000000e+00 : f32
    %172 = vector.broadcast %cst_98 : f32 to vector<8x128xf32>
    %173 = arith.subf %172, %171 : vector<8x128xf32>
    %174 = math.exp %173 : vector<8x128xf32>
    %cst_99 = arith.constant 1.000000e+00 : f32
    %175 = vector.broadcast %cst_99 : f32 to vector<8x128xf32>
    %176 = arith.addf %175, %174 : vector<8x128xf32>
    %177 = tpu.reciprocal %176 {approx = true} : vector<8x128xf32> -> vector<8x128xf32>
    %178 = vector.extract_strided_slice %163 {offsets = [0, 256], sizes = [8, 128], strides = [1, 1]} : vector<8x512xf32> to vector<8x128xf32>
    %179 = math.tanh %178 : vector<8x128xf32>
    %180 = vector.extract_strided_slice %163 {offsets = [0, 384], sizes = [8, 128], strides = [1, 1]} : vector<8x512xf32> to vector<8x128xf32>
    %cst_100 = arith.constant 0.000000e+00 : f32
    %181 = vector.broadcast %cst_100 : f32 to vector<8x128xf32>
    %182 = arith.subf %181, %180 : vector<8x128xf32>
    %183 = math.exp %182 : vector<8x128xf32>
    %cst_101 = arith.constant 1.000000e+00 : f32
    %184 = vector.broadcast %cst_101 : f32 to vector<8x128xf32>
    %185 = arith.addf %184, %183 : vector<8x128xf32>
    %186 = tpu.reciprocal %185 {approx = true} : vector<8x128xf32> -> vector<8x128xf32>
    %187 = arith.mulf %177, %156 : vector<8x128xf32>
    %188 = arith.mulf %170, %179 : vector<8x128xf32>
    %189 = arith.addf %187, %188 : vector<8x128xf32>
    %190 = math.tanh %189 : vector<8x128xf32>
    %191 = arith.mulf %186, %190 : vector<8x128xf32>
    %c24_102 = arith.constant 24 : index
    %c0_103 = arith.constant 0 : index
    %192 = vector.load %arg21[%c24_102, %c0_103] : memref<64x128xf32, #tpu.memory_space<vmem>>, vector<8x128xf32>
    tpu.vector_store %arg21[%c24_102, %c0_103], %191 {strides = array<i32>} : memref<64x128xf32, #tpu.memory_space<vmem>>, vector<8x128xf32>,
    %c32_104 = arith.constant 32 : index
    %c0_105 = arith.constant 0 : index
    %193 = vector.load %arg20[%c32_104, %c0_105] : memref<64x512xf32, #tpu.memory_space<vmem>>, vector<8x512xf32>
    %194 = arith.truncf %191 : vector<8x128xf32> to vector<8x128xbf16>
    %cst_106 = arith.constant dense<0.000000e+00> : vector<8x512xf32>
    %195 = tpu.matmul %194, %58, %cst_106 {dimension_numbers = #tpu.dot_dimension_numbers<[1], [0], [0], [1], [0, 0, 1, 1], [], []>} : vector<8x128xbf16>, vector<128x512xbf16>, vector<8x512xf32> -> vector<8x512xf32>
    %196 = arith.addf %193, %195 : vector<8x512xf32>
    %197 = vector.extract_strided_slice %196 {offsets = [0, 0], sizes = [8, 128], strides = [1, 1]} : vector<8x512xf32> to vector<8x128xf32>
    %cst_107 = arith.constant 0.000000e+00 : f32
    %198 = vector.broadcast %cst_107 : f32 to vector<8x128xf32>
    %199 = arith.subf %198, %197 : vector<8x128xf32>
    %200 = math.exp %199 : vector<8x128xf32>
    %cst_108 = arith.constant 1.000000e+00 : f32
    %201 = vector.broadcast %cst_108 : f32 to vector<8x128xf32>
    %202 = arith.addf %201, %200 : vector<8x128xf32>
    %203 = tpu.reciprocal %202 {approx = true} : vector<8x128xf32> -> vector<8x128xf32>
    %204 = vector.extract_strided_slice %196 {offsets = [0, 128], sizes = [8, 128], strides = [1, 1]} : vector<8x512xf32> to vector<8x128xf32>
    %cst_109 = arith.constant 0.000000e+00 : f32
    %205 = vector.broadcast %cst_109 : f32 to vector<8x128xf32>
    %206 = arith.subf %205, %204 : vector<8x128xf32>
    %207 = math.exp %206 : vector<8x128xf32>
    %cst_110 = arith.constant 1.000000e+00 : f32
    %208 = vector.broadcast %cst_110 : f32 to vector<8x128xf32>
    %209 = arith.addf %208, %207 : vector<8x128xf32>
    %210 = tpu.reciprocal %209 {approx = true} : vector<8x128xf32> -> vector<8x128xf32>
    %211 = vector.extract_strided_slice %196 {offsets = [0, 256], sizes = [8, 128], strides = [1, 1]} : vector<8x512xf32> to vector<8x128xf32>
    %212 = math.tanh %211 : vector<8x128xf32>
    %213 = vector.extract_strided_slice %196 {offsets = [0, 384], sizes = [8, 128], strides = [1, 1]} : vector<8x512xf32> to vector<8x128xf32>
    %cst_111 = arith.constant 0.000000e+00 : f32
    %214 = vector.broadcast %cst_111 : f32 to vector<8x128xf32>
    %215 = arith.subf %214, %213 : vector<8x128xf32>
    %216 = math.exp %215 : vector<8x128xf32>
    %cst_112 = arith.constant 1.000000e+00 : f32
    %217 = vector.broadcast %cst_112 : f32 to vector<8x128xf32>
    %218 = arith.addf %217, %216 : vector<8x128xf32>
    %219 = tpu.reciprocal %218 {approx = true} : vector<8x128xf32> -> vector<8x128xf32>
    %220 = arith.mulf %210, %189 : vector<8x128xf32>
    %221 = arith.mulf %203, %212 : vector<8x128xf32>
    %222 = arith.addf %220, %221 : vector<8x128xf32>
    %223 = math.tanh %222 : vector<8x128xf32>
    %224 = arith.mulf %219, %223 : vector<8x128xf32>
    %c32_113 = arith.constant 32 : index
    %c0_114 = arith.constant 0 : index
    %225 = vector.load %arg21[%c32_113, %c0_114] : memref<64x128xf32, #tpu.memory_space<vmem>>, vector<8x128xf32>
    tpu.vector_store %arg21[%c32_113, %c0_114], %224 {strides = array<i32>} : memref<64x128xf32, #tpu.memory_space<vmem>>, vector<8x128xf32>,
    %c40_115 = arith.constant 40 : index
    %c0_116 = arith.constant 0 : index
    %226 = vector.load %arg20[%c40_115, %c0_116] : memref<64x512xf32, #tpu.memory_space<vmem>>, vector<8x512xf32>
    %227 = arith.truncf %224 : vector<8x128xf32> to vector<8x128xbf16>
    %cst_117 = arith.constant dense<0.000000e+00> : vector<8x512xf32>
    %228 = tpu.matmul %227, %58, %cst_117 {dimension_numbers = #tpu.dot_dimension_numbers<[1], [0], [0], [1], [0, 0, 1, 1], [], []>} : vector<8x128xbf16>, vector<128x512xbf16>, vector<8x512xf32> -> vector<8x512xf32>
    %229 = arith.addf %226, %228 : vector<8x512xf32>
    %230 = vector.extract_strided_slice %229 {offsets = [0, 0], sizes = [8, 128], strides = [1, 1]} : vector<8x512xf32> to vector<8x128xf32>
    %cst_118 = arith.constant 0.000000e+00 : f32
    %231 = vector.broadcast %cst_118 : f32 to vector<8x128xf32>
    %232 = arith.subf %231, %230 : vector<8x128xf32>
    %233 = math.exp %232 : vector<8x128xf32>
    %cst_119 = arith.constant 1.000000e+00 : f32
    %234 = vector.broadcast %cst_119 : f32 to vector<8x128xf32>
    %235 = arith.addf %234, %233 : vector<8x128xf32>
    %236 = tpu.reciprocal %235 {approx = true} : vector<8x128xf32> -> vector<8x128xf32>
    %237 = vector.extract_strided_slice %229 {offsets = [0, 128], sizes = [8, 128], strides = [1, 1]} : vector<8x512xf32> to vector<8x128xf32>
    %cst_120 = arith.constant 0.000000e+00 : f32
    %238 = vector.broadcast %cst_120 : f32 to vector<8x128xf32>
    %239 = arith.subf %238, %237 : vector<8x128xf32>
    %240 = math.exp %239 : vector<8x128xf32>
    %cst_121 = arith.constant 1.000000e+00 : f32
    %241 = vector.broadcast %cst_121 : f32 to vector<8x128xf32>
    %242 = arith.addf %241, %240 : vector<8x128xf32>
    %243 = tpu.reciprocal %242 {approx = true} : vector<8x128xf32> -> vector<8x128xf32>
    %244 = vector.extract_strided_slice %229 {offsets = [0, 256], sizes = [8, 128], strides = [1, 1]} : vector<8x512xf32> to vector<8x128xf32>
    %245 = math.tanh %244 : vector<8x128xf32>
    %246 = vector.extract_strided_slice %229 {offsets = [0, 384], sizes = [8, 128], strides = [1, 1]} : vector<8x512xf32> to vector<8x128xf32>
    %cst_122 = arith.constant 0.000000e+00 : f32
    %247 = vector.broadcast %cst_122 : f32 to vector<8x128xf32>
    %248 = arith.subf %247, %246 : vector<8x128xf32>
    %249 = math.exp %248 : vector<8x128xf32>
    %cst_123 = arith.constant 1.000000e+00 : f32
    %250 = vector.broadcast %cst_123 : f32 to vector<8x128xf32>
    %251 = arith.addf %250, %249 : vector<8x128xf32>
    %252 = tpu.reciprocal %251 {approx = true} : vector<8x128xf32> -> vector<8x128xf32>
    %253 = arith.mulf %243, %222 : vector<8x128xf32>
    %254 = arith.mulf %236, %245 : vector<8x128xf32>
    %255 = arith.addf %253, %254 : vector<8x128xf32>
    %256 = math.tanh %255 : vector<8x128xf32>
    %257 = arith.mulf %252, %256 : vector<8x128xf32>
    %c40_124 = arith.constant 40 : index
    %c0_125 = arith.constant 0 : index
    %258 = vector.load %arg21[%c40_124, %c0_125] : memref<64x128xf32, #tpu.memory_space<vmem>>, vector<8x128xf32>
    tpu.vector_store %arg21[%c40_124, %c0_125], %257 {strides = array<i32>} : memref<64x128xf32, #tpu.memory_space<vmem>>, vector<8x128xf32>,
    %c48_126 = arith.constant 48 : index
    %c0_127 = arith.constant 0 : index
    %259 = vector.load %arg20[%c48_126, %c0_127] : memref<64x512xf32, #tpu.memory_space<vmem>>, vector<8x512xf32>
    %260 = arith.truncf %257 : vector<8x128xf32> to vector<8x128xbf16>
    %cst_128 = arith.constant dense<0.000000e+00> : vector<8x512xf32>
    %261 = tpu.matmul %260, %58, %cst_128 {dimension_numbers = #tpu.dot_dimension_numbers<[1], [0], [0], [1], [0, 0, 1, 1], [], []>} : vector<8x128xbf16>, vector<128x512xbf16>, vector<8x512xf32> -> vector<8x512xf32>
    %262 = arith.addf %259, %261 : vector<8x512xf32>
    %263 = vector.extract_strided_slice %262 {offsets = [0, 0], sizes = [8, 128], strides = [1, 1]} : vector<8x512xf32> to vector<8x128xf32>
    %cst_129 = arith.constant 0.000000e+00 : f32
    %264 = vector.broadcast %cst_129 : f32 to vector<8x128xf32>
    %265 = arith.subf %264, %263 : vector<8x128xf32>
    %266 = math.exp %265 : vector<8x128xf32>
    %cst_130 = arith.constant 1.000000e+00 : f32
    %267 = vector.broadcast %cst_130 : f32 to vector<8x128xf32>
    %268 = arith.addf %267, %266 : vector<8x128xf32>
    %269 = tpu.reciprocal %268 {approx = true} : vector<8x128xf32> -> vector<8x128xf32>
    %270 = vector.extract_strided_slice %262 {offsets = [0, 128], sizes = [8, 128], strides = [1, 1]} : vector<8x512xf32> to vector<8x128xf32>
    %cst_131 = arith.constant 0.000000e+00 : f32
    %271 = vector.broadcast %cst_131 : f32 to vector<8x128xf32>
    %272 = arith.subf %271, %270 : vector<8x128xf32>
    %273 = math.exp %272 : vector<8x128xf32>
    %cst_132 = arith.constant 1.000000e+00 : f32
    %274 = vector.broadcast %cst_132 : f32 to vector<8x128xf32>
    %275 = arith.addf %274, %273 : vector<8x128xf32>
    %276 = tpu.reciprocal %275 {approx = true} : vector<8x128xf32> -> vector<8x128xf32>
    %277 = vector.extract_strided_slice %262 {offsets = [0, 256], sizes = [8, 128], strides = [1, 1]} : vector<8x512xf32> to vector<8x128xf32>
    %278 = math.tanh %277 : vector<8x128xf32>
    %279 = vector.extract_strided_slice %262 {offsets = [0, 384], sizes = [8, 128], strides = [1, 1]} : vector<8x512xf32> to vector<8x128xf32>
    %cst_133 = arith.constant 0.000000e+00 : f32
    %280 = vector.broadcast %cst_133 : f32 to vector<8x128xf32>
    %281 = arith.subf %280, %279 : vector<8x128xf32>
    %282 = math.exp %281 : vector<8x128xf32>
    %cst_134 = arith.constant 1.000000e+00 : f32
    %283 = vector.broadcast %cst_134 : f32 to vector<8x128xf32>
    %284 = arith.addf %283, %282 : vector<8x128xf32>
    %285 = tpu.reciprocal %284 {approx = true} : vector<8x128xf32> -> vector<8x128xf32>
    %286 = arith.mulf %276, %255 : vector<8x128xf32>
    %287 = arith.mulf %269, %278 : vector<8x128xf32>
    %288 = arith.addf %286, %287 : vector<8x128xf32>
    %289 = math.tanh %288 : vector<8x128xf32>
    %290 = arith.mulf %285, %289 : vector<8x128xf32>
    %c48_135 = arith.constant 48 : index
    %c0_136 = arith.constant 0 : index
    %291 = vector.load %arg21[%c48_135, %c0_136] : memref<64x128xf32, #tpu.memory_space<vmem>>, vector<8x128xf32>
    tpu.vector_store %arg21[%c48_135, %c0_136], %290 {strides = array<i32>} : memref<64x128xf32, #tpu.memory_space<vmem>>, vector<8x128xf32>,
    %c56_137 = arith.constant 56 : index
    %c0_138 = arith.constant 0 : index
    %292 = vector.load %arg20[%c56_137, %c0_138] : memref<64x512xf32, #tpu.memory_space<vmem>>, vector<8x512xf32>
    %293 = arith.truncf %290 : vector<8x128xf32> to vector<8x128xbf16>
    %cst_139 = arith.constant dense<0.000000e+00> : vector<8x512xf32>
    %294 = tpu.matmul %293, %58, %cst_139 {dimension_numbers = #tpu.dot_dimension_numbers<[1], [0], [0], [1], [0, 0, 1, 1], [], []>} : vector<8x128xbf16>, vector<128x512xbf16>, vector<8x512xf32> -> vector<8x512xf32>
    %295 = arith.addf %292, %294 : vector<8x512xf32>
    %296 = vector.extract_strided_slice %295 {offsets = [0, 0], sizes = [8, 128], strides = [1, 1]} : vector<8x512xf32> to vector<8x128xf32>
    %cst_140 = arith.constant 0.000000e+00 : f32
    %297 = vector.broadcast %cst_140 : f32 to vector<8x128xf32>
    %298 = arith.subf %297, %296 : vector<8x128xf32>
    %299 = math.exp %298 : vector<8x128xf32>
    %cst_141 = arith.constant 1.000000e+00 : f32
    %300 = vector.broadcast %cst_141 : f32 to vector<8x128xf32>
    %301 = arith.addf %300, %299 : vector<8x128xf32>
    %302 = tpu.reciprocal %301 {approx = true} : vector<8x128xf32> -> vector<8x128xf32>
    %303 = vector.extract_strided_slice %295 {offsets = [0, 128], sizes = [8, 128], strides = [1, 1]} : vector<8x512xf32> to vector<8x128xf32>
    %cst_142 = arith.constant 0.000000e+00 : f32
    %304 = vector.broadcast %cst_142 : f32 to vector<8x128xf32>
    %305 = arith.subf %304, %303 : vector<8x128xf32>
    %306 = math.exp %305 : vector<8x128xf32>
    %cst_143 = arith.constant 1.000000e+00 : f32
    %307 = vector.broadcast %cst_143 : f32 to vector<8x128xf32>
    %308 = arith.addf %307, %306 : vector<8x128xf32>
    %309 = tpu.reciprocal %308 {approx = true} : vector<8x128xf32> -> vector<8x128xf32>
    %310 = vector.extract_strided_slice %295 {offsets = [0, 256], sizes = [8, 128], strides = [1, 1]} : vector<8x512xf32> to vector<8x128xf32>
    %311 = math.tanh %310 : vector<8x128xf32>
    %312 = vector.extract_strided_slice %295 {offsets = [0, 384], sizes = [8, 128], strides = [1, 1]} : vector<8x512xf32> to vector<8x128xf32>
    %cst_144 = arith.constant 0.000000e+00 : f32
    %313 = vector.broadcast %cst_144 : f32 to vector<8x128xf32>
    %314 = arith.subf %313, %312 : vector<8x128xf32>
    %315 = math.exp %314 : vector<8x128xf32>
    %cst_145 = arith.constant 1.000000e+00 : f32
    %316 = vector.broadcast %cst_145 : f32 to vector<8x128xf32>
    %317 = arith.addf %316, %315 : vector<8x128xf32>
    %318 = tpu.reciprocal %317 {approx = true} : vector<8x128xf32> -> vector<8x128xf32>
    %319 = arith.mulf %309, %288 : vector<8x128xf32>
    %320 = arith.mulf %302, %311 : vector<8x128xf32>
    %321 = arith.addf %319, %320 : vector<8x128xf32>
    %322 = math.tanh %321 : vector<8x128xf32>
    %323 = arith.mulf %318, %322 : vector<8x128xf32>
    %c56_146 = arith.constant 56 : index
    %c0_147 = arith.constant 0 : index
    %324 = vector.load %arg21[%c56_146, %c0_147] : memref<64x128xf32, #tpu.memory_space<vmem>>, vector<8x128xf32>
    tpu.vector_store %arg21[%c56_146, %c0_147], %323 {strides = array<i32>} : memref<64x128xf32, #tpu.memory_space<vmem>>, vector<8x128xf32>,
    %c0_148 = arith.constant 0 : index
    %c0_149 = arith.constant 0 : index
    %325 = vector.load %arg21[%c0_148, %c0_149] : memref<64x128xf32, #tpu.memory_space<vmem>>, vector<64x128xf32>
    %326 = arith.truncf %325 : vector<64x128xf32> to vector<64x128xbf16>
    %c0_150 = arith.constant 0 : index
    %c0_151 = arith.constant 0 : index
    %327 = vector.load %arg7[%c0_150, %c0_151] : memref<128x512xbf16, #tpu.memory_space<vmem>>, vector<128x512xbf16>
    %cst_152 = arith.constant dense<0.000000e+00> : vector<64x512xf32>
    %328 = tpu.matmul %326, %327, %cst_152 {dimension_numbers = #tpu.dot_dimension_numbers<[1], [0], [0], [1], [0, 0, 1, 1], [], []>} : vector<64x128xbf16>, vector<128x512xbf16>, vector<64x512xf32> -> vector<64x512xf32>
    %c0_153 = arith.constant 0 : index
    %c0_154 = arith.constant 0 : index
    %329 = vector.load %arg9[%c0_153, %c0_154] : memref<1x512xf32, #tpu.memory_space<vmem>>, vector<1x512xf32>
    %330 = vector.broadcast %329 : vector<1x512xf32> to vector<64x512xf32>
    %331 = arith.addf %328, %330 : vector<64x512xf32>
    %c0_155 = arith.constant 0 : index
    %c0_156 = arith.constant 0 : index
    %332 = vector.load %arg20[%c0_155, %c0_156] : memref<64x512xf32, #tpu.memory_space<vmem>>, vector<64x512xf32>
    tpu.vector_store %arg20[%c0_155, %c0_156], %331 {strides = array<i32>} : memref<64x512xf32, #tpu.memory_space<vmem>>, vector<64x512xf32>,
    %c0_157 = arith.constant 0 : index
    %c0_158 = arith.constant 0 : index
    %333 = vector.load %arg8[%c0_157, %c0_158] : memref<128x512xbf16, #tpu.memory_space<vmem>>, vector<128x512xbf16>
    %cst_159 = arith.constant 0.000000e+00 : f32
    %334 = vector.broadcast %cst_159 : f32 to vector<8x128xf32>
    %cst_160 = arith.constant 0.000000e+00 : f32
    %335 = vector.broadcast %cst_160 : f32 to vector<8x128xf32>
    %c0_161 = arith.constant 0 : index
    %c0_162 = arith.constant 0 : index
    %336 = vector.load %arg20[%c0_161, %c0_162] : memref<64x512xf32, #tpu.memory_space<vmem>>, vector<8x512xf32>
    %337 = arith.truncf %334 : vector<8x128xf32> to vector<8x128xbf16>
    %cst_163 = arith.constant dense<0.000000e+00> : vector<8x512xf32>
    %338 = tpu.matmul %337, %333, %cst_163 {dimension_numbers = #tpu.dot_dimension_numbers<[1], [0], [0], [1], [0, 0, 1, 1], [], []>} : vector<8x128xbf16>, vector<128x512xbf16>, vector<8x512xf32> -> vector<8x512xf32>
    %339 = arith.addf %336, %338 : vector<8x512xf32>
    %340 = vector.extract_strided_slice %339 {offsets = [0, 0], sizes = [8, 128], strides = [1, 1]} : vector<8x512xf32> to vector<8x128xf32>
    %cst_164 = arith.constant 0.000000e+00 : f32
    %341 = vector.broadcast %cst_164 : f32 to vector<8x128xf32>
    %342 = arith.subf %341, %340 : vector<8x128xf32>
    %343 = math.exp %342 : vector<8x128xf32>
    %cst_165 = arith.constant 1.000000e+00 : f32
    %344 = vector.broadcast %cst_165 : f32 to vector<8x128xf32>
    %345 = arith.addf %344, %343 : vector<8x128xf32>
    %346 = tpu.reciprocal %345 {approx = true} : vector<8x128xf32> -> vector<8x128xf32>
    %347 = vector.extract_strided_slice %339 {offsets = [0, 128], sizes = [8, 128], strides = [1, 1]} : vector<8x512xf32> to vector<8x128xf32>
    %cst_166 = arith.constant 0.000000e+00 : f32
    %348 = vector.broadcast %cst_166 : f32 to vector<8x128xf32>
    %349 = arith.subf %348, %347 : vector<8x128xf32>
    %350 = math.exp %349 : vector<8x128xf32>
    %cst_167 = arith.constant 1.000000e+00 : f32
    %351 = vector.broadcast %cst_167 : f32 to vector<8x128xf32>
    %352 = arith.addf %351, %350 : vector<8x128xf32>
    %353 = tpu.reciprocal %352 {approx = true} : vector<8x128xf32> -> vector<8x128xf32>
    %354 = vector.extract_strided_slice %339 {offsets = [0, 256], sizes = [8, 128], strides = [1, 1]} : vector<8x512xf32> to vector<8x128xf32>
    %355 = math.tanh %354 : vector<8x128xf32>
    %356 = vector.extract_strided_slice %339 {offsets = [0, 384], sizes = [8, 128], strides = [1, 1]} : vector<8x512xf32> to vector<8x128xf32>
    %cst_168 = arith.constant 0.000000e+00 : f32
    %357 = vector.broadcast %cst_168 : f32 to vector<8x128xf32>
    %358 = arith.subf %357, %356 : vector<8x128xf32>
    %359 = math.exp %358 : vector<8x128xf32>
    %cst_169 = arith.constant 1.000000e+00 : f32
    %360 = vector.broadcast %cst_169 : f32 to vector<8x128xf32>
    %361 = arith.addf %360, %359 : vector<8x128xf32>
    %362 = tpu.reciprocal %361 {approx = true} : vector<8x128xf32> -> vector<8x128xf32>
    %363 = arith.mulf %353, %335 : vector<8x128xf32>
    %364 = arith.mulf %346, %355 : vector<8x128xf32>
    %365 = arith.addf %363, %364 : vector<8x128xf32>
    %366 = math.tanh %365 : vector<8x128xf32>
    %367 = arith.mulf %362, %366 : vector<8x128xf32>
    %c0_170 = arith.constant 0 : index
    %c0_171 = arith.constant 0 : index
    %368 = vector.load %arg21[%c0_170, %c0_171] : memref<64x128xf32, #tpu.memory_space<vmem>>, vector<8x128xf32>
    tpu.vector_store %arg21[%c0_170, %c0_171], %367 {strides = array<i32>} : memref<64x128xf32, #tpu.memory_space<vmem>>, vector<8x128xf32>,
    %c8_172 = arith.constant 8 : index
    %c0_173 = arith.constant 0 : index
    %369 = vector.load %arg20[%c8_172, %c0_173] : memref<64x512xf32, #tpu.memory_space<vmem>>, vector<8x512xf32>
    %370 = arith.truncf %367 : vector<8x128xf32> to vector<8x128xbf16>
    %cst_174 = arith.constant dense<0.000000e+00> : vector<8x512xf32>
    %371 = tpu.matmul %370, %333, %cst_174 {dimension_numbers = #tpu.dot_dimension_numbers<[1], [0], [0], [1], [0, 0, 1, 1], [], []>} : vector<8x128xbf16>, vector<128x512xbf16>, vector<8x512xf32> -> vector<8x512xf32>
    %372 = arith.addf %369, %371 : vector<8x512xf32>
    %373 = vector.extract_strided_slice %372 {offsets = [0, 0], sizes = [8, 128], strides = [1, 1]} : vector<8x512xf32> to vector<8x128xf32>
    %cst_175 = arith.constant 0.000000e+00 : f32
    %374 = vector.broadcast %cst_175 : f32 to vector<8x128xf32>
    %375 = arith.subf %374, %373 : vector<8x128xf32>
    %376 = math.exp %375 : vector<8x128xf32>
    %cst_176 = arith.constant 1.000000e+00 : f32
    %377 = vector.broadcast %cst_176 : f32 to vector<8x128xf32>
    %378 = arith.addf %377, %376 : vector<8x128xf32>
    %379 = tpu.reciprocal %378 {approx = true} : vector<8x128xf32> -> vector<8x128xf32>
    %380 = vector.extract_strided_slice %372 {offsets = [0, 128], sizes = [8, 128], strides = [1, 1]} : vector<8x512xf32> to vector<8x128xf32>
    %cst_177 = arith.constant 0.000000e+00 : f32
    %381 = vector.broadcast %cst_177 : f32 to vector<8x128xf32>
    %382 = arith.subf %381, %380 : vector<8x128xf32>
    %383 = math.exp %382 : vector<8x128xf32>
    %cst_178 = arith.constant 1.000000e+00 : f32
    %384 = vector.broadcast %cst_178 : f32 to vector<8x128xf32>
    %385 = arith.addf %384, %383 : vector<8x128xf32>
    %386 = tpu.reciprocal %385 {approx = true} : vector<8x128xf32> -> vector<8x128xf32>
    %387 = vector.extract_strided_slice %372 {offsets = [0, 256], sizes = [8, 128], strides = [1, 1]} : vector<8x512xf32> to vector<8x128xf32>
    %388 = math.tanh %387 : vector<8x128xf32>
    %389 = vector.extract_strided_slice %372 {offsets = [0, 384], sizes = [8, 128], strides = [1, 1]} : vector<8x512xf32> to vector<8x128xf32>
    %cst_179 = arith.constant 0.000000e+00 : f32
    %390 = vector.broadcast %cst_179 : f32 to vector<8x128xf32>
    %391 = arith.subf %390, %389 : vector<8x128xf32>
    %392 = math.exp %391 : vector<8x128xf32>
    %cst_180 = arith.constant 1.000000e+00 : f32
    %393 = vector.broadcast %cst_180 : f32 to vector<8x128xf32>
    %394 = arith.addf %393, %392 : vector<8x128xf32>
    %395 = tpu.reciprocal %394 {approx = true} : vector<8x128xf32> -> vector<8x128xf32>
    %396 = arith.mulf %386, %365 : vector<8x128xf32>
    %397 = arith.mulf %379, %388 : vector<8x128xf32>
    %398 = arith.addf %396, %397 : vector<8x128xf32>
    %399 = math.tanh %398 : vector<8x128xf32>
    %400 = arith.mulf %395, %399 : vector<8x128xf32>
    %c8_181 = arith.constant 8 : index
    %c0_182 = arith.constant 0 : index
    %401 = vector.load %arg21[%c8_181, %c0_182] : memref<64x128xf32, #tpu.memory_space<vmem>>, vector<8x128xf32>
    tpu.vector_store %arg21[%c8_181, %c0_182], %400 {strides = array<i32>} : memref<64x128xf32, #tpu.memory_space<vmem>>, vector<8x128xf32>,
    %c16_183 = arith.constant 16 : index
    %c0_184 = arith.constant 0 : index
    %402 = vector.load %arg20[%c16_183, %c0_184] : memref<64x512xf32, #tpu.memory_space<vmem>>, vector<8x512xf32>
    %403 = arith.truncf %400 : vector<8x128xf32> to vector<8x128xbf16>
    %cst_185 = arith.constant dense<0.000000e+00> : vector<8x512xf32>
    %404 = tpu.matmul %403, %333, %cst_185 {dimension_numbers = #tpu.dot_dimension_numbers<[1], [0], [0], [1], [0, 0, 1, 1], [], []>} : vector<8x128xbf16>, vector<128x512xbf16>, vector<8x512xf32> -> vector<8x512xf32>
    %405 = arith.addf %402, %404 : vector<8x512xf32>
    %406 = vector.extract_strided_slice %405 {offsets = [0, 0], sizes = [8, 128], strides = [1, 1]} : vector<8x512xf32> to vector<8x128xf32>
    %cst_186 = arith.constant 0.000000e+00 : f32
    %407 = vector.broadcast %cst_186 : f32 to vector<8x128xf32>
    %408 = arith.subf %407, %406 : vector<8x128xf32>
    %409 = math.exp %408 : vector<8x128xf32>
    %cst_187 = arith.constant 1.000000e+00 : f32
    %410 = vector.broadcast %cst_187 : f32 to vector<8x128xf32>
    %411 = arith.addf %410, %409 : vector<8x128xf32>
    %412 = tpu.reciprocal %411 {approx = true} : vector<8x128xf32> -> vector<8x128xf32>
    %413 = vector.extract_strided_slice %405 {offsets = [0, 128], sizes = [8, 128], strides = [1, 1]} : vector<8x512xf32> to vector<8x128xf32>
    %cst_188 = arith.constant 0.000000e+00 : f32
    %414 = vector.broadcast %cst_188 : f32 to vector<8x128xf32>
    %415 = arith.subf %414, %413 : vector<8x128xf32>
    %416 = math.exp %415 : vector<8x128xf32>
    %cst_189 = arith.constant 1.000000e+00 : f32
    %417 = vector.broadcast %cst_189 : f32 to vector<8x128xf32>
    %418 = arith.addf %417, %416 : vector<8x128xf32>
    %419 = tpu.reciprocal %418 {approx = true} : vector<8x128xf32> -> vector<8x128xf32>
    %420 = vector.extract_strided_slice %405 {offsets = [0, 256], sizes = [8, 128], strides = [1, 1]} : vector<8x512xf32> to vector<8x128xf32>
    %421 = math.tanh %420 : vector<8x128xf32>
    %422 = vector.extract_strided_slice %405 {offsets = [0, 384], sizes = [8, 128], strides = [1, 1]} : vector<8x512xf32> to vector<8x128xf32>
    %cst_190 = arith.constant 0.000000e+00 : f32
    %423 = vector.broadcast %cst_190 : f32 to vector<8x128xf32>
    %424 = arith.subf %423, %422 : vector<8x128xf32>
    %425 = math.exp %424 : vector<8x128xf32>
    %cst_191 = arith.constant 1.000000e+00 : f32
    %426 = vector.broadcast %cst_191 : f32 to vector<8x128xf32>
    %427 = arith.addf %426, %425 : vector<8x128xf32>
    %428 = tpu.reciprocal %427 {approx = true} : vector<8x128xf32> -> vector<8x128xf32>
    %429 = arith.mulf %419, %398 : vector<8x128xf32>
    %430 = arith.mulf %412, %421 : vector<8x128xf32>
    %431 = arith.addf %429, %430 : vector<8x128xf32>
    %432 = math.tanh %431 : vector<8x128xf32>
    %433 = arith.mulf %428, %432 : vector<8x128xf32>
    %c16_192 = arith.constant 16 : index
    %c0_193 = arith.constant 0 : index
    %434 = vector.load %arg21[%c16_192, %c0_193] : memref<64x128xf32, #tpu.memory_space<vmem>>, vector<8x128xf32>
    tpu.vector_store %arg21[%c16_192, %c0_193], %433 {strides = array<i32>} : memref<64x128xf32, #tpu.memory_space<vmem>>, vector<8x128xf32>,
    %c24_194 = arith.constant 24 : index
    %c0_195 = arith.constant 0 : index
    %435 = vector.load %arg20[%c24_194, %c0_195] : memref<64x512xf32, #tpu.memory_space<vmem>>, vector<8x512xf32>
    %436 = arith.truncf %433 : vector<8x128xf32> to vector<8x128xbf16>
    %cst_196 = arith.constant dense<0.000000e+00> : vector<8x512xf32>
    %437 = tpu.matmul %436, %333, %cst_196 {dimension_numbers = #tpu.dot_dimension_numbers<[1], [0], [0], [1], [0, 0, 1, 1], [], []>} : vector<8x128xbf16>, vector<128x512xbf16>, vector<8x512xf32> -> vector<8x512xf32>
    %438 = arith.addf %435, %437 : vector<8x512xf32>
    %439 = vector.extract_strided_slice %438 {offsets = [0, 0], sizes = [8, 128], strides = [1, 1]} : vector<8x512xf32> to vector<8x128xf32>
    %cst_197 = arith.constant 0.000000e+00 : f32
    %440 = vector.broadcast %cst_197 : f32 to vector<8x128xf32>
    %441 = arith.subf %440, %439 : vector<8x128xf32>
    %442 = math.exp %441 : vector<8x128xf32>
    %cst_198 = arith.constant 1.000000e+00 : f32
    %443 = vector.broadcast %cst_198 : f32 to vector<8x128xf32>
    %444 = arith.addf %443, %442 : vector<8x128xf32>
    %445 = tpu.reciprocal %444 {approx = true} : vector<8x128xf32> -> vector<8x128xf32>
    %446 = vector.extract_strided_slice %438 {offsets = [0, 128], sizes = [8, 128], strides = [1, 1]} : vector<8x512xf32> to vector<8x128xf32>
    %cst_199 = arith.constant 0.000000e+00 : f32
    %447 = vector.broadcast %cst_199 : f32 to vector<8x128xf32>
    %448 = arith.subf %447, %446 : vector<8x128xf32>
    %449 = math.exp %448 : vector<8x128xf32>
    %cst_200 = arith.constant 1.000000e+00 : f32
    %450 = vector.broadcast %cst_200 : f32 to vector<8x128xf32>
    %451 = arith.addf %450, %449 : vector<8x128xf32>
    %452 = tpu.reciprocal %451 {approx = true} : vector<8x128xf32> -> vector<8x128xf32>
    %453 = vector.extract_strided_slice %438 {offsets = [0, 256], sizes = [8, 128], strides = [1, 1]} : vector<8x512xf32> to vector<8x128xf32>
    %454 = math.tanh %453 : vector<8x128xf32>
    %455 = vector.extract_strided_slice %438 {offsets = [0, 384], sizes = [8, 128], strides = [1, 1]} : vector<8x512xf32> to vector<8x128xf32>
    %cst_201 = arith.constant 0.000000e+00 : f32
    %456 = vector.broadcast %cst_201 : f32 to vector<8x128xf32>
    %457 = arith.subf %456, %455 : vector<8x128xf32>
    %458 = math.exp %457 : vector<8x128xf32>
    %cst_202 = arith.constant 1.000000e+00 : f32
    %459 = vector.broadcast %cst_202 : f32 to vector<8x128xf32>
    %460 = arith.addf %459, %458 : vector<8x128xf32>
    %461 = tpu.reciprocal %460 {approx = true} : vector<8x128xf32> -> vector<8x128xf32>
    %462 = arith.mulf %452, %431 : vector<8x128xf32>
    %463 = arith.mulf %445, %454 : vector<8x128xf32>
    %464 = arith.addf %462, %463 : vector<8x128xf32>
    %465 = math.tanh %464 : vector<8x128xf32>
    %466 = arith.mulf %461, %465 : vector<8x128xf32>
    %c24_203 = arith.constant 24 : index
    %c0_204 = arith.constant 0 : index
    %467 = vector.load %arg21[%c24_203, %c0_204] : memref<64x128xf32, #tpu.memory_space<vmem>>, vector<8x128xf32>
    tpu.vector_store %arg21[%c24_203, %c0_204], %466 {strides = array<i32>} : memref<64x128xf32, #tpu.memory_space<vmem>>, vector<8x128xf32>,
    %c32_205 = arith.constant 32 : index
    %c0_206 = arith.constant 0 : index
    %468 = vector.load %arg20[%c32_205, %c0_206] : memref<64x512xf32, #tpu.memory_space<vmem>>, vector<8x512xf32>
    %469 = arith.truncf %466 : vector<8x128xf32> to vector<8x128xbf16>
    %cst_207 = arith.constant dense<0.000000e+00> : vector<8x512xf32>
    %470 = tpu.matmul %469, %333, %cst_207 {dimension_numbers = #tpu.dot_dimension_numbers<[1], [0], [0], [1], [0, 0, 1, 1], [], []>} : vector<8x128xbf16>, vector<128x512xbf16>, vector<8x512xf32> -> vector<8x512xf32>
    %471 = arith.addf %468, %470 : vector<8x512xf32>
    %472 = vector.extract_strided_slice %471 {offsets = [0, 0], sizes = [8, 128], strides = [1, 1]} : vector<8x512xf32> to vector<8x128xf32>
    %cst_208 = arith.constant 0.000000e+00 : f32
    %473 = vector.broadcast %cst_208 : f32 to vector<8x128xf32>
    %474 = arith.subf %473, %472 : vector<8x128xf32>
    %475 = math.exp %474 : vector<8x128xf32>
    %cst_209 = arith.constant 1.000000e+00 : f32
    %476 = vector.broadcast %cst_209 : f32 to vector<8x128xf32>
    %477 = arith.addf %476, %475 : vector<8x128xf32>
    %478 = tpu.reciprocal %477 {approx = true} : vector<8x128xf32> -> vector<8x128xf32>
    %479 = vector.extract_strided_slice %471 {offsets = [0, 128], sizes = [8, 128], strides = [1, 1]} : vector<8x512xf32> to vector<8x128xf32>
    %cst_210 = arith.constant 0.000000e+00 : f32
    %480 = vector.broadcast %cst_210 : f32 to vector<8x128xf32>
    %481 = arith.subf %480, %479 : vector<8x128xf32>
    %482 = math.exp %481 : vector<8x128xf32>
    %cst_211 = arith.constant 1.000000e+00 : f32
    %483 = vector.broadcast %cst_211 : f32 to vector<8x128xf32>
    %484 = arith.addf %483, %482 : vector<8x128xf32>
    %485 = tpu.reciprocal %484 {approx = true} : vector<8x128xf32> -> vector<8x128xf32>
    %486 = vector.extract_strided_slice %471 {offsets = [0, 256], sizes = [8, 128], strides = [1, 1]} : vector<8x512xf32> to vector<8x128xf32>
    %487 = math.tanh %486 : vector<8x128xf32>
    %488 = vector.extract_strided_slice %471 {offsets = [0, 384], sizes = [8, 128], strides = [1, 1]} : vector<8x512xf32> to vector<8x128xf32>
    %cst_212 = arith.constant 0.000000e+00 : f32
    %489 = vector.broadcast %cst_212 : f32 to vector<8x128xf32>
    %490 = arith.subf %489, %488 : vector<8x128xf32>
    %491 = math.exp %490 : vector<8x128xf32>
    %cst_213 = arith.constant 1.000000e+00 : f32
    %492 = vector.broadcast %cst_213 : f32 to vector<8x128xf32>
    %493 = arith.addf %492, %491 : vector<8x128xf32>
    %494 = tpu.reciprocal %493 {approx = true} : vector<8x128xf32> -> vector<8x128xf32>
    %495 = arith.mulf %485, %464 : vector<8x128xf32>
    %496 = arith.mulf %478, %487 : vector<8x128xf32>
    %497 = arith.addf %495, %496 : vector<8x128xf32>
    %498 = math.tanh %497 : vector<8x128xf32>
    %499 = arith.mulf %494, %498 : vector<8x128xf32>
    %c32_214 = arith.constant 32 : index
    %c0_215 = arith.constant 0 : index
    %500 = vector.load %arg21[%c32_214, %c0_215] : memref<64x128xf32, #tpu.memory_space<vmem>>, vector<8x128xf32>
    tpu.vector_store %arg21[%c32_214, %c0_215], %499 {strides = array<i32>} : memref<64x128xf32, #tpu.memory_space<vmem>>, vector<8x128xf32>,
    %c40_216 = arith.constant 40 : index
    %c0_217 = arith.constant 0 : index
    %501 = vector.load %arg20[%c40_216, %c0_217] : memref<64x512xf32, #tpu.memory_space<vmem>>, vector<8x512xf32>
    %502 = arith.truncf %499 : vector<8x128xf32> to vector<8x128xbf16>
    %cst_218 = arith.constant dense<0.000000e+00> : vector<8x512xf32>
    %503 = tpu.matmul %502, %333, %cst_218 {dimension_numbers = #tpu.dot_dimension_numbers<[1], [0], [0], [1], [0, 0, 1, 1], [], []>} : vector<8x128xbf16>, vector<128x512xbf16>, vector<8x512xf32> -> vector<8x512xf32>
    %504 = arith.addf %501, %503 : vector<8x512xf32>
    %505 = vector.extract_strided_slice %504 {offsets = [0, 0], sizes = [8, 128], strides = [1, 1]} : vector<8x512xf32> to vector<8x128xf32>
    %cst_219 = arith.constant 0.000000e+00 : f32
    %506 = vector.broadcast %cst_219 : f32 to vector<8x128xf32>
    %507 = arith.subf %506, %505 : vector<8x128xf32>
    %508 = math.exp %507 : vector<8x128xf32>
    %cst_220 = arith.constant 1.000000e+00 : f32
    %509 = vector.broadcast %cst_220 : f32 to vector<8x128xf32>
    %510 = arith.addf %509, %508 : vector<8x128xf32>
    %511 = tpu.reciprocal %510 {approx = true} : vector<8x128xf32> -> vector<8x128xf32>
    %512 = vector.extract_strided_slice %504 {offsets = [0, 128], sizes = [8, 128], strides = [1, 1]} : vector<8x512xf32> to vector<8x128xf32>
    %cst_221 = arith.constant 0.000000e+00 : f32
    %513 = vector.broadcast %cst_221 : f32 to vector<8x128xf32>
    %514 = arith.subf %513, %512 : vector<8x128xf32>
    %515 = math.exp %514 : vector<8x128xf32>
    %cst_222 = arith.constant 1.000000e+00 : f32
    %516 = vector.broadcast %cst_222 : f32 to vector<8x128xf32>
    %517 = arith.addf %516, %515 : vector<8x128xf32>
    %518 = tpu.reciprocal %517 {approx = true} : vector<8x128xf32> -> vector<8x128xf32>
    %519 = vector.extract_strided_slice %504 {offsets = [0, 256], sizes = [8, 128], strides = [1, 1]} : vector<8x512xf32> to vector<8x128xf32>
    %520 = math.tanh %519 : vector<8x128xf32>
    %521 = vector.extract_strided_slice %504 {offsets = [0, 384], sizes = [8, 128], strides = [1, 1]} : vector<8x512xf32> to vector<8x128xf32>
    %cst_223 = arith.constant 0.000000e+00 : f32
    %522 = vector.broadcast %cst_223 : f32 to vector<8x128xf32>
    %523 = arith.subf %522, %521 : vector<8x128xf32>
    %524 = math.exp %523 : vector<8x128xf32>
    %cst_224 = arith.constant 1.000000e+00 : f32
    %525 = vector.broadcast %cst_224 : f32 to vector<8x128xf32>
    %526 = arith.addf %525, %524 : vector<8x128xf32>
    %527 = tpu.reciprocal %526 {approx = true} : vector<8x128xf32> -> vector<8x128xf32>
    %528 = arith.mulf %518, %497 : vector<8x128xf32>
    %529 = arith.mulf %511, %520 : vector<8x128xf32>
    %530 = arith.addf %528, %529 : vector<8x128xf32>
    %531 = math.tanh %530 : vector<8x128xf32>
    %532 = arith.mulf %527, %531 : vector<8x128xf32>
    %c40_225 = arith.constant 40 : index
    %c0_226 = arith.constant 0 : index
    %533 = vector.load %arg21[%c40_225, %c0_226] : memref<64x128xf32, #tpu.memory_space<vmem>>, vector<8x128xf32>
    tpu.vector_store %arg21[%c40_225, %c0_226], %532 {strides = array<i32>} : memref<64x128xf32, #tpu.memory_space<vmem>>, vector<8x128xf32>,
    %c48_227 = arith.constant 48 : index
    %c0_228 = arith.constant 0 : index
    %534 = vector.load %arg20[%c48_227, %c0_228] : memref<64x512xf32, #tpu.memory_space<vmem>>, vector<8x512xf32>
    %535 = arith.truncf %532 : vector<8x128xf32> to vector<8x128xbf16>
    %cst_229 = arith.constant dense<0.000000e+00> : vector<8x512xf32>
    %536 = tpu.matmul %535, %333, %cst_229 {dimension_numbers = #tpu.dot_dimension_numbers<[1], [0], [0], [1], [0, 0, 1, 1], [], []>} : vector<8x128xbf16>, vector<128x512xbf16>, vector<8x512xf32> -> vector<8x512xf32>
    %537 = arith.addf %534, %536 : vector<8x512xf32>
    %538 = vector.extract_strided_slice %537 {offsets = [0, 0], sizes = [8, 128], strides = [1, 1]} : vector<8x512xf32> to vector<8x128xf32>
    %cst_230 = arith.constant 0.000000e+00 : f32
    %539 = vector.broadcast %cst_230 : f32 to vector<8x128xf32>
    %540 = arith.subf %539, %538 : vector<8x128xf32>
    %541 = math.exp %540 : vector<8x128xf32>
    %cst_231 = arith.constant 1.000000e+00 : f32
    %542 = vector.broadcast %cst_231 : f32 to vector<8x128xf32>
    %543 = arith.addf %542, %541 : vector<8x128xf32>
    %544 = tpu.reciprocal %543 {approx = true} : vector<8x128xf32> -> vector<8x128xf32>
    %545 = vector.extract_strided_slice %537 {offsets = [0, 128], sizes = [8, 128], strides = [1, 1]} : vector<8x512xf32> to vector<8x128xf32>
    %cst_232 = arith.constant 0.000000e+00 : f32
    %546 = vector.broadcast %cst_232 : f32 to vector<8x128xf32>
    %547 = arith.subf %546, %545 : vector<8x128xf32>
    %548 = math.exp %547 : vector<8x128xf32>
    %cst_233 = arith.constant 1.000000e+00 : f32
    %549 = vector.broadcast %cst_233 : f32 to vector<8x128xf32>
    %550 = arith.addf %549, %548 : vector<8x128xf32>
    %551 = tpu.reciprocal %550 {approx = true} : vector<8x128xf32> -> vector<8x128xf32>
    %552 = vector.extract_strided_slice %537 {offsets = [0, 256], sizes = [8, 128], strides = [1, 1]} : vector<8x512xf32> to vector<8x128xf32>
    %553 = math.tanh %552 : vector<8x128xf32>
    %554 = vector.extract_strided_slice %537 {offsets = [0, 384], sizes = [8, 128], strides = [1, 1]} : vector<8x512xf32> to vector<8x128xf32>
    %cst_234 = arith.constant 0.000000e+00 : f32
    %555 = vector.broadcast %cst_234 : f32 to vector<8x128xf32>
    %556 = arith.subf %555, %554 : vector<8x128xf32>
    %557 = math.exp %556 : vector<8x128xf32>
    %cst_235 = arith.constant 1.000000e+00 : f32
    %558 = vector.broadcast %cst_235 : f32 to vector<8x128xf32>
    %559 = arith.addf %558, %557 : vector<8x128xf32>
    %560 = tpu.reciprocal %559 {approx = true} : vector<8x128xf32> -> vector<8x128xf32>
    %561 = arith.mulf %551, %530 : vector<8x128xf32>
    %562 = arith.mulf %544, %553 : vector<8x128xf32>
    %563 = arith.addf %561, %562 : vector<8x128xf32>
    %564 = math.tanh %563 : vector<8x128xf32>
    %565 = arith.mulf %560, %564 : vector<8x128xf32>
    %c48_236 = arith.constant 48 : index
    %c0_237 = arith.constant 0 : index
    %566 = vector.load %arg21[%c48_236, %c0_237] : memref<64x128xf32, #tpu.memory_space<vmem>>, vector<8x128xf32>
    tpu.vector_store %arg21[%c48_236, %c0_237], %565 {strides = array<i32>} : memref<64x128xf32, #tpu.memory_space<vmem>>, vector<8x128xf32>,
    %c56_238 = arith.constant 56 : index
    %c0_239 = arith.constant 0 : index
    %567 = vector.load %arg20[%c56_238, %c0_239] : memref<64x512xf32, #tpu.memory_space<vmem>>, vector<8x512xf32>
    %568 = arith.truncf %565 : vector<8x128xf32> to vector<8x128xbf16>
    %cst_240 = arith.constant dense<0.000000e+00> : vector<8x512xf32>
    %569 = tpu.matmul %568, %333, %cst_240 {dimension_numbers = #tpu.dot_dimension_numbers<[1], [0], [0], [1], [0, 0, 1, 1], [], []>} : vector<8x128xbf16>, vector<128x512xbf16>, vector<8x512xf32> -> vector<8x512xf32>
    %570 = arith.addf %567, %569 : vector<8x512xf32>
    %571 = vector.extract_strided_slice %570 {offsets = [0, 0], sizes = [8, 128], strides = [1, 1]} : vector<8x512xf32> to vector<8x128xf32>
    %cst_241 = arith.constant 0.000000e+00 : f32
    %572 = vector.broadcast %cst_241 : f32 to vector<8x128xf32>
    %573 = arith.subf %572, %571 : vector<8x128xf32>
    %574 = math.exp %573 : vector<8x128xf32>
    %cst_242 = arith.constant 1.000000e+00 : f32
    %575 = vector.broadcast %cst_242 : f32 to vector<8x128xf32>
    %576 = arith.addf %575, %574 : vector<8x128xf32>
    %577 = tpu.reciprocal %576 {approx = true} : vector<8x128xf32> -> vector<8x128xf32>
    %578 = vector.extract_strided_slice %570 {offsets = [0, 128], sizes = [8, 128], strides = [1, 1]} : vector<8x512xf32> to vector<8x128xf32>
    %cst_243 = arith.constant 0.000000e+00 : f32
    %579 = vector.broadcast %cst_243 : f32 to vector<8x128xf32>
    %580 = arith.subf %579, %578 : vector<8x128xf32>
    %581 = math.exp %580 : vector<8x128xf32>
    %cst_244 = arith.constant 1.000000e+00 : f32
    %582 = vector.broadcast %cst_244 : f32 to vector<8x128xf32>
    %583 = arith.addf %582, %581 : vector<8x128xf32>
    %584 = tpu.reciprocal %583 {approx = true} : vector<8x128xf32> -> vector<8x128xf32>
    %585 = vector.extract_strided_slice %570 {offsets = [0, 256], sizes = [8, 128], strides = [1, 1]} : vector<8x512xf32> to vector<8x128xf32>
    %586 = math.tanh %585 : vector<8x128xf32>
    %587 = vector.extract_strided_slice %570 {offsets = [0, 384], sizes = [8, 128], strides = [1, 1]} : vector<8x512xf32> to vector<8x128xf32>
    %cst_245 = arith.constant 0.000000e+00 : f32
    %588 = vector.broadcast %cst_245 : f32 to vector<8x128xf32>
    %589 = arith.subf %588, %587 : vector<8x128xf32>
    %590 = math.exp %589 : vector<8x128xf32>
    %cst_246 = arith.constant 1.000000e+00 : f32
    %591 = vector.broadcast %cst_246 : f32 to vector<8x128xf32>
    %592 = arith.addf %591, %590 : vector<8x128xf32>
    %593 = tpu.reciprocal %592 {approx = true} : vector<8x128xf32> -> vector<8x128xf32>
    %594 = arith.mulf %584, %563 : vector<8x128xf32>
    %595 = arith.mulf %577, %586 : vector<8x128xf32>
    %596 = arith.addf %594, %595 : vector<8x128xf32>
    %597 = math.tanh %596 : vector<8x128xf32>
    %598 = arith.mulf %593, %597 : vector<8x128xf32>
    %c56_247 = arith.constant 56 : index
    %c0_248 = arith.constant 0 : index
    %599 = vector.load %arg21[%c56_247, %c0_248] : memref<64x128xf32, #tpu.memory_space<vmem>>, vector<8x128xf32>
    tpu.vector_store %arg21[%c56_247, %c0_248], %598 {strides = array<i32>} : memref<64x128xf32, #tpu.memory_space<vmem>>, vector<8x128xf32>,
    %c0_249 = arith.constant 0 : index
    %c0_250 = arith.constant 0 : index
    %600 = vector.load %arg21[%c0_249, %c0_250] : memref<64x128xf32, #tpu.memory_space<vmem>>, vector<64x128xf32>
    %601 = arith.truncf %600 : vector<64x128xf32> to vector<64x128xbf16>
    %c0_251 = arith.constant 0 : index
    %c0_252 = arith.constant 0 : index
    %602 = vector.load %arg10[%c0_251, %c0_252] : memref<128x64xbf16, #tpu.memory_space<vmem>>, vector<128x64xbf16>
    %cst_253 = arith.constant dense<0.000000e+00> : vector<64x64xf32>
    %603 = tpu.matmul %601, %602, %cst_253 {dimension_numbers = #tpu.dot_dimension_numbers<[1], [0], [0], [1], [0, 0, 1, 1], [], []>} : vector<64x128xbf16>, vector<128x64xbf16>, vector<64x64xf32> -> vector<64x64xf32>
    %c0_254 = arith.constant 0 : index
    %c0_255 = arith.constant 0 : index
    %604 = vector.load %arg11[%c0_254, %c0_255] : memref<1x64xf32, #tpu.memory_space<vmem>>, vector<1x64xf32>
    %605 = vector.broadcast %604 : vector<1x64xf32> to vector<64x64xf32>
    %606 = arith.addf %603, %605 : vector<64x64xf32>
    %607 = arith.truncf %606 : vector<64x64xf32> to vector<64x64xbf16>
    %c0_256 = arith.constant 0 : index
    %c0_257 = arith.constant 0 : index
    %608 = vector.load %arg12[%c0_256, %c0_257] : memref<64x128xbf16, #tpu.memory_space<vmem>>, vector<64x128xbf16>
    %cst_258 = arith.constant dense<0.000000e+00> : vector<64x128xf32>
    %609 = tpu.matmul %607, %608, %cst_258 {dimension_numbers = #tpu.dot_dimension_numbers<[1], [0], [0], [1], [0, 0, 1, 1], [], []>} : vector<64x64xbf16>, vector<64x128xbf16>, vector<64x128xf32> -> vector<64x128xf32>
    %c0_259 = arith.constant 0 : index
    %c0_260 = arith.constant 0 : index
    %610 = vector.load %arg13[%c0_259, %c0_260] : memref<1x128xf32, #tpu.memory_space<vmem>>, vector<1x128xf32>
    %611 = vector.broadcast %610 : vector<1x128xf32> to vector<64x128xf32>
    %612 = arith.addf %609, %611 : vector<64x128xf32>
    %cst_261 = arith.constant 0.000000e+00 : f32
    %613 = vector.broadcast %cst_261 : f32 to vector<64x128xf32>
    %614 = arith.maximumf %612, %613 : vector<64x128xf32>
    %615 = math.absf %612 : vector<64x128xf32>
    %cst_262 = arith.constant 0.000000e+00 : f32
    %616 = vector.broadcast %cst_262 : f32 to vector<64x128xf32>
    %617 = arith.subf %616, %615 : vector<64x128xf32>
    %618 = math.exp %617 : vector<64x128xf32>
    %cst_263 = arith.constant 1.000000e+00 : f32
    %619 = vector.broadcast %cst_263 : f32 to vector<64x128xf32>
    %620 = arith.addf %619, %618 : vector<64x128xf32>
    %621 = math.log %620 : vector<64x128xf32>
    %622 = arith.addf %614, %621 : vector<64x128xf32>
    %623 = math.tanh %622 : vector<64x128xf32>
    %624 = arith.mulf %612, %623 : vector<64x128xf32>
    %625 = arith.truncf %624 : vector<64x128xf32> to vector<64x128xbf16>
    %c0_264 = arith.constant 0 : index
    %c0_265 = arith.constant 0 : index
    %626 = vector.load %arg14[%c0_264, %c0_265] : memref<128x64xbf16, #tpu.memory_space<vmem>>, vector<128x64xbf16>
    %cst_266 = arith.constant dense<0.000000e+00> : vector<64x64xf32>
    %627 = tpu.matmul %625, %626, %cst_266 {dimension_numbers = #tpu.dot_dimension_numbers<[1], [0], [0], [1], [0, 0, 1, 1], [], []>} : vector<64x128xbf16>, vector<128x64xbf16>, vector<64x64xf32> -> vector<64x64xf32>
    %c0_267 = arith.constant 0 : index
    %c0_268 = arith.constant 0 : index
    %628 = vector.load %arg15[%c0_267, %c0_268] : memref<1x64xf32, #tpu.memory_space<vmem>>, vector<1x64xf32>
    %629 = vector.broadcast %628 : vector<1x64xf32> to vector<64x64xf32>
    %630 = arith.addf %627, %629 : vector<64x64xf32>
    %cst_269 = arith.constant 0.000000e+00 : f32
    %631 = vector.broadcast %cst_269 : f32 to vector<64x64xf32>
    %632 = arith.maximumf %630, %631 : vector<64x64xf32>
    %633 = math.absf %630 : vector<64x64xf32>
    %cst_270 = arith.constant 0.000000e+00 : f32
    %634 = vector.broadcast %cst_270 : f32 to vector<64x64xf32>
    %635 = arith.subf %634, %633 : vector<64x64xf32>
    %636 = math.exp %635 : vector<64x64xf32>
    %cst_271 = arith.constant 1.000000e+00 : f32
    %637 = vector.broadcast %cst_271 : f32 to vector<64x64xf32>
    %638 = arith.addf %637, %636 : vector<64x64xf32>
    %639 = math.log %638 : vector<64x64xf32>
    %640 = arith.addf %632, %639 : vector<64x64xf32>
    %641 = math.tanh %640 : vector<64x64xf32>
    %642 = arith.mulf %630, %641 : vector<64x64xf32>
    %643 = arith.truncf %642 : vector<64x64xf32> to vector<64x64xbf16>
    %c0_272 = arith.constant 0 : index
    %c0_273 = arith.constant 0 : index
    %644 = vector.load %arg16[%c0_272, %c0_273] : memref<64x128xbf16, #tpu.memory_space<vmem>>, vector<64x128xbf16>
    %cst_274 = arith.constant dense<0.000000e+00> : vector<64x128xf32>
    %645 = tpu.matmul %643, %644, %cst_274 {dimension_numbers = #tpu.dot_dimension_numbers<[1], [0], [0], [1], [0, 0, 1, 1], [], []>} : vector<64x64xbf16>, vector<64x128xbf16>, vector<64x128xf32> -> vector<64x128xf32>
    %c0_275 = arith.constant 0 : index
    %c0_276 = arith.constant 0 : index
    %646 = vector.load %arg17[%c0_275, %c0_276] : memref<1x128xf32, #tpu.memory_space<vmem>>, vector<1x128xf32>
    %647 = vector.broadcast %646 : vector<1x128xf32> to vector<64x128xf32>
    %648 = arith.addf %645, %647 : vector<64x128xf32>
    %649 = vector.extract_strided_slice %648 {offsets = [0, 0], sizes = [8, 128], strides = [1, 1]} : vector<64x128xf32> to vector<8x128xf32>
    %c0_277 = arith.constant 0 : index
    %c0_278 = arith.constant 0 : index
    %c0_279 = arith.constant 0 : index
    %650 = vector.load %arg18[%c0_277, %c0_278, %c0_279] : memref<8x8x128xf32, #tpu.memory_space<vmem>>, vector<1x8x128xf32>
    %651 = vector.shape_cast %650 : vector<1x8x128xf32> to vector<8x128xf32>
    %652 = vector.shape_cast %649 : vector<8x128xf32> to vector<1x8x128xf32>
    tpu.vector_store %arg18[%c0_277, %c0_278, %c0_279], %652 {strides = array<i32>} : memref<8x8x128xf32, #tpu.memory_space<vmem>>, vector<1x8x128xf32>,
    %653 = vector.extract_strided_slice %648 {offsets = [8, 0], sizes = [8, 128], strides = [1, 1]} : vector<64x128xf32> to vector<8x128xf32>
    %c1_280 = arith.constant 1 : index
    %c0_281 = arith.constant 0 : index
    %c0_282 = arith.constant 0 : index
    %654 = vector.load %arg18[%c1_280, %c0_281, %c0_282] : memref<8x8x128xf32, #tpu.memory_space<vmem>>, vector<1x8x128xf32>
    %655 = vector.shape_cast %654 : vector<1x8x128xf32> to vector<8x128xf32>
    %656 = vector.shape_cast %653 : vector<8x128xf32> to vector<1x8x128xf32>
    tpu.vector_store %arg18[%c1_280, %c0_281, %c0_282], %656 {strides = array<i32>} : memref<8x8x128xf32, #tpu.memory_space<vmem>>, vector<1x8x128xf32>,
    %657 = vector.extract_strided_slice %648 {offsets = [16, 0], sizes = [8, 128], strides = [1, 1]} : vector<64x128xf32> to vector<8x128xf32>
    %c2_283 = arith.constant 2 : index
    %c0_284 = arith.constant 0 : index
    %c0_285 = arith.constant 0 : index
    %658 = vector.load %arg18[%c2_283, %c0_284, %c0_285] : memref<8x8x128xf32, #tpu.memory_space<vmem>>, vector<1x8x128xf32>
    %659 = vector.shape_cast %658 : vector<1x8x128xf32> to vector<8x128xf32>
    %660 = vector.shape_cast %657 : vector<8x128xf32> to vector<1x8x128xf32>
    tpu.vector_store %arg18[%c2_283, %c0_284, %c0_285], %660 {strides = array<i32>} : memref<8x8x128xf32, #tpu.memory_space<vmem>>, vector<1x8x128xf32>,
    %661 = vector.extract_strided_slice %648 {offsets = [24, 0], sizes = [8, 128], strides = [1, 1]} : vector<64x128xf32> to vector<8x128xf32>
    %c3_286 = arith.constant 3 : index
    %c0_287 = arith.constant 0 : index
    %c0_288 = arith.constant 0 : index
    %662 = vector.load %arg18[%c3_286, %c0_287, %c0_288] : memref<8x8x128xf32, #tpu.memory_space<vmem>>, vector<1x8x128xf32>
    %663 = vector.shape_cast %662 : vector<1x8x128xf32> to vector<8x128xf32>
    %664 = vector.shape_cast %661 : vector<8x128xf32> to vector<1x8x128xf32>
    tpu.vector_store %arg18[%c3_286, %c0_287, %c0_288], %664 {strides = array<i32>} : memref<8x8x128xf32, #tpu.memory_space<vmem>>, vector<1x8x128xf32>,
    %665 = vector.extract_strided_slice %648 {offsets = [32, 0], sizes = [8, 128], strides = [1, 1]} : vector<64x128xf32> to vector<8x128xf32>
    %c4_289 = arith.constant 4 : index
    %c0_290 = arith.constant 0 : index
    %c0_291 = arith.constant 0 : index
    %666 = vector.load %arg18[%c4_289, %c0_290, %c0_291] : memref<8x8x128xf32, #tpu.memory_space<vmem>>, vector<1x8x128xf32>
    %667 = vector.shape_cast %666 : vector<1x8x128xf32> to vector<8x128xf32>
    %668 = vector.shape_cast %665 : vector<8x128xf32> to vector<1x8x128xf32>
    tpu.vector_store %arg18[%c4_289, %c0_290, %c0_291], %668 {strides = array<i32>} : memref<8x8x128xf32, #tpu.memory_space<vmem>>, vector<1x8x128xf32>,
    %669 = vector.extract_strided_slice %648 {offsets = [40, 0], sizes = [8, 128], strides = [1, 1]} : vector<64x128xf32> to vector<8x128xf32>
    %c5_292 = arith.constant 5 : index
    %c0_293 = arith.constant 0 : index
    %c0_294 = arith.constant 0 : index
    %670 = vector.load %arg18[%c5_292, %c0_293, %c0_294] : memref<8x8x128xf32, #tpu.memory_space<vmem>>, vector<1x8x128xf32>
    %671 = vector.shape_cast %670 : vector<1x8x128xf32> to vector<8x128xf32>
    %672 = vector.shape_cast %669 : vector<8x128xf32> to vector<1x8x128xf32>
    tpu.vector_store %arg18[%c5_292, %c0_293, %c0_294], %672 {strides = array<i32>} : memref<8x8x128xf32, #tpu.memory_space<vmem>>, vector<1x8x128xf32>,
    %673 = vector.extract_strided_slice %648 {offsets = [48, 0], sizes = [8, 128], strides = [1, 1]} : vector<64x128xf32> to vector<8x128xf32>
    %c6_295 = arith.constant 6 : index
    %c0_296 = arith.constant 0 : index
    %c0_297 = arith.constant 0 : index
    %674 = vector.load %arg18[%c6_295, %c0_296, %c0_297] : memref<8x8x128xf32, #tpu.memory_space<vmem>>, vector<1x8x128xf32>
    %675 = vector.shape_cast %674 : vector<1x8x128xf32> to vector<8x128xf32>
    %676 = vector.shape_cast %673 : vector<8x128xf32> to vector<1x8x128xf32>
    tpu.vector_store %arg18[%c6_295, %c0_296, %c0_297], %676 {strides = array<i32>} : memref<8x8x128xf32, #tpu.memory_space<vmem>>, vector<1x8x128xf32>,
    %677 = vector.extract_strided_slice %648 {offsets = [56, 0], sizes = [8, 128], strides = [1, 1]} : vector<64x128xf32> to vector<8x128xf32>
    %c7_298 = arith.constant 7 : index
    %c0_299 = arith.constant 0 : index
    %c0_300 = arith.constant 0 : index
    %678 = vector.load %arg18[%c7_298, %c0_299, %c0_300] : memref<8x8x128xf32, #tpu.memory_space<vmem>>, vector<1x8x128xf32>
    %679 = vector.shape_cast %678 : vector<1x8x128xf32> to vector<8x128xf32>
    %680 = vector.shape_cast %677 : vector<8x128xf32> to vector<1x8x128xf32>
    tpu.vector_store %arg18[%c7_298, %c0_299, %c0_300], %680 {strides = array<i32>} : memref<8x8x128xf32, #tpu.memory_space<vmem>>, vector<1x8x128xf32>,
    return
  }
  func.func @transform_0(%arg0: i32) -> (i32, i32, i32) {
    %c0_i32 = arith.constant 0 : i32
    %c0_i32_0 = arith.constant 0 : i32
    %c0_i32_1 = arith.constant 0 : i32
    return %c0_i32, %arg0, %c0_i32_0 : i32, i32, i32
  }
  func.func @transform_1(%arg0: i32) -> (i32, i32, i32) {
    %c0_i32 = arith.constant 0 : i32
    %c0_i32_0 = arith.constant 0 : i32
    %c0_i32_1 = arith.constant 0 : i32
    %c0_i32_2 = arith.constant 0 : i32
    return %c0_i32, %c0_i32_0, %c0_i32_1 : i32, i32, i32
  }
  func.func @transform_2(%arg0: i32) -> (i32, i32) {
    %c0_i32 = arith.constant 0 : i32
    %c0_i32_0 = arith.constant 0 : i32
    %c0_i32_1 = arith.constant 0 : i32
    return %c0_i32, %c0_i32_0 : i32, i32
  }
  func.func @transform_3(%arg0: i32) -> (i32, i32) {
    %c0_i32 = arith.constant 0 : i32
    %c0_i32_0 = arith.constant 0 : i32
    %c0_i32_1 = arith.constant 0 : i32
    return %c0_i32, %c0_i32_0 : i32, i32
  }
  func.func @transform_4(%arg0: i32) -> (i32, i32) {
    %c0_i32 = arith.constant 0 : i32
    %c0_i32_0 = arith.constant 0 : i32
    %c0_i32_1 = arith.constant 0 : i32
    return %c0_i32, %c0_i32_0 : i32, i32
  }
  func.func @transform_5(%arg0: i32) -> (i32, i32) {
    %c0_i32 = arith.constant 0 : i32
    %c0_i32_0 = arith.constant 0 : i32
    %c0_i32_1 = arith.constant 0 : i32
    return %c0_i32, %c0_i32_0 : i32, i32
  }
  func.func @transform_6(%arg0: i32) -> (i32, i32) {
    %c0_i32 = arith.constant 0 : i32
    %c0_i32_0 = arith.constant 0 : i32
    %c0_i32_1 = arith.constant 0 : i32
    return %c0_i32, %c0_i32_0 : i32, i32
  }
  func.func @transform_7(%arg0: i32) -> (i32, i32) {
    %c0_i32 = arith.constant 0 : i32
    %c0_i32_0 = arith.constant 0 : i32
    %c0_i32_1 = arith.constant 0 : i32
    return %c0_i32, %c0_i32_0 : i32, i32
  }
  func.func @transform_8(%arg0: i32) -> (i32, i32) {
    %c0_i32 = arith.constant 0 : i32
    %c0_i32_0 = arith.constant 0 : i32
    %c0_i32_1 = arith.constant 0 : i32
    return %c0_i32, %c0_i32_0 : i32, i32
  }
  func.func @transform_9(%arg0: i32) -> (i32, i32) {
    %c0_i32 = arith.constant 0 : i32
    %c0_i32_0 = arith.constant 0 : i32
    %c0_i32_1 = arith.constant 0 : i32
    return %c0_i32, %c0_i32_0 : i32, i32
  }
  func.func @transform_10(%arg0: i32) -> (i32, i32) {
    %c0_i32 = arith.constant 0 : i32
    %c0_i32_0 = arith.constant 0 : i32
    %c0_i32_1 = arith.constant 0 : i32
    return %c0_i32, %c0_i32_0 : i32, i32
  }
  func.func @transform_11(%arg0: i32) -> (i32, i32) {
    %c0_i32 = arith.constant 0 : i32
    %c0_i32_0 = arith.constant 0 : i32
    %c0_i32_1 = arith.constant 0 : i32
    return %c0_i32, %c0_i32_0 : i32, i32
  }
  func.func @transform_12(%arg0: i32) -> (i32, i32) {
    %c0_i32 = arith.constant 0 : i32
    %c0_i32_0 = arith.constant 0 : i32
    %c0_i32_1 = arith.constant 0 : i32
    return %c0_i32, %c0_i32_0 : i32, i32
  }
  func.func @transform_13(%arg0: i32) -> (i32, i32) {
    %c0_i32 = arith.constant 0 : i32
    %c0_i32_0 = arith.constant 0 : i32
    %c0_i32_1 = arith.constant 0 : i32
    return %c0_i32, %c0_i32_0 : i32, i32
  }
  func.func @transform_14(%arg0: i32) -> (i32, i32) {
    %c0_i32 = arith.constant 0 : i32
    %c0_i32_0 = arith.constant 0 : i32
    %c0_i32_1 = arith.constant 0 : i32
    return %c0_i32, %c0_i32_0 : i32, i32
  }
  func.func @transform_15(%arg0: i32) -> (i32, i32) {
    %c0_i32 = arith.constant 0 : i32
    %c0_i32_0 = arith.constant 0 : i32
    %c0_i32_1 = arith.constant 0 : i32
    return %c0_i32, %c0_i32_0 : i32, i32
  }
  func.func @transform_16(%arg0: i32) -> (i32, i32) {
    %c0_i32 = arith.constant 0 : i32
    %c0_i32_0 = arith.constant 0 : i32
    %c0_i32_1 = arith.constant 0 : i32
    return %c0_i32, %c0_i32_0 : i32, i32
  }
  func.func @transform_17(%arg0: i32) -> (i32, i32, i32) {
    %c0_i32 = arith.constant 0 : i32
    %c0_i32_0 = arith.constant 0 : i32
    %c0_i32_1 = arith.constant 0 : i32
    return %c0_i32, %arg0, %c0_i32_0 : i32, i32, i32
  }
}

</mosaic_0001>

<llo_original>
// kernel: cnn_lstm_decoder.1
$region0: #{cnn_lstm_decoder.1}
  #allocation0 [shape = 'u32[]', space=smem, size = 0x4, offset = 0x4, fixed_abs, tag = 'smem constant byte address 0x4 - core index']
  #allocation1 [shape = 'u32[144,128]{1,0:T(1,128)}', space=vmem, size = 0x12000, scoped, tag = 'internal scratch']
  #allocation2 [shape = 'f32[80,32]{1,0:T(8,128)}', space=vmem, size = 0xa000, scoped, tag = 'scratch operand']
  #allocation3 [shape = 'f32[64,512]{1,0:T(8,128)}', space=vmem, size = 0x20000, scoped, tag = 'scratch operand']
  #allocation4 [shape = 'f32[64,128]{1,0:T(8,128)}', space=vmem, size = 0x8000, scoped, tag = 'scratch operand']
  %s0 = inlined_call_operand.vmem [shape: f32[8,8,32], index: 0, kind: input, shape index: {}]
  %s1 = inlined_call_operand.vmem [shape: bf16[3,32,128], index: 1, kind: input, shape index: {}]
  %s2 = inlined_call_operand.vmem [shape: f32[1,128], index: 2, kind: input, shape index: {}]
  %s3 = inlined_call_operand.vmem [shape: bf16[128,512], index: 3, kind: input, shape index: {}]
  %s4 = inlined_call_operand.vmem [shape: bf16[128,512], index: 4, kind: input, shape index: {}]
  %s5 = inlined_call_operand.vmem [shape: f32[1,512], index: 5, kind: input, shape index: {}]
  %s6 = inlined_call_operand.vmem [shape: bf16[128,512], index: 6, kind: input, shape index: {}]
  %s7 = inlined_call_operand.vmem [shape: bf16[128,512], index: 7, kind: input, shape index: {}]
  %s8 = inlined_call_operand.vmem [shape: f32[1,512], index: 8, kind: input, shape index: {}]
  %s9 = inlined_call_operand.vmem [shape: bf16[128,64], index: 9, kind: input, shape index: {}]
  %s10 = inlined_call_operand.vmem [shape: f32[1,64], index: 10, kind: input, shape index: {}]
  %s11 = inlined_call_operand.vmem [shape: bf16[64,128], index: 11, kind: input, shape index: {}]
  %s12 = inlined_call_operand.vmem [shape: f32[1,128], index: 12, kind: input, shape index: {}]
  %s13 = inlined_call_operand.vmem [shape: bf16[128,64], index: 13, kind: input, shape index: {}]
  %s14 = inlined_call_operand.vmem [shape: f32[1,64], index: 14, kind: input, shape index: {}]
  %s15 = inlined_call_operand.vmem [shape: bf16[64,128], index: 15, kind: input, shape index: {}]
  %s16 = inlined_call_operand.vmem [shape: f32[1,128], index: 16, kind: input, shape index: {}]
  %s17 = inlined_call_operand.vmem [shape: f32[8,8,128], index: 17, kind: output, shape index: {}]
  %s18 = sld [smem:[#allocation0]]
  $region78: #{cnn_lstm_decoder.1} parent=0
    _
  %s20 = ssub.s32 1, %s18
  %s21 = scalar_select 0, %s20, %s18
  // Predicated region
  $region2: #{cnn_lstm_decoder.1} parent=0 // pred_check
    _
  $region3: #{cnn_lstm_decoder.1} parent=0 // pred_check_branch
    %23 = sbr.rel (0) target = $region5
  $region4: #{cnn_lstm_decoder.1} parent=0 // pred_region
    _
  $region5: #{cnn_lstm_decoder.1} parent=0 // pred_fallthru
    _
  // Predicated region
  $region6: #{cnn_lstm_decoder.1} parent=0 // pred_check
    _
  $region7: #{cnn_lstm_decoder.1} parent=0 // pred_check_branch
    %25 = sbr.rel (0) target = $region9
  $region8: #{cnn_lstm_decoder.1} parent=0 // pred_region
    _
  $region9: #{cnn_lstm_decoder.1} parent=0 // pred_fallthru
    _
  // Predicated region
  $region10: #{cnn_lstm_decoder.1} parent=0 // pred_check
    _
  $region11: #{cnn_lstm_decoder.1} parent=0 // pred_check_branch
    %27 = sbr.rel (0) target = $region13
  $region12: #{cnn_lstm_decoder.1} parent=0 // pred_region
    _
  $region13: #{cnn_lstm_decoder.1} parent=0 // pred_fallthru
    _
  // Predicated region
  $region14: #{cnn_lstm_decoder.1} parent=0 // pred_check
    _
  $region15: #{cnn_lstm_decoder.1} parent=0 // pred_check_branch
    %29 = sbr.rel (0) target = $region17
  $region16: #{cnn_lstm_decoder.1} parent=0 // pred_region
    _
  $region17: #{cnn_lstm_decoder.1} parent=0 // pred_fallthru
    _
  // Predicated region
  $region18: #{cnn_lstm_decoder.1} parent=0 // pred_check
    _
  $region19: #{cnn_lstm_decoder.1} parent=0 // pred_check_branch
    %31 = sbr.rel (0) target = $region21
  $region20: #{cnn_lstm_decoder.1} parent=0 // pred_region
    _
  $region21: #{cnn_lstm_decoder.1} parent=0 // pred_fallthru
    _
  // Predicated region
  $region22: #{cnn_lstm_decoder.1} parent=0 // pred_check
    _
  $region23: #{cnn_lstm_decoder.1} parent=0 // pred_check_branch
    %33 = sbr.rel (0) target = $region25
  $region24: #{cnn_lstm_decoder.1} parent=0 // pred_region
    _
  $region25: #{cnn_lstm_decoder.1} parent=0 // pred_fallthru
    _
  // Predicated region
  $region26: #{cnn_lstm_decoder.1} parent=0 // pred_check
    _
  $region27: #{cnn_lstm_decoder.1} parent=0 // pred_check_branch
    %35 = sbr.rel (0) target = $region29
  $region28: #{cnn_lstm_decoder.1} parent=0 // pred_region
    _
  $region29: #{cnn_lstm_decoder.1} parent=0 // pred_fallthru
    _
  // Predicated region
  $region30: #{cnn_lstm_decoder.1} parent=0 // pred_check
    _
  $region31: #{cnn_lstm_decoder.1} parent=0 // pred_check_branch
    %37 = sbr.rel (0) target = $region33
  $region32: #{cnn_lstm_decoder.1} parent=0 // pred_region
    _
  $region33: #{cnn_lstm_decoder.1} parent=0 // pred_fallthru
    _
  // Predicated region
  $region34: #{cnn_lstm_decoder.1} parent=0 // pred_check
    _
  $region35: #{cnn_lstm_decoder.1} parent=0 // pred_check_branch
    %39 = sbr.rel (0) target = $region37
  $region36: #{cnn_lstm_decoder.1} parent=0 // pred_region
    _
  $region37: #{cnn_lstm_decoder.1} parent=0 // pred_fallthru
    _
  // Predicated region
  $region38: #{cnn_lstm_decoder.1} parent=0 // pred_check
    _
  $region39: #{cnn_lstm_decoder.1} parent=0 // pred_check_branch
    %41 = sbr.rel (0) target = $region41
  $region40: #{cnn_lstm_decoder.1} parent=0 // pred_region
    _
  $region41: #{cnn_lstm_decoder.1} parent=0 // pred_fallthru
    _
  // Predicated region
  $region42: #{cnn_lstm_decoder.1} parent=0 // pred_check
    _
  $region43: #{cnn_lstm_decoder.1} parent=0 // pred_check_branch
    %43 = sbr.rel (0) target = $region45
  $region44: #{cnn_lstm_decoder.1} parent=0 // pred_region
    _
  $region45: #{cnn_lstm_decoder.1} parent=0 // pred_fallthru
    _
  // Predicated region
  $region46: #{cnn_lstm_decoder.1} parent=0 // pred_check
    _
  $region47: #{cnn_lstm_decoder.1} parent=0 // pred_check_branch
    %45 = sbr.rel (0) target = $region49
  $region48: #{cnn_lstm_decoder.1} parent=0 // pred_region
    _
  $region49: #{cnn_lstm_decoder.1} parent=0 // pred_fallthru
    _
  // Predicated region
  $region50: #{cnn_lstm_decoder.1} parent=0 // pred_check
    _
  $region51: #{cnn_lstm_decoder.1} parent=0 // pred_check_branch
    %47 = sbr.rel (0) target = $region53
  $region52: #{cnn_lstm_decoder.1} parent=0 // pred_region
    _
  $region53: #{cnn_lstm_decoder.1} parent=0 // pred_fallthru
    _
  // Predicated region
  $region54: #{cnn_lstm_decoder.1} parent=0 // pred_check
    _
  $region55: #{cnn_lstm_decoder.1} parent=0 // pred_check_branch
    %49 = sbr.rel (0) target = $region57
  $region56: #{cnn_lstm_decoder.1} parent=0 // pred_region
    _
  $region57: #{cnn_lstm_decoder.1} parent=0 // pred_fallthru
    _
  // Predicated region
  $region58: #{cnn_lstm_decoder.1} parent=0 // pred_check
    _
  $region59: #{cnn_lstm_decoder.1} parent=0 // pred_check_branch
    %51 = sbr.rel (0) target = $region61
  $region60: #{cnn_lstm_decoder.1} parent=0 // pred_region
    _
  $region61: #{cnn_lstm_decoder.1} parent=0 // pred_fallthru
    _
  // Predicated region
  $region62: #{cnn_lstm_decoder.1} parent=0 // pred_check
    _
  $region63: #{cnn_lstm_decoder.1} parent=0 // pred_check_branch
    %53 = sbr.rel (0) target = $region65
  $region64: #{cnn_lstm_decoder.1} parent=0 // pred_region
    _
  $region65: #{cnn_lstm_decoder.1} parent=0 // pred_fallthru
    _
  // Predicated region
  $region66: #{cnn_lstm_decoder.1} parent=0 // pred_check
    _
  $region67: #{cnn_lstm_decoder.1} parent=0 // pred_check_branch
    %55 = sbr.rel (0) target = $region69
  $region68: #{cnn_lstm_decoder.1} parent=0 // pred_region
    _
  $region69: #{cnn_lstm_decoder.1} parent=0 // pred_fallthru
    _
  %vm57 = vcmask 261120
  %58 = vst.msk [vmem:[#allocation2] sm:$0xff] %vm57, 0.0
  %59 = vst.msk [vmem:[#allocation2 + $0x48] sm:$0xff] %vm57, 0.0
  %v60 = vld [vmem:[%s0] sm:$0xff]
  %61 = vst.msk [vmem:[#allocation2 + $0x8] sm:$0xff] %vm57, %v60
  %s62 = scalar_lea.vmem %s0, 8
  %v63 = vld [vmem:[%s62] sm:$0xff]
  %64 = vst.msk [vmem:[#allocation2 + $0x10] sm:$0xff] %vm57, %v63
  %s65 = scalar_lea.vmem %s0, 16
  %v66 = vld [vmem:[%s65] sm:$0xff]
  %67 = vst.msk [vmem:[#allocation2 + $0x18] sm:$0xff] %vm57, %v66
  %s68 = scalar_lea.vmem %s0, 24
  %v69 = vld [vmem:[%s68] sm:$0xff]
  %70 = vst.msk [vmem:[#allocation2 + $0x20] sm:$0xff] %vm57, %v69
  %s71 = scalar_lea.vmem %s0, 32
  %v72 = vld [vmem:[%s71] sm:$0xff]
  %73 = vst.msk [vmem:[#allocation2 + $0x28] sm:$0xff] %vm57, %v72
  %s74 = scalar_lea.vmem %s0, 40
  %v75 = vld [vmem:[%s74] sm:$0xff]
  %76 = vst.msk [vmem:[#allocation2 + $0x30] sm:$0xff] %vm57, %v75
  %s77 = scalar_lea.vmem %s0, 48
  %v78 = vld [vmem:[%s77] sm:$0xff]
  %79 = vst.msk [vmem:[#allocation2 + $0x38] sm:$0xff] %vm57, %v78
  %s80 = scalar_lea.vmem %s0, 56
  %v81 = vld [vmem:[%s80] sm:$0xff]
  %82 = vst.msk [vmem:[#allocation2 + $0x40] sm:$0xff] %vm57, %v81
  %v83 = vld [vmem:[#allocation2] sm:$0xff]
  %v84 = vld [vmem:[#allocation2 + $0x8] sm:$0xff]
  %v85 = vld [vmem:[#allocation2 + $0x10] sm:$0xff]
  %v86 = vld [vmem:[#allocation2 + $0x18] sm:$0xff]
  %v87 = vld [vmem:[#allocation2 + $0x20] sm:$0xff]
  %v88 = vld [vmem:[#allocation2 + $0x28] sm:$0xff]
  %v89 = vld [vmem:[#allocation2 + $0x30] sm:$0xff]
  %v90 = vld [vmem:[#allocation2 + $0x38] sm:$0xff]
  %v91 = vpack.c.bf16 %v84, %v83
  %v92 = vpack.c.bf16 %v86, %v85
  %v93 = vpack.c.bf16 %v88, %v87
  %v94 = vpack.c.bf16 %v90, %v89
  %v95 = vld [vmem:[%s1] sm:$0xf]
  %v96 = vld [vmem:[%s1 + $0x4] sm:$0xf]
  %v97 = vld [vmem:[%s1 + $0x8] sm:$0xf]
  %v98 = vld [vmem:[%s1 + $0xc] sm:$0xf]
  %v99 = vld [vmem:[#allocation2 + $0x40] sm:$0xff]
  %v100 = vpack.c.bf16 %v85, %v84
  %v101 = vpack.c.bf16 %v87, %v86
  %v102 = vpack.c.bf16 %v89, %v88
  %v103 = vpack.c.bf16 %v99, %v90
  %s104 = scalar_lea.vmem %s1, 16
  %v105 = vld [vmem:[%s104] sm:$0xf]
  %v106 = vld [vmem:[%s104 + $0x4] sm:$0xf]
  %v107 = vld [vmem:[%s104 + $0x8] sm:$0xf]
  %v108 = vld [vmem:[%s104 + $0xc] sm:$0xf]
  %v113 = vunpack.c.l.b16 %v105
  %v114 = vunpack.c.l.b16 %v106
  %v115 = vunpack.c.l.b16 %v107
  %v116 = vunpack.c.l.b16 %v108
  %v117 = vpack.c.b16 %v114, %v113
  %v118 = vpack.c.b16 %v116, %v115
  %v122 = vsel %vm57, %v100, 0
  %v125 = vsel %vm57, %v101, 0
  %v128 = vsel %vm57, %v102, 0
  %v131 = vsel %vm57, %v103, 0
  %133 = vmatprep.subr.bf16.mxu0 0
  %134 = vmatpush1.bf16.msra.mxu0 0
  %135 = vmatprep.subr.bf16.mxu0 0
  %136 = vmatpush1.bf16.msra.mxu0 0
  %137 = vmatprep.subr.bf16.mxu0 0
  %138 = vmatpush1.bf16.msra.mxu0 0
  %139 = vmatprep.subr.bf16.mxu0 0
  %140 = vmatpush1.bf16.msra.mxu0 0
  %141 = vmatprep.subr.bf16.mxu0 0
  %142 = vmatpush1.bf16.msra.mxu0 0
  %143 = vmatprep.subr.bf16.mxu0 0
  %144 = vmatpush1.bf16.msra.mxu0 0
  %145 = vmatprep.subr.bf16.mxu0 0
  %146 = vmatpush1.bf16.msra.mxu0 %v118
  %147 = vmatprep.subr.bf16.mxu0 0
  %148 = vmatpush1.bf16.msra.mxu0 %v117
  %149 = vmatprep.subr.bf16.mxu0 0
  %150 = vmatpush2.bf16.msra.mxu0 0
  %151 = vmatprep.subr.bf16.mxu0 0
  %152 = vmatpush2.bf16.msra.mxu0 0
  %153 = vmatprep.subr.bf16.mxu0 0
  %154 = vmatpush2.bf16.msra.mxu0 0
  %155 = vmatprep.subr.bf16.mxu0 0
  %156 = vmatpush2.bf16.msra.mxu0 0
  %157 = vmatprep.subr.bf16.mxu0 0
  %158 = vmatpush2.bf16.msra.mxu0 0
  %159 = vmatprep.subr.bf16.mxu0 0
  %160 = vmatpush2.bf16.msra.mxu0 0
  %161 = vmatprep.subr.bf16.mxu0 0
  %162 = vmatpush2.bf16.msra.mxu0 0
  %163 = vmatprep.subr.bf16.mxu0 0
  %164 = vmatpush2.bf16.msra.mxu0 0
  %165 = vmatprep.mubr.bf16.mxu0 0
  %166 = vmatmul.mubr.bf16.gmra.mxu0 %v122
  %v167 = vpop.f32.mrf.mxu0
  %v168 = vadd.f32 0.0, %v167
  %v169 = vpop.f32.mrf.mxu0
  %v170 = vpop.f32.mrf.mxu0
  %v171 = vadd.f32 0.0, %v170
  %v172 = vpop.f32.mrf.mxu0
  %173 = vmatprep.mubr.bf16.mxu0 0
  %174 = vmatmul.mubr.bf16.gmra.mxu0 %v125
  %v175 = vpop.f32.mrf.mxu0
  %v176 = vadd.f32 0.0, %v175
  %v177 = vpop.f32.mrf.mxu0
  %v178 = vpop.f32.mrf.mxu0
  %v179 = vadd.f32 0.0, %v178
  %v180 = vpop.f32.mrf.mxu0
  %181 = vmatprep.mubr.bf16.mxu0 0
  %182 = vmatmul.mubr.bf16.gmra.mxu0 %v128
  %v183 = vpop.f32.mrf.mxu0
  %v184 = vadd.f32 0.0, %v183
  %v185 = vpop.f32.mrf.mxu0
  %v186 = vpop.f32.mrf.mxu0
  %v187 = vadd.f32 0.0, %v186
  %v188 = vpop.f32.mrf.mxu0
  %189 = vmatprep.mubr.bf16.mxu0 0
  %190 = vmatmul.mubr.bf16.gmra.mxu0 %v131
  %v191 = vpop.f32.mrf.mxu0
  %v192 = vadd.f32 0.0, %v191
  %v193 = vpop.f32.mrf.mxu0
  %v194 = vpop.f32.mrf.mxu0
  %v195 = vadd.f32 0.0, %v194
  %v196 = vpop.f32.mrf.mxu0
  %197 = vdwg.mxu0
  %v202 = vunpack.c.l.b16 %v95
  %v203 = vunpack.c.l.b16 %v96
  %v204 = vunpack.c.l.b16 %v97
  %v205 = vunpack.c.l.b16 %v98
  %v206 = vpack.c.b16 %v203, %v202
  %v207 = vpack.c.b16 %v205, %v204
  %v211 = vsel %vm57, %v91, 0
  %v214 = vsel %vm57, %v92, 0
  %v217 = vsel %vm57, %v93, 0
  %v220 = vsel %vm57, %v94, 0
  %222 = vmatprep.subr.bf16.mxu0 0
  %223 = vmatpush1.bf16.msra.mxu0 0
  %224 = vmatprep.subr.bf16.mxu0 0
  %225 = vmatpush1.bf16.msra.mxu0 0
  %226 = vmatprep.subr.bf16.mxu0 0
  %227 = vmatpush1.bf16.msra.mxu0 0
  %228 = vmatprep.subr.bf16.mxu0 0
  %229 = vmatpush1.bf16.msra.mxu0 0
  %230 = vmatprep.subr.bf16.mxu0 0
  %231 = vmatpush1.bf16.msra.mxu0 0
  %232 = vmatprep.subr.bf16.mxu0 0
  %233 = vmatpush1.bf16.msra.mxu0 0
  %234 = vmatprep.subr.bf16.mxu0 0
  %235 = vmatpush1.bf16.msra.mxu0 %v207
  %236 = vmatprep.subr.bf16.mxu0 0
  %237 = vmatpush1.bf16.msra.mxu0 %v206
  %238 = vmatprep.subr.bf16.mxu0 0
  %239 = vmatpush2.bf16.msra.mxu0 0
  %240 = vmatprep.subr.bf16.mxu0 0
  %241 = vmatpush2.bf16.msra.mxu0 0
  %242 = vmatprep.subr.bf16.mxu0 0
  %243 = vmatpush2.bf16.msra.mxu0 0
  %244 = vmatprep.subr.bf16.mxu0 0
  %245 = vmatpush2.bf16.msra.mxu0 0
  %246 = vmatprep.subr.bf16.mxu0 0
  %247 = vmatpush2.bf16.msra.mxu0 0
  %248 = vmatprep.subr.bf16.mxu0 0
  %249 = vmatpush2.bf16.msra.mxu0 0
  %250 = vmatprep.subr.bf16.mxu0 0
  %251 = vmatpush2.bf16.msra.mxu0 0
  %252 = vmatprep.subr.bf16.mxu0 0
  %253 = vmatpush2.bf16.msra.mxu0 0
  %254 = vmatprep.mubr.bf16.mxu0 0
  %255 = vmatmul.mubr.bf16.gmra.mxu0 %v211
  %v256 = vpop.f32.mrf.mxu0
  %v257 = vadd.f32 %v168, %v256
  %v258 = vpop.f32.mrf.mxu0
  %v259 = vpop.f32.mrf.mxu0
  %v260 = vadd.f32 %v171, %v259
  %v261 = vpop.f32.mrf.mxu0
  %262 = vmatprep.mubr.bf16.mxu0 0
  %263 = vmatmul.mubr.bf16.gmra.mxu0 %v214
  %v264 = vpop.f32.mrf.mxu0
  %v265 = vadd.f32 %v176, %v264
  %v266 = vpop.f32.mrf.mxu0
  %v267 = vpop.f32.mrf.mxu0
  %v268 = vadd.f32 %v179, %v267
  %v269 = vpop.f32.mrf.mxu0
  %270 = vmatprep.mubr.bf16.mxu0 0
  %271 = vmatmul.mubr.bf16.gmra.mxu0 %v217
  %v272 = vpop.f32.mrf.mxu0
  %v273 = vadd.f32 %v184, %v272
  %v274 = vpop.f32.mrf.mxu0
  %v275 = vpop.f32.mrf.mxu0
  %v276 = vadd.f32 %v187, %v275
  %v277 = vpop.f32.mrf.mxu0
  %278 = vmatprep.mubr.bf16.mxu0 0
  %279 = vmatmul.mubr.bf16.gmra.mxu0 %v220
  %v280 = vpop.f32.mrf.mxu0
  %v281 = vadd.f32 %v192, %v280
  %v282 = vpop.f32.mrf.mxu0
  %v283 = vpop.f32.mrf.mxu0
  %v284 = vadd.f32 %v195, %v283
  %v285 = vpop.f32.mrf.mxu0
  %286 = vdwg.mxu0
  %v287 = vld [vmem:[#allocation2 + $0x10] sm:$0xff]
  %v288 = vld [vmem:[#allocation2 + $0x18] sm:$0xff]
  %v289 = vld [vmem:[#allocation2 + $0x20] sm:$0xff]
  %v290 = vld [vmem:[#allocation2 + $0x28] sm:$0xff]
  %v291 = vld [vmem:[#allocation2 + $0x30] sm:$0xff]
  %v292 = vld [vmem:[#allocation2 + $0x38] sm:$0xff]
  %v293 = vld [vmem:[#allocation2 + $0x40] sm:$0xff]
  %v294 = vld [vmem:[#allocation2 + $0x48] sm:$0xff]
  %v295 = vpack.c.bf16 %v288, %v287
  %v296 = vpack.c.bf16 %v290, %v289
  %v297 = vpack.c.bf16 %v292, %v291
  %v298 = vpack.c.bf16 %v294, %v293
  %s299 = scalar_lea.vmem %s1, 32
  %v300 = vld [vmem:[%s299] sm:$0xf]
  %v301 = vld [vmem:[%s299 + $0x4] sm:$0xf]
  %v302 = vld [vmem:[%s299 + $0x8] sm:$0xf]
  %v303 = vld [vmem:[%s299 + $0xc] sm:$0xf]
  %v308 = vunpack.c.l.b16 %v300
  %v309 = vunpack.c.l.b16 %v301
  %v310 = vunpack.c.l.b16 %v302
  %v311 = vunpack.c.l.b16 %v303
  %v312 = vpack.c.b16 %v309, %v308
  %v313 = vpack.c.b16 %v311, %v310
  %v317 = vsel %vm57, %v295, 0
  %v320 = vsel %vm57, %v296, 0
  %v323 = vsel %vm57, %v297, 0
  %v326 = vsel %vm57, %v298, 0
  %328 = vmatprep.subr.bf16.mxu0 0
  %329 = vmatpush1.bf16.msra.mxu0 0
  %330 = vmatprep.subr.bf16.mxu0 0
  %331 = vmatpush1.bf16.msra.mxu0 0
  %332 = vmatprep.subr.bf16.mxu0 0
  %333 = vmatpush1.bf16.msra.mxu0 0
  %334 = vmatprep.subr.bf16.mxu0 0
  %335 = vmatpush1.bf16.msra.mxu0 0
  %336 = vmatprep.subr.bf16.mxu0 0
  %337 = vmatpush1.bf16.msra.mxu0 0
  %338 = vmatprep.subr.bf16.mxu0 0
  %339 = vmatpush1.bf16.msra.mxu0 0
  %340 = vmatprep.subr.bf16.mxu0 0
  %341 = vmatpush1.bf16.msra.mxu0 %v313
  %342 = vmatprep.subr.bf16.mxu0 0
  %343 = vmatpush1.bf16.msra.mxu0 %v312
  %344 = vmatprep.subr.bf16.mxu0 0
  %345 = vmatpush2.bf16.msra.mxu0 0
  %346 = vmatprep.subr.bf16.mxu0 0
  %347 = vmatpush2.bf16.msra.mxu0 0
  %348 = vmatprep.subr.bf16.mxu0 0
  %349 = vmatpush2.bf16.msra.mxu0 0
  %350 = vmatprep.subr.bf16.mxu0 0
  %351 = vmatpush2.bf16.msra.mxu0 0
  %352 = vmatprep.subr.bf16.mxu0 0
  %353 = vmatpush2.bf16.msra.mxu0 0
  %354 = vmatprep.subr.bf16.mxu0 0
  %355 = vmatpush2.bf16.msra.mxu0 0
  %356 = vmatprep.subr.bf16.mxu0 0
  %357 = vmatpush2.bf16.msra.mxu0 0
  %358 = vmatprep.subr.bf16.mxu0 0
  %359 = vmatpush2.bf16.msra.mxu0 0
  %360 = vmatprep.mubr.bf16.mxu0 0
  %361 = vmatmul.mubr.bf16.gmra.mxu0 %v317
  %v362 = vpop.f32.mrf.mxu0
  %v363 = vadd.f32 0.0, %v362
  %v364 = vpop.f32.mrf.mxu0
  %v365 = vpop.f32.mrf.mxu0
  %v366 = vadd.f32 0.0, %v365
  %v367 = vpop.f32.mrf.mxu0
  %368 = vmatprep.mubr.bf16.mxu0 0
  %369 = vmatmul.mubr.bf16.gmra.mxu0 %v320
  %v370 = vpop.f32.mrf.mxu0
  %v371 = vadd.f32 0.0, %v370
  %v372 = vpop.f32.mrf.mxu0
  %v373 = vpop.f32.mrf.mxu0
  %v374 = vadd.f32 0.0, %v373
  %v375 = vpop.f32.mrf.mxu0
  %376 = vmatprep.mubr.bf16.mxu0 0
  %377 = vmatmul.mubr.bf16.gmra.mxu0 %v323
  %v378 = vpop.f32.mrf.mxu0
  %v379 = vadd.f32 0.0, %v378
  %v380 = vpop.f32.mrf.mxu0
  %v381 = vpop.f32.mrf.mxu0
  %v382 = vadd.f32 0.0, %v381
  %v383 = vpop.f32.mrf.mxu0
  %384 = vmatprep.mubr.bf16.mxu0 0
  %385 = vmatmul.mubr.bf16.gmra.mxu0 %v326
  %v386 = vpop.f32.mrf.mxu0
  %v387 = vadd.f32 0.0, %v386
  %v388 = vpop.f32.mrf.mxu0
  %v389 = vpop.f32.mrf.mxu0
  %v390 = vadd.f32 0.0, %v389
  %v391 = vpop.f32.mrf.mxu0
  %392 = vdwg.mxu0
  %v393 = vadd.f32 %v257, %v363
  %v394 = vadd.f32 %v260, %v366
  %v395 = vadd.f32 %v265, %v371
  %v396 = vadd.f32 %v268, %v374
  %v397 = vadd.f32 %v273, %v379
  %v398 = vadd.f32 %v276, %v382
  %v399 = vadd.f32 %v281, %v387
  %v400 = vadd.f32 %v284, %v390
  %v401 = vld [vmem:[%s2] sm:$0x1]
  %v403 = vlaneseq
  %v404 = vshrl.u32 %v403, 7
  %v405 = vsub.s32 0, %v404
  %v406 = vrot.slane %v401, %v405
  %v408 = vadd.f32 %v393, %v406
  %v409 = vadd.f32 %v394, %v406
  %v410 = vadd.f32 %v395, %v406
  %v411 = vadd.f32 %v396, %v406
  %v412 = vadd.f32 %v397, %v406
  %v413 = vadd.f32 %v398, %v406
  %v414 = vadd.f32 %v399, %v406
  %v415 = vadd.f32 %v400, %v406
  %v416 = vmax.f32 %v408, 0.0
  %v417 = vmax.f32 %v409, 0.0
  %v418 = vmax.f32 %v410, 0.0
  %v419 = vmax.f32 %v411, 0.0
  %v420 = vmax.f32 %v412, 0.0
  %v421 = vmax.f32 %v413, 0.0
  %v422 = vmax.f32 %v414, 0.0
  %v423 = vmax.f32 %v415, 0.0
  %v424 = vpack.c.bf16 %v417, %v416
  %v425 = vpack.c.bf16 %v419, %v418
  %v426 = vpack.c.bf16 %v421, %v420
  %v427 = vpack.c.bf16 %v423, %v422
  %v428 = vld [vmem:[%s3] sm:$0xff]
  %v429 = vld [vmem:[%s3 + $0x8] sm:$0xff]
  %v430 = vld [vmem:[%s3 + $0x10] sm:$0xff]
  %v431 = vld [vmem:[%s3 + $0x18] sm:$0xff]
  %v432 = vld [vmem:[%s3 + $0x20] sm:$0xff]
  %v433 = vld [vmem:[%s3 + $0x28] sm:$0xff]
  %v434 = vld [vmem:[%s3 + $0x30] sm:$0xff]
  %v435 = vld [vmem:[%s3 + $0x38] sm:$0xff]
  %v436 = vld [vmem:[%s3 + $0x40] sm:$0xff]
  %v437 = vld [vmem:[%s3 + $0x48] sm:$0xff]
  %v438 = vld [vmem:[%s3 + $0x50] sm:$0xff]
  %v439 = vld [vmem:[%s3 + $0x58] sm:$0xff]
  %v440 = vld [vmem:[%s3 + $0x60] sm:$0xff]
  %v441 = vld [vmem:[%s3 + $0x68] sm:$0xff]
  %v442 = vld [vmem:[%s3 + $0x70] sm:$0xff]
  %v443 = vld [vmem:[%s3 + $0x78] sm:$0xff]
  %v444 = vld [vmem:[%s3 + $0x80] sm:$0xff]
  %v445 = vld [vmem:[%s3 + $0x88] sm:$0xff]
  %v446 = vld [vmem:[%s3 + $0x90] sm:$0xff]
  %v447 = vld [vmem:[%s3 + $0x98] sm:$0xff]
  %v448 = vld [vmem:[%s3 + $0xa0] sm:$0xff]
  %v449 = vld [vmem:[%s3 + $0xa8] sm:$0xff]
  %v450 = vld [vmem:[%s3 + $0xb0] sm:$0xff]
  %v451 = vld [vmem:[%s3 + $0xb8] sm:$0xff]
  %v452 = vld [vmem:[%s3 + $0xc0] sm:$0xff]
  %v453 = vld [vmem:[%s3 + $0xc8] sm:$0xff]
  %v454 = vld [vmem:[%s3 + $0xd0] sm:$0xff]
  %v455 = vld [vmem:[%s3 + $0xd8] sm:$0xff]
  %v456 = vld [vmem:[%s3 + $0xe0] sm:$0xff]
  %v457 = vld [vmem:[%s3 + $0xe8] sm:$0xff]
  %v458 = vld [vmem:[%s3 + $0xf0] sm:$0xff]
  %v459 = vld [vmem:[%s3 + $0xf8] sm:$0xff]
  %v460 = vld [vmem:[%s5] sm:$0xf]
  %v462 = vlaneseq
  %v463 = vshrl.u32 %v462, 7
  %v464 = vsub.s32 0, %v463
  %v465 = vrot.slane %v460, %v464
  %v466 = vlaneseq
  %v467 = vshrl.u32 %v466, 7
  %v468 = vsub.s32 1, %v467
  %v469 = vrot.slane %v460, %v468
  %v470 = vlaneseq
  %v471 = vshrl.u32 %v470, 7
  %v472 = vsub.s32 2, %v471
  %v473 = vrot.slane %v460, %v472
  %v474 = vlaneseq
  %v475 = vshrl.u32 %v474, 7
  %v476 = vsub.s32 3, %v475
  %v477 = vrot.slane %v460, %v476
  %v514 = vunpack.c.l.b16 %v428
  %v515 = vunpack.c.h.b16 %v428
  %v516 = vunpack.c.l.b16 %v429
  %v517 = vunpack.c.h.b16 %v429
  %v518 = vunpack.c.l.b16 %v430
  %v519 = vunpack.c.h.b16 %v430
  %v520 = vunpack.c.l.b16 %v431
  %v521 = vunpack.c.h.b16 %v431
  %v522 = vunpack.c.l.b16 %v432
  %v523 = vunpack.c.h.b16 %v432
  %v524 = vunpack.c.l.b16 %v433
  %v525 = vunpack.c.h.b16 %v433
  %v526 = vunpack.c.l.b16 %v434
  %v527 = vunpack.c.h.b16 %v434
  %v528 = vunpack.c.l.b16 %v435
  %v529 = vunpack.c.h.b16 %v435
  %v530 = vunpack.c.l.b16 %v436
  %v531 = vunpack.c.h.b16 %v436
  %v532 = vunpack.c.l.b16 %v437
  %v533 = vunpack.c.h.b16 %v437
  %v534 = vunpack.c.l.b16 %v438
  %v535 = vunpack.c.h.b16 %v438
  %v536 = vunpack.c.l.b16 %v439
  %v537 = vunpack.c.h.b16 %v439
  %v538 = vunpack.c.l.b16 %v440
  %v539 = vunpack.c.h.b16 %v440
  %v540 = vunpack.c.l.b16 %v441
  %v541 = vunpack.c.h.b16 %v441
  %v542 = vunpack.c.l.b16 %v442
  %v543 = vunpack.c.h.b16 %v442
  %v544 = vunpack.c.l.b16 %v443
  %v545 = vunpack.c.h.b16 %v443
  %v546 = vunpack.c.l.b16 %v444
  %v547 = vunpack.c.h.b16 %v444
  %v548 = vunpack.c.l.b16 %v445
  %v549 = vunpack.c.h.b16 %v445
  %v550 = vunpack.c.l.b16 %v446
  %v551 = vunpack.c.h.b16 %v446
  %v552 = vunpack.c.l.b16 %v447
  %v553 = vunpack.c.h.b16 %v447
  %v554 = vunpack.c.l.b16 %v448
  %v555 = vunpack.c.h.b16 %v448
  %v556 = vunpack.c.l.b16 %v449
  %v557 = vunpack.c.h.b16 %v449
  %v558 = vunpack.c.l.b16 %v450
  %v559 = vunpack.c.h.b16 %v450
  %v560 = vunpack.c.l.b16 %v451
  %v561 = vunpack.c.h.b16 %v451
  %v562 = vunpack.c.l.b16 %v452
  %v563 = vunpack.c.h.b16 %v452
  %v564 = vunpack.c.l.b16 %v453
  %v565 = vunpack.c.h.b16 %v453
  %v566 = vunpack.c.l.b16 %v454
  %v567 = vunpack.c.h.b16 %v454
  %v568 = vunpack.c.l.b16 %v455
  %v569 = vunpack.c.h.b16 %v455
  %v570 = vunpack.c.l.b16 %v456
  %v571 = vunpack.c.h.b16 %v456
  %v572 = vunpack.c.l.b16 %v457
  %v573 = vunpack.c.h.b16 %v457
  %v574 = vunpack.c.l.b16 %v458
  %v575 = vunpack.c.h.b16 %v458
  %v576 = vunpack.c.l.b16 %v459
  %v577 = vunpack.c.h.b16 %v459
  %v578 = vpack.c.b16 %v518, %v514
  %v579 = vpack.c.b16 %v519, %v515
  %v580 = vpack.c.b16 %v520, %v516
  %v581 = vpack.c.b16 %v521, %v517
  %v582 = vpack.c.b16 %v526, %v522
  %v583 = vpack.c.b16 %v527, %v523
  %v584 = vpack.c.b16 %v528, %v524
  %v585 = vpack.c.b16 %v529, %v525
  %v586 = vpack.c.b16 %v534, %v530
  %v587 = vpack.c.b16 %v535, %v531
  %v588 = vpack.c.b16 %v536, %v532
  %v589 = vpack.c.b16 %v537, %v533
  %v590 = vpack.c.b16 %v542, %v538
  %v591 = vpack.c.b16 %v543, %v539
  %v592 = vpack.c.b16 %v544, %v540
  %v593 = vpack.c.b16 %v545, %v541
  %v594 = vpack.c.b16 %v550, %v546
  %v595 = vpack.c.b16 %v551, %v547
  %v596 = vpack.c.b16 %v552, %v548
  %v597 = vpack.c.b16 %v553, %v549
  %v598 = vpack.c.b16 %v558, %v554
  %v599 = vpack.c.b16 %v559, %v555
  %v600 = vpack.c.b16 %v560, %v556
  %v601 = vpack.c.b16 %v561, %v557
  %v602 = vpack.c.b16 %v566, %v562
  %v603 = vpack.c.b16 %v567, %v563
  %v604 = vpack.c.b16 %v568, %v564
  %v605 = vpack.c.b16 %v569, %v565
  %v606 = vpack.c.b16 %v574, %v570
  %v607 = vpack.c.b16 %v575, %v571
  %v608 = vpack.c.b16 %v576, %v572
  %v609 = vpack.c.b16 %v577, %v573
  %642 = vmatprep.subr.bf16.mxu0 %v607
  %643 = vmatpush1.bf16.msra.mxu0 %v606
  %644 = vmatprep.subr.bf16.mxu0 %v603
  %645 = vmatpush1.bf16.msra.mxu0 %v602
  %646 = vmatprep.subr.bf16.mxu0 %v599
  %647 = vmatpush1.bf16.msra.mxu0 %v598
  %648 = vmatprep.subr.bf16.mxu0 %v595
  %649 = vmatpush1.bf16.msra.mxu0 %v594
  %650 = vmatprep.subr.bf16.mxu0 %v591
  %651 = vmatpush1.bf16.msra.mxu0 %v590
  %652 = vmatprep.subr.bf16.mxu0 %v587
  %653 = vmatpush1.bf16.msra.mxu0 %v586
  %654 = vmatprep.subr.bf16.mxu0 %v583
  %655 = vmatpush1.bf16.msra.mxu0 %v582
  %656 = vmatprep.subr.bf16.mxu0 %v579
  %657 = vmatpush1.bf16.msra.mxu0 %v578
  %658 = vmatprep.subr.bf16.mxu0 0
  %659 = vmatpush2.bf16.msra.mxu0 0
  %660 = vmatprep.subr.bf16.mxu0 0
  %661 = vmatpush2.bf16.msra.mxu0 0
  %662 = vmatprep.subr.bf16.mxu0 0
  %663 = vmatpush2.bf16.msra.mxu0 0
  %664 = vmatprep.subr.bf16.mxu0 0
  %665 = vmatpush2.bf16.msra.mxu0 0
  %666 = vmatprep.subr.bf16.mxu0 0
  %667 = vmatpush2.bf16.msra.mxu0 0
  %668 = vmatprep.subr.bf16.mxu0 0
  %669 = vmatpush2.bf16.msra.mxu0 0
  %670 = vmatprep.subr.bf16.mxu0 0
  %671 = vmatpush2.bf16.msra.mxu0 0
  %672 = vmatprep.subr.bf16.mxu0 0
  %673 = vmatpush2.bf16.msra.mxu0 0
  %674 = vmatprep.mubr.bf16.mxu0 0
  %675 = vmatmul.mubr.bf16.gmra.mxu0 %v424
  %v676 = vpop.f32.mrf.mxu0
  %v677 = vadd.f32 %v465, %v676
  %v678 = vpop.f32.mrf.mxu0
  %v679 = vadd.f32 %v469, %v678
  %v680 = vpop.f32.mrf.mxu0
  %v681 = vadd.f32 %v465, %v680
  %v682 = vpop.f32.mrf.mxu0
  %v683 = vadd.f32 %v469, %v682
  %684 = vmatprep.mubr.bf16.mxu0 0
  %685 = vmatmul.mubr.bf16.gmra.mxu0 %v425
  %v686 = vpop.f32.mrf.mxu0
  %v687 = vadd.f32 %v465, %v686
  %v688 = vpop.f32.mrf.mxu0
  %v689 = vadd.f32 %v469, %v688
  %v690 = vpop.f32.mrf.mxu0
  %v691 = vadd.f32 %v465, %v690
  %v692 = vpop.f32.mrf.mxu0
  %v693 = vadd.f32 %v469, %v692
  %694 = vmatprep.mubr.bf16.mxu0 0
  %695 = vmatmul.mubr.bf16.gmra.mxu0 %v426
  %v696 = vpop.f32.mrf.mxu0
  %v697 = vadd.f32 %v465, %v696
  %v698 = vpop.f32.mrf.mxu0
  %v699 = vadd.f32 %v469, %v698
  %v700 = vpop.f32.mrf.mxu0
  %v701 = vadd.f32 %v465, %v700
  %v702 = vpop.f32.mrf.mxu0
  %v703 = vadd.f32 %v469, %v702
  %704 = vmatprep.mubr.bf16.mxu0 0
  %705 = vmatmul.mubr.bf16.gmra.mxu0 %v427
  %v706 = vpop.f32.mrf.mxu0
  %v707 = vadd.f32 %v465, %v706
  %v708 = vpop.f32.mrf.mxu0
  %v709 = vadd.f32 %v469, %v708
  %v710 = vpop.f32.mrf.mxu0
  %v711 = vadd.f32 %v465, %v710
  %v712 = vpop.f32.mrf.mxu0
  %v713 = vadd.f32 %v469, %v712
  %714 = vdwg.mxu0
  %715 = vmatprep.subr.bf16.mxu0 %v609
  %716 = vmatpush1.bf16.msra.mxu0 %v608
  %717 = vmatprep.subr.bf16.mxu0 %v605
  %718 = vmatpush1.bf16.msra.mxu0 %v604
  %719 = vmatprep.subr.bf16.mxu0 %v601
  %720 = vmatpush1.bf16.msra.mxu0 %v600
  %721 = vmatprep.subr.bf16.mxu0 %v597
  %722 = vmatpush1.bf16.msra.mxu0 %v596
  %723 = vmatprep.subr.bf16.mxu0 %v593
  %724 = vmatpush1.bf16.msra.mxu0 %v592
  %725 = vmatprep.subr.bf16.mxu0 %v589
  %726 = vmatpush1.bf16.msra.mxu0 %v588
  %727 = vmatprep.subr.bf16.mxu0 %v585
  %728 = vmatpush1.bf16.msra.mxu0 %v584
  %729 = vmatprep.subr.bf16.mxu0 %v581
  %730 = vmatpush1.bf16.msra.mxu0 %v580
  %731 = vmatprep.subr.bf16.mxu0 0
  %732 = vmatpush2.bf16.msra.mxu0 0
  %733 = vmatprep.subr.bf16.mxu0 0
  %734 = vmatpush2.bf16.msra.mxu0 0
  %735 = vmatprep.subr.bf16.mxu0 0
  %736 = vmatpush2.bf16.msra.mxu0 0
  %737 = vmatprep.subr.bf16.mxu0 0
  %738 = vmatpush2.bf16.msra.mxu0 0
  %739 = vmatprep.subr.bf16.mxu0 0
  %740 = vmatpush2.bf16.msra.mxu0 0
  %741 = vmatprep.subr.bf16.mxu0 0
  %742 = vmatpush2.bf16.msra.mxu0 0
  %743 = vmatprep.subr.bf16.mxu0 0
  %744 = vmatpush2.bf16.msra.mxu0 0
  %745 = vmatprep.subr.bf16.mxu0 0
  %746 = vmatpush2.bf16.msra.mxu0 0
  %747 = vmatprep.mubr.bf16.mxu0 0
  %748 = vmatmul.mubr.bf16.gmra.mxu0 %v424
  %v749 = vpop.f32.mrf.mxu0
  %v750 = vadd.f32 %v473, %v749
  %v751 = vpop.f32.mrf.mxu0
  %v752 = vadd.f32 %v477, %v751
  %v753 = vpop.f32.mrf.mxu0
  %v754 = vadd.f32 %v473, %v753
  %v755 = vpop.f32.mrf.mxu0
  %v756 = vadd.f32 %v477, %v755
  %757 = vmatprep.mubr.bf16.mxu0 0
  %758 = vmatmul.mubr.bf16.gmra.mxu0 %v425
  %v759 = vpop.f32.mrf.mxu0
  %v760 = vadd.f32 %v473, %v759
  %v761 = vpop.f32.mrf.mxu0
  %v762 = vadd.f32 %v477, %v761
  %v763 = vpop.f32.mrf.mxu0
  %v764 = vadd.f32 %v473, %v763
  %v765 = vpop.f32.mrf.mxu0
  %v766 = vadd.f32 %v477, %v765
  %767 = vmatprep.mubr.bf16.mxu0 0
  %768 = vmatmul.mubr.bf16.gmra.mxu0 %v426
  %v769 = vpop.f32.mrf.mxu0
  %v770 = vadd.f32 %v473, %v769
  %v771 = vpop.f32.mrf.mxu0
  %v772 = vadd.f32 %v477, %v771
  %v773 = vpop.f32.mrf.mxu0
  %v774 = vadd.f32 %v473, %v773
  %v775 = vpop.f32.mrf.mxu0
  %v776 = vadd.f32 %v477, %v775
  %777 = vmatprep.mubr.bf16.mxu0 0
  %778 = vmatmul.mubr.bf16.gmra.mxu0 %v427
  %v779 = vpop.f32.mrf.mxu0
  %v780 = vadd.f32 %v473, %v779
  %v781 = vpop.f32.mrf.mxu0
  %v782 = vadd.f32 %v477, %v781
  %v783 = vpop.f32.mrf.mxu0
  %v784 = vadd.f32 %v473, %v783
  %v785 = vpop.f32.mrf.mxu0
  %v786 = vadd.f32 %v477, %v785
  %787 = vdwg.mxu0
  %788 = vst [vmem:[#allocation3] sm:$0xff] %v677
  %789 = vst [vmem:[#allocation3 + $0x8] sm:$0xff] %v679
  %790 = vst [vmem:[#allocation3 + $0x10] sm:$0xff] %v750
  %791 = vst [vmem:[#allocation3 + $0x18] sm:$0xff] %v752
  %792 = vst [vmem:[#allocation3 + $0x20] sm:$0xff] %v681
  %793 = vst [vmem:[#allocation3 + $0x28] sm:$0xff] %v683
  %794 = vst [vmem:[#allocation3 + $0x30] sm:$0xff] %v754
  %795 = vst [vmem:[#allocation3 + $0x38] sm:$0xff] %v756
  %796 = vst [vmem:[#allocation3 + $0x40] sm:$0xff] %v687
  %797 = vst [vmem:[#allocation3 + $0x48] sm:$0xff] %v689
  %798 = vst [vmem:[#allocation3 + $0x50] sm:$0xff] %v760
  %799 = vst [vmem:[#allocation3 + $0x58] sm:$0xff] %v762
  %800 = vst [vmem:[#allocation3 + $0x60] sm:$0xff] %v691
  %801 = vst [vmem:[#allocation3 + $0x68] sm:$0xff] %v693
  %802 = vst [vmem:[#allocation3 + $0x70] sm:$0xff] %v764
  %803 = vst [vmem:[#allocation3 + $0x78] sm:$0xff] %v766
  %804 = vst [vmem:[#allocation3 + $0x80] sm:$0xff] %v697
  %805 = vst [vmem:[#allocation3 + $0x88] sm:$0xff] %v699
  %806 = vst [vmem:[#allocation3 + $0x90] sm:$0xff] %v770
  %807 = vst [vmem:[#allocation3 + $0x98] sm:$0xff] %v772
  %808 = vst [vmem:[#allocation3 + $0xa0] sm:$0xff] %v701
  %809 = vst [vmem:[#allocation3 + $0xa8] sm:$0xff] %v703
  %810 = vst [vmem:[#allocation3 + $0xb0] sm:$0xff] %v774
  %811 = vst [vmem:[#allocation3 + $0xb8] sm:$0xff] %v776
  %812 = vst [vmem:[#allocation3 + $0xc0] sm:$0xff] %v707
  %813 = vst [vmem:[#allocation3 + $0xc8] sm:$0xff] %v709
  %814 = vst [vmem:[#allocation3 + $0xd0] sm:$0xff] %v780
  %815 = vst [vmem:[#allocation3 + $0xd8] sm:$0xff] %v782
  %816 = vst [vmem:[#allocation3 + $0xe0] sm:$0xff] %v711
  %817 = vst [vmem:[#allocation3 + $0xe8] sm:$0xff] %v713
  %818 = vst [vmem:[#allocation3 + $0xf0] sm:$0xff] %v784
  %819 = vst [vmem:[#allocation3 + $0xf8] sm:$0xff] %v786
  %v820 = vld [vmem:[%s4] sm:$0xff]
  %v821 = vld [vmem:[%s4 + $0x8] sm:$0xff]
  %v822 = vld [vmem:[%s4 + $0x10] sm:$0xff]
  %v823 = vld [vmem:[%s4 + $0x18] sm:$0xff]
  %v824 = vld [vmem:[%s4 + $0x20] sm:$0xff]
  %v825 = vld [vmem:[%s4 + $0x28] sm:$0xff]
  %v826 = vld [vmem:[%s4 + $0x30] sm:$0xff]
  %v827 = vld [vmem:[%s4 + $0x38] sm:$0xff]
  %v828 = vld [vmem:[%s4 + $0x40] sm:$0xff]
  %v829 = vld [vmem:[%s4 + $0x48] sm:$0xff]
  %v830 = vld [vmem:[%s4 + $0x50] sm:$0xff]
  %v831 = vld [vmem:[%s4 + $0x58] sm:$0xff]
  %v832 = vld [vmem:[%s4 + $0x60] sm:$0xff]
  %v833 = vld [vmem:[%s4 + $0x68] sm:$0xff]
  %v834 = vld [vmem:[%s4 + $0x70] sm:$0xff]
  %v835 = vld [vmem:[%s4 + $0x78] sm:$0xff]
  %v836 = vld [vmem:[%s4 + $0x80] sm:$0xff]
  %v837 = vld [vmem:[%s4 + $0x88] sm:$0xff]
  %v838 = vld [vmem:[%s4 + $0x90] sm:$0xff]
  %v839 = vld [vmem:[%s4 + $0x98] sm:$0xff]
  %v840 = vld [vmem:[%s4 + $0xa0] sm:$0xff]
  %v841 = vld [vmem:[%s4 + $0xa8] sm:$0xff]
  %v842 = vld [vmem:[%s4 + $0xb0] sm:$0xff]
  %v843 = vld [vmem:[%s4 + $0xb8] sm:$0xff]
  %v844 = vld [vmem:[%s4 + $0xc0] sm:$0xff]
  %v845 = vld [vmem:[%s4 + $0xc8] sm:$0xff]
  %v846 = vld [vmem:[%s4 + $0xd0] sm:$0xff]
  %v847 = vld [vmem:[%s4 + $0xd8] sm:$0xff]
  %v848 = vld [vmem:[%s4 + $0xe0] sm:$0xff]
  %v849 = vld [vmem:[%s4 + $0xe8] sm:$0xff]
  %v850 = vld [vmem:[%s4 + $0xf0] sm:$0xff]
  %v851 = vld [vmem:[%s4 + $0xf8] sm:$0xff]
  %v852 = vld [vmem:[#allocation3] sm:$0xff]
  %v853 = vld [vmem:[#allocation3 + $0x8] sm:$0xff]
  %v854 = vld [vmem:[#allocation3 + $0x10] sm:$0xff]
  %v855 = vld [vmem:[#allocation3 + $0x18] sm:$0xff]
  %v888 = vunpack.c.l.b16 %v820
  %v889 = vunpack.c.h.b16 %v820
  %v890 = vunpack.c.l.b16 %v821
  %v891 = vunpack.c.h.b16 %v821
  %v892 = vunpack.c.l.b16 %v822
  %v893 = vunpack.c.h.b16 %v822
  %v894 = vunpack.c.l.b16 %v823
  %v895 = vunpack.c.h.b16 %v823
  %v896 = vunpack.c.l.b16 %v824
  %v897 = vunpack.c.h.b16 %v824
  %v898 = vunpack.c.l.b16 %v825
  %v899 = vunpack.c.h.b16 %v825
  %v900 = vunpack.c.l.b16 %v826
  %v901 = vunpack.c.h.b16 %v826
  %v902 = vunpack.c.l.b16 %v827
  %v903 = vunpack.c.h.b16 %v827
  %v904 = vunpack.c.l.b16 %v828
  %v905 = vunpack.c.h.b16 %v828
  %v906 = vunpack.c.l.b16 %v829
  %v907 = vunpack.c.h.b16 %v829
  %v908 = vunpack.c.l.b16 %v830
  %v909 = vunpack.c.h.b16 %v830
  %v910 = vunpack.c.l.b16 %v831
  %v911 = vunpack.c.h.b16 %v831
  %v912 = vunpack.c.l.b16 %v832
  %v913 = vunpack.c.h.b16 %v832
  %v914 = vunpack.c.l.b16 %v833
  %v915 = vunpack.c.h.b16 %v833
  %v916 = vunpack.c.l.b16 %v834
  %v917 = vunpack.c.h.b16 %v834
  %v918 = vunpack.c.l.b16 %v835
  %v919 = vunpack.c.h.b16 %v835
  %v920 = vunpack.c.l.b16 %v836
  %v921 = vunpack.c.h.b16 %v836
  %v922 = vunpack.c.l.b16 %v837
  %v923 = vunpack.c.h.b16 %v837
  %v924 = vunpack.c.l.b16 %v838
  %v925 = vunpack.c.h.b16 %v838
  %v926 = vunpack.c.l.b16 %v839
  %v927 = vunpack.c.h.b16 %v839
  %v928 = vunpack.c.l.b16 %v840
  %v929 = vunpack.c.h.b16 %v840
  %v930 = vunpack.c.l.b16 %v841
  %v931 = vunpack.c.h.b16 %v841
  %v932 = vunpack.c.l.b16 %v842
  %v933 = vunpack.c.h.b16 %v842
  %v934 = vunpack.c.l.b16 %v843
  %v935 = vunpack.c.h.b16 %v843
  %v936 = vunpack.c.l.b16 %v844
  %v937 = vunpack.c.h.b16 %v844
  %v938 = vunpack.c.l.b16 %v845
  %v939 = vunpack.c.h.b16 %v845
  %v940 = vunpack.c.l.b16 %v846
  %v941 = vunpack.c.h.b16 %v846
  %v942 = vunpack.c.l.b16 %v847
  %v943 = vunpack.c.h.b16 %v847
  %v944 = vunpack.c.l.b16 %v848
  %v945 = vunpack.c.h.b16 %v848
  %v946 = vunpack.c.l.b16 %v849
  %v947 = vunpack.c.h.b16 %v849
  %v948 = vunpack.c.l.b16 %v850
  %v949 = vunpack.c.h.b16 %v850
  %v950 = vunpack.c.l.b16 %v851
  %v951 = vunpack.c.h.b16 %v851
  %v952 = vpack.c.b16 %v892, %v888
  %v953 = vpack.c.b16 %v893, %v889
  %v954 = vpack.c.b16 %v894, %v890
  %v955 = vpack.c.b16 %v895, %v891
  %v956 = vpack.c.b16 %v900, %v896
  %v957 = vpack.c.b16 %v901, %v897
  %v958 = vpack.c.b16 %v902, %v898
  %v959 = vpack.c.b16 %v903, %v899
  %v960 = vpack.c.b16 %v908, %v904
  %v961 = vpack.c.b16 %v909, %v905
  %v962 = vpack.c.b16 %v910, %v906
  %v963 = vpack.c.b16 %v911, %v907
  %v964 = vpack.c.b16 %v916, %v912
  %v965 = vpack.c.b16 %v917, %v913
  %v966 = vpack.c.b16 %v918, %v914
  %v967 = vpack.c.b16 %v919, %v915
  %v968 = vpack.c.b16 %v924, %v920
  %v969 = vpack.c.b16 %v925, %v921
  %v970 = vpack.c.b16 %v926, %v922
  %v971 = vpack.c.b16 %v927, %v923
  %v972 = vpack.c.b16 %v932, %v928
  %v973 = vpack.c.b16 %v933, %v929
  %v974 = vpack.c.b16 %v934, %v930
  %v975 = vpack.c.b16 %v935, %v931
  %v976 = vpack.c.b16 %v940, %v936
  %v977 = vpack.c.b16 %v941, %v937
  %v978 = vpack.c.b16 %v942, %v938
  %v979 = vpack.c.b16 %v943, %v939
  %v980 = vpack.c.b16 %v948, %v944
  %v981 = vpack.c.b16 %v949, %v945
  %v982 = vpack.c.b16 %v950, %v946
  %v983 = vpack.c.b16 %v951, %v947
  %1016 = vmatprep.subr.bf16.mxu0 %v981
  %1017 = vmatpush1.bf16.msra.mxu0 %v980
  %1018 = vmatprep.subr.bf16.mxu0 %v977
  %1019 = vmatpush1.bf16.msra.mxu0 %v976
  %1020 = vmatprep.subr.bf16.mxu0 %v973
  %1021 = vmatpush1.bf16.msra.mxu0 %v972
  %1022 = vmatprep.subr.bf16.mxu0 %v969
  %1023 = vmatpush1.bf16.msra.mxu0 %v968
  %1024 = vmatprep.subr.bf16.mxu0 %v965
  %1025 = vmatpush1.bf16.msra.mxu0 %v964
  %1026 = vmatprep.subr.bf16.mxu0 %v961
  %1027 = vmatpush1.bf16.msra.mxu0 %v960
  %1028 = vmatprep.subr.bf16.mxu0 %v957
  %1029 = vmatpush1.bf16.msra.mxu0 %v956
  %1030 = vmatprep.subr.bf16.mxu0 %v953
  %1031 = vmatpush1.bf16.msra.mxu0 %v952
  %1032 = vmatprep.subr.bf16.mxu0 0
  %1033 = vmatpush2.bf16.msra.mxu0 0
  %1034 = vmatprep.subr.bf16.mxu0 0
  %1035 = vmatpush2.bf16.msra.mxu0 0
  %1036 = vmatprep.subr.bf16.mxu0 0
  %1037 = vmatpush2.bf16.msra.mxu0 0
  %1038 = vmatprep.subr.bf16.mxu0 0
  %1039 = vmatpush2.bf16.msra.mxu0 0
  %1040 = vmatprep.subr.bf16.mxu0 0
  %1041 = vmatpush2.bf16.msra.mxu0 0
  %1042 = vmatprep.subr.bf16.mxu0 0
  %1043 = vmatpush2.bf16.msra.mxu0 0
  %1044 = vmatprep.subr.bf16.mxu0 0
  %1045 = vmatpush2.bf16.msra.mxu0 0
  %1046 = vmatprep.subr.bf16.mxu0 0
  %1047 = vmatpush2.bf16.msra.mxu0 0
  %1048 = vmatprep.mubr.bf16.mxu0 0
  %1049 = vmatmul.mubr.bf16.gmra.mxu0 0
  %v1050 = vpop.f32.mrf.mxu0
  %v1051 = vadd.f32 0.0, %v1050
  %v1052 = vpop.f32.mrf.mxu0
  %v1053 = vadd.f32 0.0, %v1052
  %v1054 = vpop.f32.mrf.mxu0
  %v1055 = vpop.f32.mrf.mxu0
  %1056 = vdwg.mxu0
  %1057 = vmatprep.subr.bf16.mxu0 %v983
  %1058 = vmatpush1.bf16.msra.mxu0 %v982
  %1059 = vmatprep.subr.bf16.mxu0 %v979
  %1060 = vmatpush1.bf16.msra.mxu0 %v978
  %1061 = vmatprep.subr.bf16.mxu0 %v975
  %1062 = vmatpush1.bf16.msra.mxu0 %v974
  %1063 = vmatprep.subr.bf16.mxu0 %v971
  %1064 = vmatpush1.bf16.msra.mxu0 %v970
  %1065 = vmatprep.subr.bf16.mxu0 %v967
  %1066 = vmatpush1.bf16.msra.mxu0 %v966
  %1067 = vmatprep.subr.bf16.mxu0 %v963
  %1068 = vmatpush1.bf16.msra.mxu0 %v962
  %1069 = vmatprep.subr.bf16.mxu0 %v959
  %1070 = vmatpush1.bf16.msra.mxu0 %v958
  %1071 = vmatprep.subr.bf16.mxu0 %v955
  %1072 = vmatpush1.bf16.msra.mxu0 %v954
  %1073 = vmatprep.subr.bf16.mxu0 0
  %1074 = vmatpush2.bf16.msra.mxu0 0
  %1075 = vmatprep.subr.bf16.mxu0 0
  %1076 = vmatpush2.bf16.msra.mxu0 0
  %1077 = vmatprep.subr.bf16.mxu0 0
  %1078 = vmatpush2.bf16.msra.mxu0 0
  %1079 = vmatprep.subr.bf16.mxu0 0
  %1080 = vmatpush2.bf16.msra.mxu0 0
  %1081 = vmatprep.subr.bf16.mxu0 0
  %1082 = vmatpush2.bf16.msra.mxu0 0
  %1083 = vmatprep.subr.bf16.mxu0 0
  %1084 = vmatpush2.bf16.msra.mxu0 0
  %1085 = vmatprep.subr.bf16.mxu0 0
  %1086 = vmatpush2.bf16.msra.mxu0 0
  %1087 = vmatprep.subr.bf16.mxu0 0
  %1088 = vmatpush2.bf16.msra.mxu0 0
  %1089 = vmatprep.mubr.bf16.mxu0 0
  %1090 = vmatmul.mubr.bf16.gmra.mxu0 0
  %v1091 = vpop.f32.mrf.mxu0
  %v1092 = vadd.f32 0.0, %v1091
  %v1093 = vpop.f32.mrf.mxu0
  %v1094 = vadd.f32 0.0, %v1093
  %v1095 = vpop.f32.mrf.mxu0
  %v1096 = vpop.f32.mrf.mxu0
  %1097 = vdwg.mxu0
  %v1098 = vadd.f32 %v852, %v1051
  %v1099 = vadd.f32 %v853, %v1053
  %v1100 = vadd.f32 %v854, %v1092
  %v1101 = vadd.f32 %v855, %v1094
  %v1102 = vsub.f32 0.0, %v1098
  %v1103 = vmul.f32 %v1102, 1.442695
  %v1104 = vpow.pop %v1103
  %v1105 = vadd.f32 %v1104, 1.0
  %v1106 = vrcp.pop %v1105
  %v1107 = vsub.f32 0.0, %v1099
  %v1108 = vmul.f32 %v1107, 1.442695
  %v1109 = vpow.pop %v1108
  %v1110 = vadd.f32 %v1109, 1.0
  %v1111 = vrcp.pop %v1110
  %v1112 = vtanh.pop %v1100
  %v1113 = vsub.f32 0.0, %v1101
  %v1114 = vmul.f32 %v1113, 1.442695
  %v1115 = vpow.pop %v1114
  %v1116 = vadd.f32 %v1115, 1.0
  %v1117 = vrcp.pop %v1116
  %v1118 = vmul.f32 %v1111, 0.0
  %v1119 = vmul.f32 %v1106, %v1112
  %v1120 = vadd.f32 %v1118, %v1119
  %v1121 = vtanh.pop %v1120
  %v1122 = vmul.f32 %v1117, %v1121
  %1123 = vst [vmem:[#allocation4] sm:$0xff] %v1122
  %v1124 = vld [vmem:[#allocation3 + $0x20] sm:$0xff]
  %v1125 = vld [vmem:[#allocation3 + $0x28] sm:$0xff]
  %v1126 = vld [vmem:[#allocation3 + $0x30] sm:$0xff]
  %v1127 = vld [vmem:[#allocation3 + $0x38] sm:$0xff]
  %v1128 = vpack.c.bf16 %v1122, %v1122
  %1129 = vmatprep.subr.bf16.mxu0 %v981
  %1130 = vmatpush1.bf16.msra.mxu0 %v980
  %1131 = vmatprep.subr.bf16.mxu0 %v977
  %1132 = vmatpush1.bf16.msra.mxu0 %v976
  %1133 = vmatprep.subr.bf16.mxu0 %v973
  %1134 = vmatpush1.bf16.msra.mxu0 %v972
  %1135 = vmatprep.subr.bf16.mxu0 %v969
  %1136 = vmatpush1.bf16.msra.mxu0 %v968
  %1137 = vmatprep.subr.bf16.mxu0 %v965
  %1138 = vmatpush1.bf16.msra.mxu0 %v964
  %1139 = vmatprep.subr.bf16.mxu0 %v961
  %1140 = vmatpush1.bf16.msra.mxu0 %v960
  %1141 = vmatprep.subr.bf16.mxu0 %v957
  %1142 = vmatpush1.bf16.msra.mxu0 %v956
  %1143 = vmatprep.subr.bf16.mxu0 %v953
  %1144 = vmatpush1.bf16.msra.mxu0 %v952
  %1145 = vmatprep.subr.bf16.mxu0 0
  %1146 = vmatpush2.bf16.msra.mxu0 0
  %1147 = vmatprep.subr.bf16.mxu0 0
  %1148 = vmatpush2.bf16.msra.mxu0 0
  %1149 = vmatprep.subr.bf16.mxu0 0
  %1150 = vmatpush2.bf16.msra.mxu0 0
  %1151 = vmatprep.subr.bf16.mxu0 0
  %1152 = vmatpush2.bf16.msra.mxu0 0
  %1153 = vmatprep.subr.bf16.mxu0 0
  %1154 = vmatpush2.bf16.msra.mxu0 0
  %1155 = vmatprep.subr.bf16.mxu0 0
  %1156 = vmatpush2.bf16.msra.mxu0 0
  %1157 = vmatprep.subr.bf16.mxu0 0
  %1158 = vmatpush2.bf16.msra.mxu0 0
  %1159 = vmatprep.subr.bf16.mxu0 0
  %1160 = vmatpush2.bf16.msra.mxu0 0
  %1161 = vmatprep.mubr.bf16.mxu0 0
  %1162 = vmatmul.mubr.bf16.gmra.mxu0 %v1128
  %v1163 = vpop.f32.mrf.mxu0
  %v1164 = vadd.f32 0.0, %v1163
  %v1165 = vpop.f32.mrf.mxu0
  %v1166 = vadd.f32 0.0, %v1165
  %v1167 = vpop.f32.mrf.mxu0
  %v1168 = vpop.f32.mrf.mxu0
  %1169 = vdwg.mxu0
  %1170 = vmatprep.subr.bf16.mxu0 %v983
  %1171 = vmatpush1.bf16.msra.mxu0 %v982
  %1172 = vmatprep.subr.bf16.mxu0 %v979
  %1173 = vmatpush1.bf16.msra.mxu0 %v978
  %1174 = vmatprep.subr.bf16.mxu0 %v975
  %1175 = vmatpush1.bf16.msra.mxu0 %v974
  %1176 = vmatprep.subr.bf16.mxu0 %v971
  %1177 = vmatpush1.bf16.msra.mxu0 %v970
  %1178 = vmatprep.subr.bf16.mxu0 %v967
  %1179 = vmatpush1.bf16.msra.mxu0 %v966
  %1180 = vmatprep.subr.bf16.mxu0 %v963
  %1181 = vmatpush1.bf16.msra.mxu0 %v962
  %1182 = vmatprep.subr.bf16.mxu0 %v959
  %1183 = vmatpush1.bf16.msra.mxu0 %v958
  %1184 = vmatprep.subr.bf16.mxu0 %v955
  %1185 = vmatpush1.bf16.msra.mxu0 %v954
  %1186 = vmatprep.subr.bf16.mxu0 0
  %1187 = vmatpush2.bf16.msra.mxu0 0
  %1188 = vmatprep.subr.bf16.mxu0 0
  %1189 = vmatpush2.bf16.msra.mxu0 0
  %1190 = vmatprep.subr.bf16.mxu0 0
  %1191 = vmatpush2.bf16.msra.mxu0 0
  %1192 = vmatprep.subr.bf16.mxu0 0
  %1193 = vmatpush2.bf16.msra.mxu0 0
  %1194 = vmatprep.subr.bf16.mxu0 0
  %1195 = vmatpush2.bf16.msra.mxu0 0
  %1196 = vmatprep.subr.bf16.mxu0 0
  %1197 = vmatpush2.bf16.msra.mxu0 0
  %1198 = vmatprep.subr.bf16.mxu0 0
  %1199 = vmatpush2.bf16.msra.mxu0 0
  %1200 = vmatprep.subr.bf16.mxu0 0
  %1201 = vmatpush2.bf16.msra.mxu0 0
  %1202 = vmatprep.mubr.bf16.mxu0 0
  %1203 = vmatmul.mubr.bf16.gmra.mxu0 %v1128
  %v1204 = vpop.f32.mrf.mxu0
  %v1205 = vadd.f32 0.0, %v1204
  %v1206 = vpop.f32.mrf.mxu0
  %v1207 = vadd.f32 0.0, %v1206
  %v1208 = vpop.f32.mrf.mxu0
  %v1209 = vpop.f32.mrf.mxu0
  %1210 = vdwg.mxu0
  %v1211 = vadd.f32 %v1124, %v1164
  %v1212 = vadd.f32 %v1125, %v1166
  %v1213 = vadd.f32 %v1126, %v1205
  %v1214 = vadd.f32 %v1127, %v1207
  %v1215 = vsub.f32 0.0, %v1211
  %v1216 = vmul.f32 %v1215, 1.442695
  %v1217 = vpow.pop %v1216
  %v1218 = vadd.f32 %v1217, 1.0
  %v1219 = vrcp.pop %v1218
  %v1220 = vsub.f32 0.0, %v1212
  %v1221 = vmul.f32 %v1220, 1.442695
  %v1222 = vpow.pop %v1221
  %v1223 = vadd.f32 %v1222, 1.0
  %v1224 = vrcp.pop %v1223
  %v1225 = vtanh.pop %v1213
  %v1226 = vsub.f32 0.0, %v1214
  %v1227 = vmul.f32 %v1226, 1.442695
  %v1228 = vpow.pop %v1227
  %v1229 = vadd.f32 %v1228, 1.0
  %v1230 = vrcp.pop %v1229
  %v1231 = vmul.f32 %v1224, %v1120
  %v1232 = vmul.f32 %v1219, %v1225
  %v1233 = vadd.f32 %v1231, %v1232
  %v1234 = vtanh.pop %v1233
  %v1235 = vmul.f32 %v1230, %v1234
  %1236 = vst [vmem:[#allocation4 + $0x8] sm:$0xff] %v1235
  %v1237 = vld [vmem:[#allocation3 + $0x40] sm:$0xff]
  %v1238 = vld [vmem:[#allocation3 + $0x48] sm:$0xff]
  %v1239 = vld [vmem:[#allocation3 + $0x50] sm:$0xff]
  %v1240 = vld [vmem:[#allocation3 + $0x58] sm:$0xff]
  %v1241 = vpack.c.bf16 %v1235, %v1235
  %1242 = vmatprep.subr.bf16.mxu0 %v981
  %1243 = vmatpush1.bf16.msra.mxu0 %v980
  %1244 = vmatprep.subr.bf16.mxu0 %v977
  %1245 = vmatpush1.bf16.msra.mxu0 %v976
  %1246 = vmatprep.subr.bf16.mxu0 %v973
  %1247 = vmatpush1.bf16.msra.mxu0 %v972
  %1248 = vmatprep.subr.bf16.mxu0 %v969
  %1249 = vmatpush1.bf16.msra.mxu0 %v968
  %1250 = vmatprep.subr.bf16.mxu0 %v965
  %1251 = vmatpush1.bf16.msra.mxu0 %v964
  %1252 = vmatprep.subr.bf16.mxu0 %v961
  %1253 = vmatpush1.bf16.msra.mxu0 %v960
  %1254 = vmatprep.subr.bf16.mxu0 %v957
  %1255 = vmatpush1.bf16.msra.mxu0 %v956
  %1256 = vmatprep.subr.bf16.mxu0 %v953
  %1257 = vmatpush1.bf16.msra.mxu0 %v952
  %1258 = vmatprep.subr.bf16.mxu0 0
  %1259 = vmatpush2.bf16.msra.mxu0 0
  %1260 = vmatprep.subr.bf16.mxu0 0
  %1261 = vmatpush2.bf16.msra.mxu0 0
  %1262 = vmatprep.subr.bf16.mxu0 0
  %1263 = vmatpush2.bf16.msra.mxu0 0
  %1264 = vmatprep.subr.bf16.mxu0 0
  %1265 = vmatpush2.bf16.msra.mxu0 0
  %1266 = vmatprep.subr.bf16.mxu0 0
  %1267 = vmatpush2.bf16.msra.mxu0 0
  %1268 = vmatprep.subr.bf16.mxu0 0
  %1269 = vmatpush2.bf16.msra.mxu0 0
  %1270 = vmatprep.subr.bf16.mxu0 0
  %1271 = vmatpush2.bf16.msra.mxu0 0
  %1272 = vmatprep.subr.bf16.mxu0 0
  %1273 = vmatpush2.bf16.msra.mxu0 0
  %1274 = vmatprep.mubr.bf16.mxu0 0
  %1275 = vmatmul.mubr.bf16.gmra.mxu0 %v1241
  %v1276 = vpop.f32.mrf.mxu0
  %v1277 = vadd.f32 0.0, %v1276
  %v1278 = vpop.f32.mrf.mxu0
  %v1279 = vadd.f32 0.0, %v1278
  %v1280 = vpop.f32.mrf.mxu0
  %v1281 = vpop.f32.mrf.mxu0
  %1282 = vdwg.mxu0
  %1283 = vmatprep.subr.bf16.mxu0 %v983
  %1284 = vmatpush1.bf16.msra.mxu0 %v982
  %1285 = vmatprep.subr.bf16.mxu0 %v979
  %1286 = vmatpush1.bf16.msra.mxu0 %v978
  %1287 = vmatprep.subr.bf16.mxu0 %v975
  %1288 = vmatpush1.bf16.msra.mxu0 %v974
  %1289 = vmatprep.subr.bf16.mxu0 %v971
  %1290 = vmatpush1.bf16.msra.mxu0 %v970
  %1291 = vmatprep.subr.bf16.mxu0 %v967
  %1292 = vmatpush1.bf16.msra.mxu0 %v966
  %1293 = vmatprep.subr.bf16.mxu0 %v963
  %1294 = vmatpush1.bf16.msra.mxu0 %v962
  %1295 = vmatprep.subr.bf16.mxu0 %v959
  %1296 = vmatpush1.bf16.msra.mxu0 %v958
  %1297 = vmatprep.subr.bf16.mxu0 %v955
  %1298 = vmatpush1.bf16.msra.mxu0 %v954
  %1299 = vmatprep.subr.bf16.mxu0 0
  %1300 = vmatpush2.bf16.msra.mxu0 0
  %1301 = vmatprep.subr.bf16.mxu0 0
  %1302 = vmatpush2.bf16.msra.mxu0 0
  %1303 = vmatprep.subr.bf16.mxu0 0
  %1304 = vmatpush2.bf16.msra.mxu0 0
  %1305 = vmatprep.subr.bf16.mxu0 0
  %1306 = vmatpush2.bf16.msra.mxu0 0
  %1307 = vmatprep.subr.bf16.mxu0 0
  %1308 = vmatpush2.bf16.msra.mxu0 0
  %1309 = vmatprep.subr.bf16.mxu0 0
  %1310 = vmatpush2.bf16.msra.mxu0 0
  %1311 = vmatprep.subr.bf16.mxu0 0
  %1312 = vmatpush2.bf16.msra.mxu0 0
  %1313 = vmatprep.subr.bf16.mxu0 0
  %1314 = vmatpush2.bf16.msra.mxu0 0
  %1315 = vmatprep.mubr.bf16.mxu0 0
  %1316 = vmatmul.mubr.bf16.gmra.mxu0 %v1241
  %v1317 = vpop.f32.mrf.mxu0
  %v1318 = vadd.f32 0.0, %v1317
  %v1319 = vpop.f32.mrf.mxu0
  %v1320 = vadd.f32 0.0, %v1319
  %v1321 = vpop.f32.mrf.mxu0
  %v1322 = vpop.f32.mrf.mxu0
  %1323 = vdwg.mxu0
  %v1324 = vadd.f32 %v1237, %v1277
  %v1325 = vadd.f32 %v1238, %v1279
  %v1326 = vadd.f32 %v1239, %v1318
  %v1327 = vadd.f32 %v1240, %v1320
  %v1328 = vsub.f32 0.0, %v1324
  %v1329 = vmul.f32 %v1328, 1.442695
  %v1330 = vpow.pop %v1329
  %v1331 = vadd.f32 %v1330, 1.0
  %v1332 = vrcp.pop %v1331
  %v1333 = vsub.f32 0.0, %v1325
  %v1334 = vmul.f32 %v1333, 1.442695
  %v1335 = vpow.pop %v1334
  %v1336 = vadd.f32 %v1335, 1.0
  %v1337 = vrcp.pop %v1336
  %v1338 = vtanh.pop %v1326
  %v1339 = vsub.f32 0.0, %v1327
  %v1340 = vmul.f32 %v1339, 1.442695
  %v1341 = vpow.pop %v1340
  %v1342 = vadd.f32 %v1341, 1.0
  %v1343 = vrcp.pop %v1342
  %v1344 = vmul.f32 %v1337, %v1233
  %v1345 = vmul.f32 %v1332, %v1338
  %v1346 = vadd.f32 %v1344, %v1345
  %v1347 = vtanh.pop %v1346
  %v1348 = vmul.f32 %v1343, %v1347
  %1349 = vst [vmem:[#allocation4 + $0x10] sm:$0xff] %v1348
  %v1350 = vld [vmem:[#allocation3 + $0x60] sm:$0xff]
  %v1351 = vld [vmem:[#allocation3 + $0x68] sm:$0xff]
  %v1352 = vld [vmem:[#allocation3 + $0x70] sm:$0xff]
  %v1353 = vld [vmem:[#allocation3 + $0x78] sm:$0xff]
  %v1354 = vpack.c.bf16 %v1348, %v1348
  %1355 = vmatprep.subr.bf16.mxu0 %v981
  %1356 = vmatpush1.bf16.msra.mxu0 %v980
  %1357 = vmatprep.subr.bf16.mxu0 %v977
  %1358 = vmatpush1.bf16.msra.mxu0 %v976
  %1359 = vmatprep.subr.bf16.mxu0 %v973
  %1360 = vmatpush1.bf16.msra.mxu0 %v972
  %1361 = vmatprep.subr.bf16.mxu0 %v969
  %1362 = vmatpush1.bf16.msra.mxu0 %v968
  %1363 = vmatprep.subr.bf16.mxu0 %v965
  %1364 = vmatpush1.bf16.msra.mxu0 %v964
  %1365 = vmatprep.subr.bf16.mxu0 %v961
  %1366 = vmatpush1.bf16.msra.mxu0 %v960
  %1367 = vmatprep.subr.bf16.mxu0 %v957
  %1368 = vmatpush1.bf16.msra.mxu0 %v956
  %1369 = vmatprep.subr.bf16.mxu0 %v953
  %1370 = vmatpush1.bf16.msra.mxu0 %v952
  %1371 = vmatprep.subr.bf16.mxu0 0
  %1372 = vmatpush2.bf16.msra.mxu0 0
  %1373 = vmatprep.subr.bf16.mxu0 0
  %1374 = vmatpush2.bf16.msra.mxu0 0
  %1375 = vmatprep.subr.bf16.mxu0 0
  %1376 = vmatpush2.bf16.msra.mxu0 0
  %1377 = vmatprep.subr.bf16.mxu0 0
  %1378 = vmatpush2.bf16.msra.mxu0 0
  %1379 = vmatprep.subr.bf16.mxu0 0
  %1380 = vmatpush2.bf16.msra.mxu0 0
  %1381 = vmatprep.subr.bf16.mxu0 0
  %1382 = vmatpush2.bf16.msra.mxu0 0
  %1383 = vmatprep.subr.bf16.mxu0 0
  %1384 = vmatpush2.bf16.msra.mxu0 0
  %1385 = vmatprep.subr.bf16.mxu0 0
  %1386 = vmatpush2.bf16.msra.mxu0 0
  %1387 = vmatprep.mubr.bf16.mxu0 0
  %1388 = vmatmul.mubr.bf16.gmra.mxu0 %v1354
  %v1389 = vpop.f32.mrf.mxu0
  %v1390 = vadd.f32 0.0, %v1389
  %v1391 = vpop.f32.mrf.mxu0
  %v1392 = vadd.f32 0.0, %v1391
  %v1393 = vpop.f32.mrf.mxu0
  %v1394 = vpop.f32.mrf.mxu0
  %1395 = vdwg.mxu0
  %1396 = vmatprep.subr.bf16.mxu0 %v983
  %1397 = vmatpush1.bf16.msra.mxu0 %v982
  %1398 = vmatprep.subr.bf16.mxu0 %v979
  %1399 = vmatpush1.bf16.msra.mxu0 %v978
  %1400 = vmatprep.subr.bf16.mxu0 %v975
  %1401 = vmatpush1.bf16.msra.mxu0 %v974
  %1402 = vmatprep.subr.bf16.mxu0 %v971
  %1403 = vmatpush1.bf16.msra.mxu0 %v970
  %1404 = vmatprep.subr.bf16.mxu0 %v967
  %1405 = vmatpush1.bf16.msra.mxu0 %v966
  %1406 = vmatprep.subr.bf16.mxu0 %v963
  %1407 = vmatpush1.bf16.msra.mxu0 %v962
  %1408 = vmatprep.subr.bf16.mxu0 %v959
  %1409 = vmatpush1.bf16.msra.mxu0 %v958
  %1410 = vmatprep.subr.bf16.mxu0 %v955
  %1411 = vmatpush1.bf16.msra.mxu0 %v954
  %1412 = vmatprep.subr.bf16.mxu0 0
  %1413 = vmatpush2.bf16.msra.mxu0 0
  %1414 = vmatprep.subr.bf16.mxu0 0
  %1415 = vmatpush2.bf16.msra.mxu0 0
  %1416 = vmatprep.subr.bf16.mxu0 0
  %1417 = vmatpush2.bf16.msra.mxu0 0
  %1418 = vmatprep.subr.bf16.mxu0 0
  %1419 = vmatpush2.bf16.msra.mxu0 0
  %1420 = vmatprep.subr.bf16.mxu0 0
  %1421 = vmatpush2.bf16.msra.mxu0 0
  %1422 = vmatprep.subr.bf16.mxu0 0
  %1423 = vmatpush2.bf16.msra.mxu0 0
  %1424 = vmatprep.subr.bf16.mxu0 0
  %1425 = vmatpush2.bf16.msra.mxu0 0
  %1426 = vmatprep.subr.bf16.mxu0 0
  %1427 = vmatpush2.bf16.msra.mxu0 0
  %1428 = vmatprep.mubr.bf16.mxu0 0
  %1429 = vmatmul.mubr.bf16.gmra.mxu0 %v1354
  %v1430 = vpop.f32.mrf.mxu0
  %v1431 = vadd.f32 0.0, %v1430
  %v1432 = vpop.f32.mrf.mxu0
  %v1433 = vadd.f32 0.0, %v1432
  %v1434 = vpop.f32.mrf.mxu0
  %v1435 = vpop.f32.mrf.mxu0
  %1436 = vdwg.mxu0
  %v1437 = vadd.f32 %v1350, %v1390
  %v1438 = vadd.f32 %v1351, %v1392
  %v1439 = vadd.f32 %v1352, %v1431
  %v1440 = vadd.f32 %v1353, %v1433
  %v1441 = vsub.f32 0.0, %v1437
  %v1442 = vmul.f32 %v1441, 1.442695
  %v1443 = vpow.pop %v1442
  %v1444 = vadd.f32 %v1443, 1.0
  %v1445 = vrcp.pop %v1444
  %v1446 = vsub.f32 0.0, %v1438
  %v1447 = vmul.f32 %v1446, 1.442695
  %v1448 = vpow.pop %v1447
  %v1449 = vadd.f32 %v1448, 1.0
  %v1450 = vrcp.pop %v1449
  %v1451 = vtanh.pop %v1439
  %v1452 = vsub.f32 0.0, %v1440
  %v1453 = vmul.f32 %v1452, 1.442695
  %v1454 = vpow.pop %v1453
  %v1455 = vadd.f32 %v1454, 1.0
  %v1456 = vrcp.pop %v1455
  %v1457 = vmul.f32 %v1450, %v1346
  %v1458 = vmul.f32 %v1445, %v1451
  %v1459 = vadd.f32 %v1457, %v1458
  %v1460 = vtanh.pop %v1459
  %v1461 = vmul.f32 %v1456, %v1460
  %1462 = vst [vmem:[#allocation4 + $0x18] sm:$0xff] %v1461
  %v1463 = vld [vmem:[#allocation3 + $0x80] sm:$0xff]
  %v1464 = vld [vmem:[#allocation3 + $0x88] sm:$0xff]
  %v1465 = vld [vmem:[#allocation3 + $0x90] sm:$0xff]
  %v1466 = vld [vmem:[#allocation3 + $0x98] sm:$0xff]
  %v1467 = vpack.c.bf16 %v1461, %v1461
  %1468 = vmatprep.subr.bf16.mxu0 %v981
  %1469 = vmatpush1.bf16.msra.mxu0 %v980
  %1470 = vmatprep.subr.bf16.mxu0 %v977
  %1471 = vmatpush1.bf16.msra.mxu0 %v976
  %1472 = vmatprep.subr.bf16.mxu0 %v973
  %1473 = vmatpush1.bf16.msra.mxu0 %v972
  %1474 = vmatprep.subr.bf16.mxu0 %v969
  %1475 = vmatpush1.bf16.msra.mxu0 %v968
  %1476 = vmatprep.subr.bf16.mxu0 %v965
  %1477 = vmatpush1.bf16.msra.mxu0 %v964
  %1478 = vmatprep.subr.bf16.mxu0 %v961
  %1479 = vmatpush1.bf16.msra.mxu0 %v960
  %1480 = vmatprep.subr.bf16.mxu0 %v957
  %1481 = vmatpush1.bf16.msra.mxu0 %v956
  %1482 = vmatprep.subr.bf16.mxu0 %v953
  %1483 = vmatpush1.bf16.msra.mxu0 %v952
  %1484 = vmatprep.subr.bf16.mxu0 0
  %1485 = vmatpush2.bf16.msra.mxu0 0
  %1486 = vmatprep.subr.bf16.mxu0 0
  %1487 = vmatpush2.bf16.msra.mxu0 0
  %1488 = vmatprep.subr.bf16.mxu0 0
  %1489 = vmatpush2.bf16.msra.mxu0 0
  %1490 = vmatprep.subr.bf16.mxu0 0
  %1491 = vmatpush2.bf16.msra.mxu0 0
  %1492 = vmatprep.subr.bf16.mxu0 0
  %1493 = vmatpush2.bf16.msra.mxu0 0
  %1494 = vmatprep.subr.bf16.mxu0 0
  %1495 = vmatpush2.bf16.msra.mxu0 0
  %1496 = vmatprep.subr.bf16.mxu0 0
  %1497 = vmatpush2.bf16.msra.mxu0 0
  %1498 = vmatprep.subr.bf16.mxu0 0
  %1499 = vmatpush2.bf16.msra.mxu0 0
  %1500 = vmatprep.mubr.bf16.mxu0 0
  %1501 = vmatmul.mubr.bf16.gmra.mxu0 %v1467
  %v1502 = vpop.f32.mrf.mxu0
  %v1503 = vadd.f32 0.0, %v1502
  %v1504 = vpop.f32.mrf.mxu0
  %v1505 = vadd.f32 0.0, %v1504
  %v1506 = vpop.f32.mrf.mxu0
  %v1507 = vpop.f32.mrf.mxu0
  %1508 = vdwg.mxu0
  %1509 = vmatprep.subr.bf16.mxu0 %v983
  %1510 = vmatpush1.bf16.msra.mxu0 %v982
  %1511 = vmatprep.subr.bf16.mxu0 %v979
  %1512 = vmatpush1.bf16.msra.mxu0 %v978
  %1513 = vmatprep.subr.bf16.mxu0 %v975
  %1514 = vmatpush1.bf16.msra.mxu0 %v974
  %1515 = vmatprep.subr.bf16.mxu0 %v971
  %1516 = vmatpush1.bf16.msra.mxu0 %v970
  %1517 = vmatprep.subr.bf16.mxu0 %v967
  %1518 = vmatpush1.bf16.msra.mxu0 %v966
  %1519 = vmatprep.subr.bf16.mxu0 %v963
  %1520 = vmatpush1.bf16.msra.mxu0 %v962
  %1521 = vmatprep.subr.bf16.mxu0 %v959
  %1522 = vmatpush1.bf16.msra.mxu0 %v958
  %1523 = vmatprep.subr.bf16.mxu0 %v955
  %1524 = vmatpush1.bf16.msra.mxu0 %v954
  %1525 = vmatprep.subr.bf16.mxu0 0
  %1526 = vmatpush2.bf16.msra.mxu0 0
  %1527 = vmatprep.subr.bf16.mxu0 0
  %1528 = vmatpush2.bf16.msra.mxu0 0
  %1529 = vmatprep.subr.bf16.mxu0 0
  %1530 = vmatpush2.bf16.msra.mxu0 0
  %1531 = vmatprep.subr.bf16.mxu0 0
  %1532 = vmatpush2.bf16.msra.mxu0 0
  %1533 = vmatprep.subr.bf16.mxu0 0
  %1534 = vmatpush2.bf16.msra.mxu0 0
  %1535 = vmatprep.subr.bf16.mxu0 0
  %1536 = vmatpush2.bf16.msra.mxu0 0
  %1537 = vmatprep.subr.bf16.mxu0 0
  %1538 = vmatpush2.bf16.msra.mxu0 0
  %1539 = vmatprep.subr.bf16.mxu0 0
  %1540 = vmatpush2.bf16.msra.mxu0 0
  %1541 = vmatprep.mubr.bf16.mxu0 0
  %1542 = vmatmul.mubr.bf16.gmra.mxu0 %v1467
  %v1543 = vpop.f32.mrf.mxu0
  %v1544 = vadd.f32 0.0, %v1543
  %v1545 = vpop.f32.mrf.mxu0
  %v1546 = vadd.f32 0.0, %v1545
  %v1547 = vpop.f32.mrf.mxu0
  %v1548 = vpop.f32.mrf.mxu0
  %1549 = vdwg.mxu0
  %v1550 = vadd.f32 %v1463, %v1503
  %v1551 = vadd.f32 %v1464, %v1505
  %v1552 = vadd.f32 %v1465, %v1544
  %v1553 = vadd.f32 %v1466, %v1546
  %v1554 = vsub.f32 0.0, %v1550
  %v1555 = vmul.f32 %v1554, 1.442695
  %v1556 = vpow.pop %v1555
  %v1557 = vadd.f32 %v1556, 1.0
  %v1558 = vrcp.pop %v1557
  %v1559 = vsub.f32 0.0, %v1551
  %v1560 = vmul.f32 %v1559, 1.442695
  %v1561 = vpow.pop %v1560
  %v1562 = vadd.f32 %v1561, 1.0
  %v1563 = vrcp.pop %v1562
  %v1564 = vtanh.pop %v1552
  %v1565 = vsub.f32 0.0, %v1553
  %v1566 = vmul.f32 %v1565, 1.442695
  %v1567 = vpow.pop %v1566
  %v1568 = vadd.f32 %v1567, 1.0
  %v1569 = vrcp.pop %v1568
  %v1570 = vmul.f32 %v1563, %v1459
  %v1571 = vmul.f32 %v1558, %v1564
  %v1572 = vadd.f32 %v1570, %v1571
  %v1573 = vtanh.pop %v1572
  %v1574 = vmul.f32 %v1569, %v1573
  %1575 = vst [vmem:[#allocation4 + $0x20] sm:$0xff] %v1574
  %v1576 = vld [vmem:[#allocation3 + $0xa0] sm:$0xff]
  %v1577 = vld [vmem:[#allocation3 + $0xa8] sm:$0xff]
  %v1578 = vld [vmem:[#allocation3 + $0xb0] sm:$0xff]
  %v1579 = vld [vmem:[#allocation3 + $0xb8] sm:$0xff]
  %v1580 = vpack.c.bf16 %v1574, %v1574
  %1581 = vmatprep.subr.bf16.mxu0 %v981
  %1582 = vmatpush1.bf16.msra.mxu0 %v980
  %1583 = vmatprep.subr.bf16.mxu0 %v977
  %1584 = vmatpush1.bf16.msra.mxu0 %v976
  %1585 = vmatprep.subr.bf16.mxu0 %v973
  %1586 = vmatpush1.bf16.msra.mxu0 %v972
  %1587 = vmatprep.subr.bf16.mxu0 %v969
  %1588 = vmatpush1.bf16.msra.mxu0 %v968
  %1589 = vmatprep.subr.bf16.mxu0 %v965
  %1590 = vmatpush1.bf16.msra.mxu0 %v964
  %1591 = vmatprep.subr.bf16.mxu0 %v961
  %1592 = vmatpush1.bf16.msra.mxu0 %v960
  %1593 = vmatprep.subr.bf16.mxu0 %v957
  %1594 = vmatpush1.bf16.msra.mxu0 %v956
  %1595 = vmatprep.subr.bf16.mxu0 %v953
  %1596 = vmatpush1.bf16.msra.mxu0 %v952
  %1597 = vmatprep.subr.bf16.mxu0 0
  %1598 = vmatpush2.bf16.msra.mxu0 0
  %1599 = vmatprep.subr.bf16.mxu0 0
  %1600 = vmatpush2.bf16.msra.mxu0 0
  %1601 = vmatprep.subr.bf16.mxu0 0
  %1602 = vmatpush2.bf16.msra.mxu0 0
  %1603 = vmatprep.subr.bf16.mxu0 0
  %1604 = vmatpush2.bf16.msra.mxu0 0
  %1605 = vmatprep.subr.bf16.mxu0 0
  %1606 = vmatpush2.bf16.msra.mxu0 0
  %1607 = vmatprep.subr.bf16.mxu0 0
  %1608 = vmatpush2.bf16.msra.mxu0 0
  %1609 = vmatprep.subr.bf16.mxu0 0
  %1610 = vmatpush2.bf16.msra.mxu0 0
  %1611 = vmatprep.subr.bf16.mxu0 0
  %1612 = vmatpush2.bf16.msra.mxu0 0
  %1613 = vmatprep.mubr.bf16.mxu0 0
  %1614 = vmatmul.mubr.bf16.gmra.mxu0 %v1580
  %v1615 = vpop.f32.mrf.mxu0
  %v1616 = vadd.f32 0.0, %v1615
  %v1617 = vpop.f32.mrf.mxu0
  %v1618 = vadd.f32 0.0, %v1617
  %v1619 = vpop.f32.mrf.mxu0
  %v1620 = vpop.f32.mrf.mxu0
  %1621 = vdwg.mxu0
  %1622 = vmatprep.subr.bf16.mxu0 %v983
  %1623 = vmatpush1.bf16.msra.mxu0 %v982
  %1624 = vmatprep.subr.bf16.mxu0 %v979
  %1625 = vmatpush1.bf16.msra.mxu0 %v978
  %1626 = vmatprep.subr.bf16.mxu0 %v975
  %1627 = vmatpush1.bf16.msra.mxu0 %v974
  %1628 = vmatprep.subr.bf16.mxu0 %v971
  %1629 = vmatpush1.bf16.msra.mxu0 %v970
  %1630 = vmatprep.subr.bf16.mxu0 %v967
  %1631 = vmatpush1.bf16.msra.mxu0 %v966
  %1632 = vmatprep.subr.bf16.mxu0 %v963
  %1633 = vmatpush1.bf16.msra.mxu0 %v962
  %1634 = vmatprep.subr.bf16.mxu0 %v959
  %1635 = vmatpush1.bf16.msra.mxu0 %v958
  %1636 = vmatprep.subr.bf16.mxu0 %v955
  %1637 = vmatpush1.bf16.msra.mxu0 %v954
  %1638 = vmatprep.subr.bf16.mxu0 0
  %1639 = vmatpush2.bf16.msra.mxu0 0
  %1640 = vmatprep.subr.bf16.mxu0 0
  %1641 = vmatpush2.bf16.msra.mxu0 0
  %1642 = vmatprep.subr.bf16.mxu0 0
  %1643 = vmatpush2.bf16.msra.mxu0 0
  %1644 = vmatprep.subr.bf16.mxu0 0
  %1645 = vmatpush2.bf16.msra.mxu0 0
  %1646 = vmatprep.subr.bf16.mxu0 0
  %1647 = vmatpush2.bf16.msra.mxu0 0
  %1648 = vmatprep.subr.bf16.mxu0 0
  %1649 = vmatpush2.bf16.msra.mxu0 0
  %1650 = vmatprep.subr.bf16.mxu0 0
  %1651 = vmatpush2.bf16.msra.mxu0 0
  %1652 = vmatprep.subr.bf16.mxu0 0
  %1653 = vmatpush2.bf16.msra.mxu0 0
  %1654 = vmatprep.mubr.bf16.mxu0 0
  %1655 = vmatmul.mubr.bf16.gmra.mxu0 %v1580
  %v1656 = vpop.f32.mrf.mxu0
  %v1657 = vadd.f32 0.0, %v1656
  %v1658 = vpop.f32.mrf.mxu0
  %v1659 = vadd.f32 0.0, %v1658
  %v1660 = vpop.f32.mrf.mxu0
  %v1661 = vpop.f32.mrf.mxu0
  %1662 = vdwg.mxu0
  %v1663 = vadd.f32 %v1576, %v1616
  %v1664 = vadd.f32 %v1577, %v1618
  %v1665 = vadd.f32 %v1578, %v1657
  %v1666 = vadd.f32 %v1579, %v1659
  %v1667 = vsub.f32 0.0, %v1663
  %v1668 = vmul.f32 %v1667, 1.442695
  %v1669 = vpow.pop %v1668
  %v1670 = vadd.f32 %v1669, 1.0
  %v1671 = vrcp.pop %v1670
  %v1672 = vsub.f32 0.0, %v1664
  %v1673 = vmul.f32 %v1672, 1.442695
  %v1674 = vpow.pop %v1673
  %v1675 = vadd.f32 %v1674, 1.0
  %v1676 = vrcp.pop %v1675
  %v1677 = vtanh.pop %v1665
  %v1678 = vsub.f32 0.0, %v1666
  %v1679 = vmul.f32 %v1678, 1.442695
  %v1680 = vpow.pop %v1679
  %v1681 = vadd.f32 %v1680, 1.0
  %v1682 = vrcp.pop %v1681
  %v1683 = vmul.f32 %v1676, %v1572
  %v1684 = vmul.f32 %v1671, %v1677
  %v1685 = vadd.f32 %v1683, %v1684
  %v1686 = vtanh.pop %v1685
  %v1687 = vmul.f32 %v1682, %v1686
  %1688 = vst [vmem:[#allocation4 + $0x28] sm:$0xff] %v1687
  %v1689 = vld [vmem:[#allocation3 + $0xc0] sm:$0xff]
  %v1690 = vld [vmem:[#allocation3 + $0xc8] sm:$0xff]
  %v1691 = vld [vmem:[#allocation3 + $0xd0] sm:$0xff]
  %v1692 = vld [vmem:[#allocation3 + $0xd8] sm:$0xff]
  %v1693 = vpack.c.bf16 %v1687, %v1687
  %1694 = vmatprep.subr.bf16.mxu0 %v981
  %1695 = vmatpush1.bf16.msra.mxu0 %v980
  %1696 = vmatprep.subr.bf16.mxu0 %v977
  %1697 = vmatpush1.bf16.msra.mxu0 %v976
  %1698 = vmatprep.subr.bf16.mxu0 %v973
  %1699 = vmatpush1.bf16.msra.mxu0 %v972
  %1700 = vmatprep.subr.bf16.mxu0 %v969
  %1701 = vmatpush1.bf16.msra.mxu0 %v968
  %1702 = vmatprep.subr.bf16.mxu0 %v965
  %1703 = vmatpush1.bf16.msra.mxu0 %v964
  %1704 = vmatprep.subr.bf16.mxu0 %v961
  %1705 = vmatpush1.bf16.msra.mxu0 %v960
  %1706 = vmatprep.subr.bf16.mxu0 %v957
  %1707 = vmatpush1.bf16.msra.mxu0 %v956
  %1708 = vmatprep.subr.bf16.mxu0 %v953
  %1709 = vmatpush1.bf16.msra.mxu0 %v952
  %1710 = vmatprep.subr.bf16.mxu0 0
  %1711 = vmatpush2.bf16.msra.mxu0 0
  %1712 = vmatprep.subr.bf16.mxu0 0
  %1713 = vmatpush2.bf16.msra.mxu0 0
  %1714 = vmatprep.subr.bf16.mxu0 0
  %1715 = vmatpush2.bf16.msra.mxu0 0
  %1716 = vmatprep.subr.bf16.mxu0 0
  %1717 = vmatpush2.bf16.msra.mxu0 0
  %1718 = vmatprep.subr.bf16.mxu0 0
  %1719 = vmatpush2.bf16.msra.mxu0 0
  %1720 = vmatprep.subr.bf16.mxu0 0
  %1721 = vmatpush2.bf16.msra.mxu0 0
  %1722 = vmatprep.subr.bf16.mxu0 0
  %1723 = vmatpush2.bf16.msra.mxu0 0
  %1724 = vmatprep.subr.bf16.mxu0 0
  %1725 = vmatpush2.bf16.msra.mxu0 0
  %1726 = vmatprep.mubr.bf16.mxu0 0
  %1727 = vmatmul.mubr.bf16.gmra.mxu0 %v1693
  %v1728 = vpop.f32.mrf.mxu0
  %v1729 = vadd.f32 0.0, %v1728
  %v1730 = vpop.f32.mrf.mxu0
  %v1731 = vadd.f32 0.0, %v1730
  %v1732 = vpop.f32.mrf.mxu0
  %v1733 = vpop.f32.mrf.mxu0
  %1734 = vdwg.mxu0
  %1735 = vmatprep.subr.bf16.mxu0 %v983
  %1736 = vmatpush1.bf16.msra.mxu0 %v982
  %1737 = vmatprep.subr.bf16.mxu0 %v979
  %1738 = vmatpush1.bf16.msra.mxu0 %v978
  %1739 = vmatprep.subr.bf16.mxu0 %v975
  %1740 = vmatpush1.bf16.msra.mxu0 %v974
  %1741 = vmatprep.subr.bf16.mxu0 %v971
  %1742 = vmatpush1.bf16.msra.mxu0 %v970
  %1743 = vmatprep.subr.bf16.mxu0 %v967
  %1744 = vmatpush1.bf16.msra.mxu0 %v966
  %1745 = vmatprep.subr.bf16.mxu0 %v963
  %1746 = vmatpush1.bf16.msra.mxu0 %v962
  %1747 = vmatprep.subr.bf16.mxu0 %v959
  %1748 = vmatpush1.bf16.msra.mxu0 %v958
  %1749 = vmatprep.subr.bf16.mxu0 %v955
  %1750 = vmatpush1.bf16.msra.mxu0 %v954
  %1751 = vmatprep.subr.bf16.mxu0 0
  %1752 = vmatpush2.bf16.msra.mxu0 0
  %1753 = vmatprep.subr.bf16.mxu0 0
  %1754 = vmatpush2.bf16.msra.mxu0 0
  %1755 = vmatprep.subr.bf16.mxu0 0
  %1756 = vmatpush2.bf16.msra.mxu0 0
  %1757 = vmatprep.subr.bf16.mxu0 0
  %1758 = vmatpush2.bf16.msra.mxu0 0
  %1759 = vmatprep.subr.bf16.mxu0 0
  %1760 = vmatpush2.bf16.msra.mxu0 0
  %1761 = vmatprep.subr.bf16.mxu0 0
  %1762 = vmatpush2.bf16.msra.mxu0 0
  %1763 = vmatprep.subr.bf16.mxu0 0
  %1764 = vmatpush2.bf16.msra.mxu0 0
  %1765 = vmatprep.subr.bf16.mxu0 0
  %1766 = vmatpush2.bf16.msra.mxu0 0
  %1767 = vmatprep.mubr.bf16.mxu0 0
  %1768 = vmatmul.mubr.bf16.gmra.mxu0 %v1693
  %v1769 = vpop.f32.mrf.mxu0
  %v1770 = vadd.f32 0.0, %v1769
  %v1771 = vpop.f32.mrf.mxu0
  %v1772 = vadd.f32 0.0, %v1771
  %v1773 = vpop.f32.mrf.mxu0
  %v1774 = vpop.f32.mrf.mxu0
  %1775 = vdwg.mxu0
  %v1776 = vadd.f32 %v1689, %v1729
  %v1777 = vadd.f32 %v1690, %v1731
  %v1778 = vadd.f32 %v1691, %v1770
  %v1779 = vadd.f32 %v1692, %v1772
  %v1780 = vsub.f32 0.0, %v1776
  %v1781 = vmul.f32 %v1780, 1.442695
  %v1782 = vpow.pop %v1781
  %v1783 = vadd.f32 %v1782, 1.0
  %v1784 = vrcp.pop %v1783
  %v1785 = vsub.f32 0.0, %v1777
  %v1786 = vmul.f32 %v1785, 1.442695
  %v1787 = vpow.pop %v1786
  %v1788 = vadd.f32 %v1787, 1.0
  %v1789 = vrcp.pop %v1788
  %v1790 = vtanh.pop %v1778
  %v1791 = vsub.f32 0.0, %v1779
  %v1792 = vmul.f32 %v1791, 1.442695
  %v1793 = vpow.pop %v1792
  %v1794 = vadd.f32 %v1793, 1.0
  %v1795 = vrcp.pop %v1794
  %v1796 = vmul.f32 %v1789, %v1685
  %v1797 = vmul.f32 %v1784, %v1790
  %v1798 = vadd.f32 %v1796, %v1797
  %v1799 = vtanh.pop %v1798
  %v1800 = vmul.f32 %v1795, %v1799
  %1801 = vst [vmem:[#allocation4 + $0x30] sm:$0xff] %v1800
  %v1802 = vld [vmem:[#allocation3 + $0xe0] sm:$0xff]
  %v1803 = vld [vmem:[#allocation3 + $0xe8] sm:$0xff]
  %v1804 = vld [vmem:[#allocation3 + $0xf0] sm:$0xff]
  %v1805 = vld [vmem:[#allocation3 + $0xf8] sm:$0xff]
  %v1806 = vpack.c.bf16 %v1800, %v1800
  %1807 = vmatprep.subr.bf16.mxu0 %v981
  %1808 = vmatpush1.bf16.msra.mxu0 %v980
  %1809 = vmatprep.subr.bf16.mxu0 %v977
  %1810 = vmatpush1.bf16.msra.mxu0 %v976
  %1811 = vmatprep.subr.bf16.mxu0 %v973
  %1812 = vmatpush1.bf16.msra.mxu0 %v972
  %1813 = vmatprep.subr.bf16.mxu0 %v969
  %1814 = vmatpush1.bf16.msra.mxu0 %v968
  %1815 = vmatprep.subr.bf16.mxu0 %v965
  %1816 = vmatpush1.bf16.msra.mxu0 %v964
  %1817 = vmatprep.subr.bf16.mxu0 %v961
  %1818 = vmatpush1.bf16.msra.mxu0 %v960
  %1819 = vmatprep.subr.bf16.mxu0 %v957
  %1820 = vmatpush1.bf16.msra.mxu0 %v956
  %1821 = vmatprep.subr.bf16.mxu0 %v953
  %1822 = vmatpush1.bf16.msra.mxu0 %v952
  %1823 = vmatprep.subr.bf16.mxu0 0
  %1824 = vmatpush2.bf16.msra.mxu0 0
  %1825 = vmatprep.subr.bf16.mxu0 0
  %1826 = vmatpush2.bf16.msra.mxu0 0
  %1827 = vmatprep.subr.bf16.mxu0 0
  %1828 = vmatpush2.bf16.msra.mxu0 0
  %1829 = vmatprep.subr.bf16.mxu0 0
  %1830 = vmatpush2.bf16.msra.mxu0 0
  %1831 = vmatprep.subr.bf16.mxu0 0
  %1832 = vmatpush2.bf16.msra.mxu0 0
  %1833 = vmatprep.subr.bf16.mxu0 0
  %1834 = vmatpush2.bf16.msra.mxu0 0
  %1835 = vmatprep.subr.bf16.mxu0 0
  %1836 = vmatpush2.bf16.msra.mxu0 0
  %1837 = vmatprep.subr.bf16.mxu0 0
  %1838 = vmatpush2.bf16.msra.mxu0 0
  %1839 = vmatprep.mubr.bf16.mxu0 0
  %1840 = vmatmul.mubr.bf16.gmra.mxu0 %v1806
  %v1841 = vpop.f32.mrf.mxu0
  %v1842 = vadd.f32 0.0, %v1841
  %v1843 = vpop.f32.mrf.mxu0
  %v1844 = vadd.f32 0.0, %v1843
  %v1845 = vpop.f32.mrf.mxu0
  %v1846 = vpop.f32.mrf.mxu0
  %1847 = vdwg.mxu0
  %1848 = vmatprep.subr.bf16.mxu0 %v983
  %1849 = vmatpush1.bf16.msra.mxu0 %v982
  %1850 = vmatprep.subr.bf16.mxu0 %v979
  %1851 = vmatpush1.bf16.msra.mxu0 %v978
  %1852 = vmatprep.subr.bf16.mxu0 %v975
  %1853 = vmatpush1.bf16.msra.mxu0 %v974
  %1854 = vmatprep.subr.bf16.mxu0 %v971
  %1855 = vmatpush1.bf16.msra.mxu0 %v970
  %1856 = vmatprep.subr.bf16.mxu0 %v967
  %1857 = vmatpush1.bf16.msra.mxu0 %v966
  %1858 = vmatprep.subr.bf16.mxu0 %v963
  %1859 = vmatpush1.bf16.msra.mxu0 %v962
  %1860 = vmatprep.subr.bf16.mxu0 %v959
  %1861 = vmatpush1.bf16.msra.mxu0 %v958
  %1862 = vmatprep.subr.bf16.mxu0 %v955
  %1863 = vmatpush1.bf16.msra.mxu0 %v954
  %1864 = vmatprep.subr.bf16.mxu0 0
  %1865 = vmatpush2.bf16.msra.mxu0 0
  %1866 = vmatprep.subr.bf16.mxu0 0
  %1867 = vmatpush2.bf16.msra.mxu0 0
  %1868 = vmatprep.subr.bf16.mxu0 0
  %1869 = vmatpush2.bf16.msra.mxu0 0
  %1870 = vmatprep.subr.bf16.mxu0 0
  %1871 = vmatpush2.bf16.msra.mxu0 0
  %1872 = vmatprep.subr.bf16.mxu0 0
  %1873 = vmatpush2.bf16.msra.mxu0 0
  %1874 = vmatprep.subr.bf16.mxu0 0
  %1875 = vmatpush2.bf16.msra.mxu0 0
  %1876 = vmatprep.subr.bf16.mxu0 0
  %1877 = vmatpush2.bf16.msra.mxu0 0
  %1878 = vmatprep.subr.bf16.mxu0 0
  %1879 = vmatpush2.bf16.msra.mxu0 0
  %1880 = vmatprep.mubr.bf16.mxu0 0
  %1881 = vmatmul.mubr.bf16.gmra.mxu0 %v1806
  %v1882 = vpop.f32.mrf.mxu0
  %v1883 = vadd.f32 0.0, %v1882
  %v1884 = vpop.f32.mrf.mxu0
  %v1885 = vadd.f32 0.0, %v1884
  %v1886 = vpop.f32.mrf.mxu0
  %v1887 = vpop.f32.mrf.mxu0
  %1888 = vdwg.mxu0
  %v1889 = vadd.f32 %v1802, %v1842
  %v1890 = vadd.f32 %v1803, %v1844
  %v1891 = vadd.f32 %v1804, %v1883
  %v1892 = vadd.f32 %v1805, %v1885
  %v1893 = vsub.f32 0.0, %v1889
  %v1894 = vmul.f32 %v1893, 1.442695
  %v1895 = vpow.pop %v1894
  %v1896 = vadd.f32 %v1895, 1.0
  %v1897 = vrcp.pop %v1896
  %v1898 = vsub.f32 0.0, %v1890
  %v1899 = vmul.f32 %v1898, 1.442695
  %v1900 = vpow.pop %v1899
  %v1901 = vadd.f32 %v1900, 1.0
  %v1902 = vrcp.pop %v1901
  %v1903 = vtanh.pop %v1891
  %v1904 = vsub.f32 0.0, %v1892
  %v1905 = vmul.f32 %v1904, 1.442695
  %v1906 = vpow.pop %v1905
  %v1907 = vadd.f32 %v1906, 1.0
  %v1908 = vrcp.pop %v1907
  %v1909 = vmul.f32 %v1902, %v1798
  %v1910 = vmul.f32 %v1897, %v1903
  %v1911 = vadd.f32 %v1909, %v1910
  %v1912 = vtanh.pop %v1911
  %v1913 = vmul.f32 %v1908, %v1912
  %1914 = vst [vmem:[#allocation4 + $0x38] sm:$0xff] %v1913
  %v1915 = vld [vmem:[#allocation4] sm:$0xff]
  %v1916 = vld [vmem:[#allocation4 + $0x8] sm:$0xff]
  %v1917 = vld [vmem:[#allocation4 + $0x10] sm:$0xff]
  %v1918 = vld [vmem:[#allocation4 + $0x18] sm:$0xff]
  %v1919 = vld [vmem:[#allocation4 + $0x20] sm:$0xff]
  %v1920 = vld [vmem:[#allocation4 + $0x28] sm:$0xff]
  %v1921 = vld [vmem:[#allocation4 + $0x30] sm:$0xff]
  %v1922 = vld [vmem:[#allocation4 + $0x38] sm:$0xff]
  %v1923 = vpack.c.bf16 %v1916, %v1915
  %v1924 = vpack.c.bf16 %v1918, %v1917
  %v1925 = vpack.c.bf16 %v1920, %v1919
  %v1926 = vpack.c.bf16 %v1922, %v1921
  %v1927 = vld [vmem:[%s6] sm:$0xff]
  %v1928 = vld [vmem:[%s6 + $0x8] sm:$0xff]
  %v1929 = vld [vmem:[%s6 + $0x10] sm:$0xff]
  %v1930 = vld [vmem:[%s6 + $0x18] sm:$0xff]
  %v1931 = vld [vmem:[%s6 + $0x20] sm:$0xff]
  %v1932 = vld [vmem:[%s6 + $0x28] sm:$0xff]
  %v1933 = vld [vmem:[%s6 + $0x30] sm:$0xff]
  %v1934 = vld [vmem:[%s6 + $0x38] sm:$0xff]
  %v1935 = vld [vmem:[%s6 + $0x40] sm:$0xff]
  %v1936 = vld [vmem:[%s6 + $0x48] sm:$0xff]
  %v1937 = vld [vmem:[%s6 + $0x50] sm:$0xff]
  %v1938 = vld [vmem:[%s6 + $0x58] sm:$0xff]
  %v1939 = vld [vmem:[%s6 + $0x60] sm:$0xff]
  %v1940 = vld [vmem:[%s6 + $0x68] sm:$0xff]
  %v1941 = vld [vmem:[%s6 + $0x70] sm:$0xff]
  %v1942 = vld [vmem:[%s6 + $0x78] sm:$0xff]
  %v1943 = vld [vmem:[%s6 + $0x80] sm:$0xff]
  %v1944 = vld [vmem:[%s6 + $0x88] sm:$0xff]
  %v1945 = vld [vmem:[%s6 + $0x90] sm:$0xff]
  %v1946 = vld [vmem:[%s6 + $0x98] sm:$0xff]
  %v1947 = vld [vmem:[%s6 + $0xa0] sm:$0xff]
  %v1948 = vld [vmem:[%s6 + $0xa8] sm:$0xff]
  %v1949 = vld [vmem:[%s6 + $0xb0] sm:$0xff]
  %v1950 = vld [vmem:[%s6 + $0xb8] sm:$0xff]
  %v1951 = vld [vmem:[%s6 + $0xc0] sm:$0xff]
  %v1952 = vld [vmem:[%s6 + $0xc8] sm:$0xff]
  %v1953 = vld [vmem:[%s6 + $0xd0] sm:$0xff]
  %v1954 = vld [vmem:[%s6 + $0xd8] sm:$0xff]
  %v1955 = vld [vmem:[%s6 + $0xe0] sm:$0xff]
  %v1956 = vld [vmem:[%s6 + $0xe8] sm:$0xff]
  %v1957 = vld [vmem:[%s6 + $0xf0] sm:$0xff]
  %v1958 = vld [vmem:[%s6 + $0xf8] sm:$0xff]
  %v1959 = vld [vmem:[%s8] sm:$0xf]
  %v1961 = vlaneseq
  %v1962 = vshrl.u32 %v1961, 7
  %v1963 = vsub.s32 0, %v1962
  %v1964 = vrot.slane %v1959, %v1963
  %v1965 = vlaneseq
  %v1966 = vshrl.u32 %v1965, 7
  %v1967 = vsub.s32 1, %v1966
  %v1968 = vrot.slane %v1959, %v1967
  %v1969 = vlaneseq
  %v1970 = vshrl.u32 %v1969, 7
  %v1971 = vsub.s32 2, %v1970
  %v1972 = vrot.slane %v1959, %v1971
  %v1973 = vlaneseq
  %v1974 = vshrl.u32 %v1973, 7
  %v1975 = vsub.s32 3, %v1974
  %v1976 = vrot.slane %v1959, %v1975
  %v2013 = vunpack.c.l.b16 %v1927
  %v2014 = vunpack.c.h.b16 %v1927
  %v2015 = vunpack.c.l.b16 %v1928
  %v2016 = vunpack.c.h.b16 %v1928
  %v2017 = vunpack.c.l.b16 %v1929
  %v2018 = vunpack.c.h.b16 %v1929
  %v2019 = vunpack.c.l.b16 %v1930
  %v2020 = vunpack.c.h.b16 %v1930
  %v2021 = vunpack.c.l.b16 %v1931
  %v2022 = vunpack.c.h.b16 %v1931
  %v2023 = vunpack.c.l.b16 %v1932
  %v2024 = vunpack.c.h.b16 %v1932
  %v2025 = vunpack.c.l.b16 %v1933
  %v2026 = vunpack.c.h.b16 %v1933
  %v2027 = vunpack.c.l.b16 %v1934
  %v2028 = vunpack.c.h.b16 %v1934
  %v2029 = vunpack.c.l.b16 %v1935
  %v2030 = vunpack.c.h.b16 %v1935
  %v2031 = vunpack.c.l.b16 %v1936
  %v2032 = vunpack.c.h.b16 %v1936
  %v2033 = vunpack.c.l.b16 %v1937
  %v2034 = vunpack.c.h.b16 %v1937
  %v2035 = vunpack.c.l.b16 %v1938
  %v2036 = vunpack.c.h.b16 %v1938
  %v2037 = vunpack.c.l.b16 %v1939
  %v2038 = vunpack.c.h.b16 %v1939
  %v2039 = vunpack.c.l.b16 %v1940
  %v2040 = vunpack.c.h.b16 %v1940
  %v2041 = vunpack.c.l.b16 %v1941
  %v2042 = vunpack.c.h.b16 %v1941
  %v2043 = vunpack.c.l.b16 %v1942
  %v2044 = vunpack.c.h.b16 %v1942
  %v2045 = vunpack.c.l.b16 %v1943
  %v2046 = vunpack.c.h.b16 %v1943
  %v2047 = vunpack.c.l.b16 %v1944
  %v2048 = vunpack.c.h.b16 %v1944
  %v2049 = vunpack.c.l.b16 %v1945
  %v2050 = vunpack.c.h.b16 %v1945
  %v2051 = vunpack.c.l.b16 %v1946
  %v2052 = vunpack.c.h.b16 %v1946
  %v2053 = vunpack.c.l.b16 %v1947
  %v2054 = vunpack.c.h.b16 %v1947
  %v2055 = vunpack.c.l.b16 %v1948
  %v2056 = vunpack.c.h.b16 %v1948
  %v2057 = vunpack.c.l.b16 %v1949
  %v2058 = vunpack.c.h.b16 %v1949
  %v2059 = vunpack.c.l.b16 %v1950
  %v2060 = vunpack.c.h.b16 %v1950
  %v2061 = vunpack.c.l.b16 %v1951
  %v2062 = vunpack.c.h.b16 %v1951
  %v2063 = vunpack.c.l.b16 %v1952
  %v2064 = vunpack.c.h.b16 %v1952
  %v2065 = vunpack.c.l.b16 %v1953
  %v2066 = vunpack.c.h.b16 %v1953
  %v2067 = vunpack.c.l.b16 %v1954
  %v2068 = vunpack.c.h.b16 %v1954
  %v2069 = vunpack.c.l.b16 %v1955
  %v2070 = vunpack.c.h.b16 %v1955
  %v2071 = vunpack.c.l.b16 %v1956
  %v2072 = vunpack.c.h.b16 %v1956
  %v2073 = vunpack.c.l.b16 %v1957
  %v2074 = vunpack.c.h.b16 %v1957
  %v2075 = vunpack.c.l.b16 %v1958
  %v2076 = vunpack.c.h.b16 %v1958
  %v2077 = vpack.c.b16 %v2017, %v2013
  %v2078 = vpack.c.b16 %v2018, %v2014
  %v2079 = vpack.c.b16 %v2019, %v2015
  %v2080 = vpack.c.b16 %v2020, %v2016
  %v2081 = vpack.c.b16 %v2025, %v2021
  %v2082 = vpack.c.b16 %v2026, %v2022
  %v2083 = vpack.c.b16 %v2027, %v2023
  %v2084 = vpack.c.b16 %v2028, %v2024
  %v2085 = vpack.c.b16 %v2033, %v2029
  %v2086 = vpack.c.b16 %v2034, %v2030
  %v2087 = vpack.c.b16 %v2035, %v2031
  %v2088 = vpack.c.b16 %v2036, %v2032
  %v2089 = vpack.c.b16 %v2041, %v2037
  %v2090 = vpack.c.b16 %v2042, %v2038
  %v2091 = vpack.c.b16 %v2043, %v2039
  %v2092 = vpack.c.b16 %v2044, %v2040
  %v2093 = vpack.c.b16 %v2049, %v2045
  %v2094 = vpack.c.b16 %v2050, %v2046
  %v2095 = vpack.c.b16 %v2051, %v2047
  %v2096 = vpack.c.b16 %v2052, %v2048
  %v2097 = vpack.c.b16 %v2057, %v2053
  %v2098 = vpack.c.b16 %v2058, %v2054
  %v2099 = vpack.c.b16 %v2059, %v2055
  %v2100 = vpack.c.b16 %v2060, %v2056
  %v2101 = vpack.c.b16 %v2065, %v2061
  %v2102 = vpack.c.b16 %v2066, %v2062
  %v2103 = vpack.c.b16 %v2067, %v2063
  %v2104 = vpack.c.b16 %v2068, %v2064
  %v2105 = vpack.c.b16 %v2073, %v2069
  %v2106 = vpack.c.b16 %v2074, %v2070
  %v2107 = vpack.c.b16 %v2075, %v2071
  %v2108 = vpack.c.b16 %v2076, %v2072
  %2141 = vmatprep.subr.bf16.mxu0 %v2106
  %2142 = vmatpush1.bf16.msra.mxu0 %v2105
  %2143 = vmatprep.subr.bf16.mxu0 %v2102
  %2144 = vmatpush1.bf16.msra.mxu0 %v2101
  %2145 = vmatprep.subr.bf16.mxu0 %v2098
  %2146 = vmatpush1.bf16.msra.mxu0 %v2097
  %2147 = vmatprep.subr.bf16.mxu0 %v2094
  %2148 = vmatpush1.bf16.msra.mxu0 %v2093
  %2149 = vmatprep.subr.bf16.mxu0 %v2090
  %2150 = vmatpush1.bf16.msra.mxu0 %v2089
  %2151 = vmatprep.subr.bf16.mxu0 %v2086
  %2152 = vmatpush1.bf16.msra.mxu0 %v2085
  %2153 = vmatprep.subr.bf16.mxu0 %v2082
  %2154 = vmatpush1.bf16.msra.mxu0 %v2081
  %2155 = vmatprep.subr.bf16.mxu0 %v2078
  %2156 = vmatpush1.bf16.msra.mxu0 %v2077
  %2157 = vmatprep.subr.bf16.mxu0 0
  %2158 = vmatpush2.bf16.msra.mxu0 0
  %2159 = vmatprep.subr.bf16.mxu0 0
  %2160 = vmatpush2.bf16.msra.mxu0 0
  %2161 = vmatprep.subr.bf16.mxu0 0
  %2162 = vmatpush2.bf16.msra.mxu0 0
  %2163 = vmatprep.subr.bf16.mxu0 0
  %2164 = vmatpush2.bf16.msra.mxu0 0
  %2165 = vmatprep.subr.bf16.mxu0 0
  %2166 = vmatpush2.bf16.msra.mxu0 0
  %2167 = vmatprep.subr.bf16.mxu0 0
  %2168 = vmatpush2.bf16.msra.mxu0 0
  %2169 = vmatprep.subr.bf16.mxu0 0
  %2170 = vmatpush2.bf16.msra.mxu0 0
  %2171 = vmatprep.subr.bf16.mxu0 0
  %2172 = vmatpush2.bf16.msra.mxu0 0
  %2173 = vmatprep.mubr.bf16.mxu0 0
  %2174 = vmatmul.mubr.bf16.gmra.mxu0 %v1923
  %v2175 = vpop.f32.mrf.mxu0
  %v2176 = vadd.f32 %v1964, %v2175
  %v2177 = vpop.f32.mrf.mxu0
  %v2178 = vadd.f32 %v1968, %v2177
  %v2179 = vpop.f32.mrf.mxu0
  %v2180 = vadd.f32 %v1964, %v2179
  %v2181 = vpop.f32.mrf.mxu0
  %v2182 = vadd.f32 %v1968, %v2181
  %2183 = vmatprep.mubr.bf16.mxu0 0
  %2184 = vmatmul.mubr.bf16.gmra.mxu0 %v1924
  %v2185 = vpop.f32.mrf.mxu0
  %v2186 = vadd.f32 %v1964, %v2185
  %v2187 = vpop.f32.mrf.mxu0
  %v2188 = vadd.f32 %v1968, %v2187
  %v2189 = vpop.f32.mrf.mxu0
  %v2190 = vadd.f32 %v1964, %v2189
  %v2191 = vpop.f32.mrf.mxu0
  %v2192 = vadd.f32 %v1968, %v2191
  %2193 = vmatprep.mubr.bf16.mxu0 0
  %2194 = vmatmul.mubr.bf16.gmra.mxu0 %v1925
  %v2195 = vpop.f32.mrf.mxu0
  %v2196 = vadd.f32 %v1964, %v2195
  %v2197 = vpop.f32.mrf.mxu0
  %v2198 = vadd.f32 %v1968, %v2197
  %v2199 = vpop.f32.mrf.mxu0
  %v2200 = vadd.f32 %v1964, %v2199
  %v2201 = vpop.f32.mrf.mxu0
  %v2202 = vadd.f32 %v1968, %v2201
  %2203 = vmatprep.mubr.bf16.mxu0 0
  %2204 = vmatmul.mubr.bf16.gmra.mxu0 %v1926
  %v2205 = vpop.f32.mrf.mxu0
  %v2206 = vadd.f32 %v1964, %v2205
  %v2207 = vpop.f32.mrf.mxu0
  %v2208 = vadd.f32 %v1968, %v2207
  %v2209 = vpop.f32.mrf.mxu0
  %v2210 = vadd.f32 %v1964, %v2209
  %v2211 = vpop.f32.mrf.mxu0
  %v2212 = vadd.f32 %v1968, %v2211
  %2213 = vdwg.mxu0
  %2214 = vmatprep.subr.bf16.mxu0 %v2108
  %2215 = vmatpush1.bf16.msra.mxu0 %v2107
  %2216 = vmatprep.subr.bf16.mxu0 %v2104
  %2217 = vmatpush1.bf16.msra.mxu0 %v2103
  %2218 = vmatprep.subr.bf16.mxu0 %v2100
  %2219 = vmatpush1.bf16.msra.mxu0 %v2099
  %2220 = vmatprep.subr.bf16.mxu0 %v2096
  %2221 = vmatpush1.bf16.msra.mxu0 %v2095
  %2222 = vmatprep.subr.bf16.mxu0 %v2092
  %2223 = vmatpush1.bf16.msra.mxu0 %v2091
  %2224 = vmatprep.subr.bf16.mxu0 %v2088
  %2225 = vmatpush1.bf16.msra.mxu0 %v2087
  %2226 = vmatprep.subr.bf16.mxu0 %v2084
  %2227 = vmatpush1.bf16.msra.mxu0 %v2083
  %2228 = vmatprep.subr.bf16.mxu0 %v2080
  %2229 = vmatpush1.bf16.msra.mxu0 %v2079
  %2230 = vmatprep.subr.bf16.mxu0 0
  %2231 = vmatpush2.bf16.msra.mxu0 0
  %2232 = vmatprep.subr.bf16.mxu0 0
  %2233 = vmatpush2.bf16.msra.mxu0 0
  %2234 = vmatprep.subr.bf16.mxu0 0
  %2235 = vmatpush2.bf16.msra.mxu0 0
  %2236 = vmatprep.subr.bf16.mxu0 0
  %2237 = vmatpush2.bf16.msra.mxu0 0
  %2238 = vmatprep.subr.bf16.mxu0 0
  %2239 = vmatpush2.bf16.msra.mxu0 0
  %2240 = vmatprep.subr.bf16.mxu0 0
  %2241 = vmatpush2.bf16.msra.mxu0 0
  %2242 = vmatprep.subr.bf16.mxu0 0
  %2243 = vmatpush2.bf16.msra.mxu0 0
  %2244 = vmatprep.subr.bf16.mxu0 0
  %2245 = vmatpush2.bf16.msra.mxu0 0
  %2246 = vmatprep.mubr.bf16.mxu0 0
  %2247 = vmatmul.mubr.bf16.gmra.mxu0 %v1923
  %v2248 = vpop.f32.mrf.mxu0
  %v2249 = vadd.f32 %v1972, %v2248
  %v2250 = vpop.f32.mrf.mxu0
  %v2251 = vadd.f32 %v1976, %v2250
  %v2252 = vpop.f32.mrf.mxu0
  %v2253 = vadd.f32 %v1972, %v2252
  %v2254 = vpop.f32.mrf.mxu0
  %v2255 = vadd.f32 %v1976, %v2254
  %2256 = vmatprep.mubr.bf16.mxu0 0
  %2257 = vmatmul.mubr.bf16.gmra.mxu0 %v1924
  %v2258 = vpop.f32.mrf.mxu0
  %v2259 = vadd.f32 %v1972, %v2258
  %v2260 = vpop.f32.mrf.mxu0
  %v2261 = vadd.f32 %v1976, %v2260
  %v2262 = vpop.f32.mrf.mxu0
  %v2263 = vadd.f32 %v1972, %v2262
  %v2264 = vpop.f32.mrf.mxu0
  %v2265 = vadd.f32 %v1976, %v2264
  %2266 = vmatprep.mubr.bf16.mxu0 0
  %2267 = vmatmul.mubr.bf16.gmra.mxu0 %v1925
  %v2268 = vpop.f32.mrf.mxu0
  %v2269 = vadd.f32 %v1972, %v2268
  %v2270 = vpop.f32.mrf.mxu0
  %v2271 = vadd.f32 %v1976, %v2270
  %v2272 = vpop.f32.mrf.mxu0
  %v2273 = vadd.f32 %v1972, %v2272
  %v2274 = vpop.f32.mrf.mxu0
  %v2275 = vadd.f32 %v1976, %v2274
  %2276 = vmatprep.mubr.bf16.mxu0 0
  %2277 = vmatmul.mubr.bf16.gmra.mxu0 %v1926
  %v2278 = vpop.f32.mrf.mxu0
  %v2279 = vadd.f32 %v1972, %v2278
  %v2280 = vpop.f32.mrf.mxu0
  %v2281 = vadd.f32 %v1976, %v2280
  %v2282 = vpop.f32.mrf.mxu0
  %v2283 = vadd.f32 %v1972, %v2282
  %v2284 = vpop.f32.mrf.mxu0
  %v2285 = vadd.f32 %v1976, %v2284
  %2286 = vdwg.mxu0
  %2287 = vst [vmem:[#allocation3] sm:$0xff] %v2176
  %2288 = vst [vmem:[#allocation3 + $0x8] sm:$0xff] %v2178
  %2289 = vst [vmem:[#allocation3 + $0x10] sm:$0xff] %v2249
  %2290 = vst [vmem:[#allocation3 + $0x18] sm:$0xff] %v2251
  %2291 = vst [vmem:[#allocation3 + $0x20] sm:$0xff] %v2180
  %2292 = vst [vmem:[#allocation3 + $0x28] sm:$0xff] %v2182
  %2293 = vst [vmem:[#allocation3 + $0x30] sm:$0xff] %v2253
  %2294 = vst [vmem:[#allocation3 + $0x38] sm:$0xff] %v2255
  %2295 = vst [vmem:[#allocation3 + $0x40] sm:$0xff] %v2186
  %2296 = vst [vmem:[#allocation3 + $0x48] sm:$0xff] %v2188
  %2297 = vst [vmem:[#allocation3 + $0x50] sm:$0xff] %v2259
  %2298 = vst [vmem:[#allocation3 + $0x58] sm:$0xff] %v2261
  %2299 = vst [vmem:[#allocation3 + $0x60] sm:$0xff] %v2190
  %2300 = vst [vmem:[#allocation3 + $0x68] sm:$0xff] %v2192
  %2301 = vst [vmem:[#allocation3 + $0x70] sm:$0xff] %v2263
  %2302 = vst [vmem:[#allocation3 + $0x78] sm:$0xff] %v2265
  %2303 = vst [vmem:[#allocation3 + $0x80] sm:$0xff] %v2196
  %2304 = vst [vmem:[#allocation3 + $0x88] sm:$0xff] %v2198
  %2305 = vst [vmem:[#allocation3 + $0x90] sm:$0xff] %v2269
  %2306 = vst [vmem:[#allocation3 + $0x98] sm:$0xff] %v2271
  %2307 = vst [vmem:[#allocation3 + $0xa0] sm:$0xff] %v2200
  %2308 = vst [vmem:[#allocation3 + $0xa8] sm:$0xff] %v2202
  %2309 = vst [vmem:[#allocation3 + $0xb0] sm:$0xff] %v2273
  %2310 = vst [vmem:[#allocation3 + $0xb8] sm:$0xff] %v2275
  %2311 = vst [vmem:[#allocation3 + $0xc0] sm:$0xff] %v2206
  %2312 = vst [vmem:[#allocation3 + $0xc8] sm:$0xff] %v2208
  %2313 = vst [vmem:[#allocation3 + $0xd0] sm:$0xff] %v2279
  %2314 = vst [vmem:[#allocation3 + $0xd8] sm:$0xff] %v2281
  %2315 = vst [vmem:[#allocation3 + $0xe0] sm:$0xff] %v2210
  %2316 = vst [vmem:[#allocation3 + $0xe8] sm:$0xff] %v2212
  %2317 = vst [vmem:[#allocation3 + $0xf0] sm:$0xff] %v2283
  %2318 = vst [vmem:[#allocation3 + $0xf8] sm:$0xff] %v2285
  %v2319 = vld [vmem:[%s7] sm:$0xff]
  %v2320 = vld [vmem:[%s7 + $0x8] sm:$0xff]
  %v2321 = vld [vmem:[%s7 + $0x10] sm:$0xff]
  %v2322 = vld [vmem:[%s7 + $0x18] sm:$0xff]
  %v2323 = vld [vmem:[%s7 + $0x20] sm:$0xff]
  %v2324 = vld [vmem:[%s7 + $0x28] sm:$0xff]
  %v2325 = vld [vmem:[%s7 + $0x30] sm:$0xff]
  %v2326 = vld [vmem:[%s7 + $0x38] sm:$0xff]
  %v2327 = vld [vmem:[%s7 + $0x40] sm:$0xff]
  %v2328 = vld [vmem:[%s7 + $0x48] sm:$0xff]
  %v2329 = vld [vmem:[%s7 + $0x50] sm:$0xff]
  %v2330 = vld [vmem:[%s7 + $0x58] sm:$0xff]
  %v2331 = vld [vmem:[%s7 + $0x60] sm:$0xff]
  %v2332 = vld [vmem:[%s7 + $0x68] sm:$0xff]
  %v2333 = vld [vmem:[%s7 + $0x70] sm:$0xff]
  %v2334 = vld [vmem:[%s7 + $0x78] sm:$0xff]
  %v2335 = vld [vmem:[%s7 + $0x80] sm:$0xff]
  %v2336 = vld [vmem:[%s7 + $0x88] sm:$0xff]
  %v2337 = vld [vmem:[%s7 + $0x90] sm:$0xff]
  %v2338 = vld [vmem:[%s7 + $0x98] sm:$0xff]
  %v2339 = vld [vmem:[%s7 + $0xa0] sm:$0xff]
  %v2340 = vld [vmem:[%s7 + $0xa8] sm:$0xff]
  %v2341 = vld [vmem:[%s7 + $0xb0] sm:$0xff]
  %v2342 = vld [vmem:[%s7 + $0xb8] sm:$0xff]
  %v2343 = vld [vmem:[%s7 + $0xc0] sm:$0xff]
  %v2344 = vld [vmem:[%s7 + $0xc8] sm:$0xff]
  %v2345 = vld [vmem:[%s7 + $0xd0] sm:$0xff]
  %v2346 = vld [vmem:[%s7 + $0xd8] sm:$0xff]
  %v2347 = vld [vmem:[%s7 + $0xe0] sm:$0xff]
  %v2348 = vld [vmem:[%s7 + $0xe8] sm:$0xff]
  %v2349 = vld [vmem:[%s7 + $0xf0] sm:$0xff]
  %v2350 = vld [vmem:[%s7 + $0xf8] sm:$0xff]
  %v2351 = vld [vmem:[#allocation3] sm:$0xff]
  %v2352 = vld [vmem:[#allocation3 + $0x8] sm:$0xff]
  %v2353 = vld [vmem:[#allocation3 + $0x10] sm:$0xff]
  %v2354 = vld [vmem:[#allocation3 + $0x18] sm:$0xff]
  %v2387 = vunpack.c.l.b16 %v2319
  %v2388 = vunpack.c.h.b16 %v2319
  %v2389 = vunpack.c.l.b16 %v2320
  %v2390 = vunpack.c.h.b16 %v2320
  %v2391 = vunpack.c.l.b16 %v2321
  %v2392 = vunpack.c.h.b16 %v2321
  %v2393 = vunpack.c.l.b16 %v2322
  %v2394 = vunpack.c.h.b16 %v2322
  %v2395 = vunpack.c.l.b16 %v2323
  %v2396 = vunpack.c.h.b16 %v2323
  %v2397 = vunpack.c.l.b16 %v2324
  %v2398 = vunpack.c.h.b16 %v2324
  %v2399 = vunpack.c.l.b16 %v2325
  %v2400 = vunpack.c.h.b16 %v2325
  %v2401 = vunpack.c.l.b16 %v2326
  %v2402 = vunpack.c.h.b16 %v2326
  %v2403 = vunpack.c.l.b16 %v2327
  %v2404 = vunpack.c.h.b16 %v2327
  %v2405 = vunpack.c.l.b16 %v2328
  %v2406 = vunpack.c.h.b16 %v2328
  %v2407 = vunpack.c.l.b16 %v2329
  %v2408 = vunpack.c.h.b16 %v2329
  %v2409 = vunpack.c.l.b16 %v2330
  %v2410 = vunpack.c.h.b16 %v2330
  %v2411 = vunpack.c.l.b16 %v2331
  %v2412 = vunpack.c.h.b16 %v2331
  %v2413 = vunpack.c.l.b16 %v2332
  %v2414 = vunpack.c.h.b16 %v2332
  %v2415 = vunpack.c.l.b16 %v2333
  %v2416 = vunpack.c.h.b16 %v2333
  %v2417 = vunpack.c.l.b16 %v2334
  %v2418 = vunpack.c.h.b16 %v2334
  %v2419 = vunpack.c.l.b16 %v2335
  %v2420 = vunpack.c.h.b16 %v2335
  %v2421 = vunpack.c.l.b16 %v2336
  %v2422 = vunpack.c.h.b16 %v2336
  %v2423 = vunpack.c.l.b16 %v2337
  %v2424 = vunpack.c.h.b16 %v2337
  %v2425 = vunpack.c.l.b16 %v2338
  %v2426 = vunpack.c.h.b16 %v2338
  %v2427 = vunpack.c.l.b16 %v2339
  %v2428 = vunpack.c.h.b16 %v2339
  %v2429 = vunpack.c.l.b16 %v2340
  %v2430 = vunpack.c.h.b16 %v2340
  %v2431 = vunpack.c.l.b16 %v2341
  %v2432 = vunpack.c.h.b16 %v2341
  %v2433 = vunpack.c.l.b16 %v2342
  %v2434 = vunpack.c.h.b16 %v2342
  %v2435 = vunpack.c.l.b16 %v2343
  %v2436 = vunpack.c.h.b16 %v2343
  %v2437 = vunpack.c.l.b16 %v2344
  %v2438 = vunpack.c.h.b16 %v2344
  %v2439 = vunpack.c.l.b16 %v2345
  %v2440 = vunpack.c.h.b16 %v2345
  %v2441 = vunpack.c.l.b16 %v2346
  %v2442 = vunpack.c.h.b16 %v2346
  %v2443 = vunpack.c.l.b16 %v2347
  %v2444 = vunpack.c.h.b16 %v2347
  %v2445 = vunpack.c.l.b16 %v2348
  %v2446 = vunpack.c.h.b16 %v2348
  %v2447 = vunpack.c.l.b16 %v2349
  %v2448 = vunpack.c.h.b16 %v2349
  %v2449 = vunpack.c.l.b16 %v2350
  %v2450 = vunpack.c.h.b16 %v2350
  %v2451 = vpack.c.b16 %v2391, %v2387
  %v2452 = vpack.c.b16 %v2392, %v2388
  %v2453 = vpack.c.b16 %v2393, %v2389
  %v2454 = vpack.c.b16 %v2394, %v2390
  %v2455 = vpack.c.b16 %v2399, %v2395
  %v2456 = vpack.c.b16 %v2400, %v2396
  %v2457 = vpack.c.b16 %v2401, %v2397
  %v2458 = vpack.c.b16 %v2402, %v2398
  %v2459 = vpack.c.b16 %v2407, %v2403
  %v2460 = vpack.c.b16 %v2408, %v2404
  %v2461 = vpack.c.b16 %v2409, %v2405
  %v2462 = vpack.c.b16 %v2410, %v2406
  %v2463 = vpack.c.b16 %v2415, %v2411
  %v2464 = vpack.c.b16 %v2416, %v2412
  %v2465 = vpack.c.b16 %v2417, %v2413
  %v2466 = vpack.c.b16 %v2418, %v2414
  %v2467 = vpack.c.b16 %v2423, %v2419
  %v2468 = vpack.c.b16 %v2424, %v2420
  %v2469 = vpack.c.b16 %v2425, %v2421
  %v2470 = vpack.c.b16 %v2426, %v2422
  %v2471 = vpack.c.b16 %v2431, %v2427
  %v2472 = vpack.c.b16 %v2432, %v2428
  %v2473 = vpack.c.b16 %v2433, %v2429
  %v2474 = vpack.c.b16 %v2434, %v2430
  %v2475 = vpack.c.b16 %v2439, %v2435
  %v2476 = vpack.c.b16 %v2440, %v2436
  %v2477 = vpack.c.b16 %v2441, %v2437
  %v2478 = vpack.c.b16 %v2442, %v2438
  %v2479 = vpack.c.b16 %v2447, %v2443
  %v2480 = vpack.c.b16 %v2448, %v2444
  %v2481 = vpack.c.b16 %v2449, %v2445
  %v2482 = vpack.c.b16 %v2450, %v2446
  %2515 = vmatprep.subr.bf16.mxu0 %v2480
  %2516 = vmatpush1.bf16.msra.mxu0 %v2479
  %2517 = vmatprep.subr.bf16.mxu0 %v2476
  %2518 = vmatpush1.bf16.msra.mxu0 %v2475
  %2519 = vmatprep.subr.bf16.mxu0 %v2472
  %2520 = vmatpush1.bf16.msra.mxu0 %v2471
  %2521 = vmatprep.subr.bf16.mxu0 %v2468
  %2522 = vmatpush1.bf16.msra.mxu0 %v2467
  %2523 = vmatprep.subr.bf16.mxu0 %v2464
  %2524 = vmatpush1.bf16.msra.mxu0 %v2463
  %2525 = vmatprep.subr.bf16.mxu0 %v2460
  %2526 = vmatpush1.bf16.msra.mxu0 %v2459
  %2527 = vmatprep.subr.bf16.mxu0 %v2456
  %2528 = vmatpush1.bf16.msra.mxu0 %v2455
  %2529 = vmatprep.subr.bf16.mxu0 %v2452
  %2530 = vmatpush1.bf16.msra.mxu0 %v2451
  %2531 = vmatprep.subr.bf16.mxu0 0
  %2532 = vmatpush2.bf16.msra.mxu0 0
  %2533 = vmatprep.subr.bf16.mxu0 0
  %2534 = vmatpush2.bf16.msra.mxu0 0
  %2535 = vmatprep.subr.bf16.mxu0 0
  %2536 = vmatpush2.bf16.msra.mxu0 0
  %2537 = vmatprep.subr.bf16.mxu0 0
  %2538 = vmatpush2.bf16.msra.mxu0 0
  %2539 = vmatprep.subr.bf16.mxu0 0
  %2540 = vmatpush2.bf16.msra.mxu0 0
  %2541 = vmatprep.subr.bf16.mxu0 0
  %2542 = vmatpush2.bf16.msra.mxu0 0
  %2543 = vmatprep.subr.bf16.mxu0 0
  %2544 = vmatpush2.bf16.msra.mxu0 0
  %2545 = vmatprep.subr.bf16.mxu0 0
  %2546 = vmatpush2.bf16.msra.mxu0 0
  %2547 = vmatprep.mubr.bf16.mxu0 0
  %2548 = vmatmul.mubr.bf16.gmra.mxu0 0
  %v2549 = vpop.f32.mrf.mxu0
  %v2550 = vadd.f32 0.0, %v2549
  %v2551 = vpop.f32.mrf.mxu0
  %v2552 = vadd.f32 0.0, %v2551
  %v2553 = vpop.f32.mrf.mxu0
  %v2554 = vpop.f32.mrf.mxu0
  %2555 = vdwg.mxu0
  %2556 = vmatprep.subr.bf16.mxu0 %v2482
  %2557 = vmatpush1.bf16.msra.mxu0 %v2481
  %2558 = vmatprep.subr.bf16.mxu0 %v2478
  %2559 = vmatpush1.bf16.msra.mxu0 %v2477
  %2560 = vmatprep.subr.bf16.mxu0 %v2474
  %2561 = vmatpush1.bf16.msra.mxu0 %v2473
  %2562 = vmatprep.subr.bf16.mxu0 %v2470
  %2563 = vmatpush1.bf16.msra.mxu0 %v2469
  %2564 = vmatprep.subr.bf16.mxu0 %v2466
  %2565 = vmatpush1.bf16.msra.mxu0 %v2465
  %2566 = vmatprep.subr.bf16.mxu0 %v2462
  %2567 = vmatpush1.bf16.msra.mxu0 %v2461
  %2568 = vmatprep.subr.bf16.mxu0 %v2458
  %2569 = vmatpush1.bf16.msra.mxu0 %v2457
  %2570 = vmatprep.subr.bf16.mxu0 %v2454
  %2571 = vmatpush1.bf16.msra.mxu0 %v2453
  %2572 = vmatprep.subr.bf16.mxu0 0
  %2573 = vmatpush2.bf16.msra.mxu0 0
  %2574 = vmatprep.subr.bf16.mxu0 0
  %2575 = vmatpush2.bf16.msra.mxu0 0
  %2576 = vmatprep.subr.bf16.mxu0 0
  %2577 = vmatpush2.bf16.msra.mxu0 0
  %2578 = vmatprep.subr.bf16.mxu0 0
  %2579 = vmatpush2.bf16.msra.mxu0 0
  %2580 = vmatprep.subr.bf16.mxu0 0
  %2581 = vmatpush2.bf16.msra.mxu0 0
  %2582 = vmatprep.subr.bf16.mxu0 0
  %2583 = vmatpush2.bf16.msra.mxu0 0
  %2584 = vmatprep.subr.bf16.mxu0 0
  %2585 = vmatpush2.bf16.msra.mxu0 0
  %2586 = vmatprep.subr.bf16.mxu0 0
  %2587 = vmatpush2.bf16.msra.mxu0 0
  %2588 = vmatprep.mubr.bf16.mxu0 0
  %2589 = vmatmul.mubr.bf16.gmra.mxu0 0
  %v2590 = vpop.f32.mrf.mxu0
  %v2591 = vadd.f32 0.0, %v2590
  %v2592 = vpop.f32.mrf.mxu0
  %v2593 = vadd.f32 0.0, %v2592
  %v2594 = vpop.f32.mrf.mxu0
  %v2595 = vpop.f32.mrf.mxu0
  %2596 = vdwg.mxu0
  %v2597 = vadd.f32 %v2351, %v2550
  %v2598 = vadd.f32 %v2352, %v2552
  %v2599 = vadd.f32 %v2353, %v2591
  %v2600 = vadd.f32 %v2354, %v2593
  %v2601 = vsub.f32 0.0, %v2597
  %v2602 = vmul.f32 %v2601, 1.442695
  %v2603 = vpow.pop %v2602
  %v2604 = vadd.f32 %v2603, 1.0
  %v2605 = vrcp.pop %v2604
  %v2606 = vsub.f32 0.0, %v2598
  %v2607 = vmul.f32 %v2606, 1.442695
  %v2608 = vpow.pop %v2607
  %v2609 = vadd.f32 %v2608, 1.0
  %v2610 = vrcp.pop %v2609
  %v2611 = vtanh.pop %v2599
  %v2612 = vsub.f32 0.0, %v2600
  %v2613 = vmul.f32 %v2612, 1.442695
  %v2614 = vpow.pop %v2613
  %v2615 = vadd.f32 %v2614, 1.0
  %v2616 = vrcp.pop %v2615
  %v2617 = vmul.f32 %v2610, 0.0
  %v2618 = vmul.f32 %v2605, %v2611
  %v2619 = vadd.f32 %v2617, %v2618
  %v2620 = vtanh.pop %v2619
  %v2621 = vmul.f32 %v2616, %v2620
  %2622 = vst [vmem:[#allocation4] sm:$0xff] %v2621
  %v2623 = vld [vmem:[#allocation3 + $0x20] sm:$0xff]
  %v2624 = vld [vmem:[#allocation3 + $0x28] sm:$0xff]
  %v2625 = vld [vmem:[#allocation3 + $0x30] sm:$0xff]
  %v2626 = vld [vmem:[#allocation3 + $0x38] sm:$0xff]
  %v2627 = vpack.c.bf16 %v2621, %v2621
  %2628 = vmatprep.subr.bf16.mxu0 %v2480
  %2629 = vmatpush1.bf16.msra.mxu0 %v2479
  %2630 = vmatprep.subr.bf16.mxu0 %v2476
  %2631 = vmatpush1.bf16.msra.mxu0 %v2475
  %2632 = vmatprep.subr.bf16.mxu0 %v2472
  %2633 = vmatpush1.bf16.msra.mxu0 %v2471
  %2634 = vmatprep.subr.bf16.mxu0 %v2468
  %2635 = vmatpush1.bf16.msra.mxu0 %v2467
  %2636 = vmatprep.subr.bf16.mxu0 %v2464
  %2637 = vmatpush1.bf16.msra.mxu0 %v2463
  %2638 = vmatprep.subr.bf16.mxu0 %v2460
  %2639 = vmatpush1.bf16.msra.mxu0 %v2459
  %2640 = vmatprep.subr.bf16.mxu0 %v2456
  %2641 = vmatpush1.bf16.msra.mxu0 %v2455
  %2642 = vmatprep.subr.bf16.mxu0 %v2452
  %2643 = vmatpush1.bf16.msra.mxu0 %v2451
  %2644 = vmatprep.subr.bf16.mxu0 0
  %2645 = vmatpush2.bf16.msra.mxu0 0
  %2646 = vmatprep.subr.bf16.mxu0 0
  %2647 = vmatpush2.bf16.msra.mxu0 0
  %2648 = vmatprep.subr.bf16.mxu0 0
  %2649 = vmatpush2.bf16.msra.mxu0 0
  %2650 = vmatprep.subr.bf16.mxu0 0
  %2651 = vmatpush2.bf16.msra.mxu0 0
  %2652 = vmatprep.subr.bf16.mxu0 0
  %2653 = vmatpush2.bf16.msra.mxu0 0
  %2654 = vmatprep.subr.bf16.mxu0 0
  %2655 = vmatpush2.bf16.msra.mxu0 0
  %2656 = vmatprep.subr.bf16.mxu0 0
  %2657 = vmatpush2.bf16.msra.mxu0 0
  %2658 = vmatprep.subr.bf16.mxu0 0
  %2659 = vmatpush2.bf16.msra.mxu0 0
  %2660 = vmatprep.mubr.bf16.mxu0 0
  %2661 = vmatmul.mubr.bf16.gmra.mxu0 %v2627
  %v2662 = vpop.f32.mrf.mxu0
  %v2663 = vadd.f32 0.0, %v2662
  %v2664 = vpop.f32.mrf.mxu0
  %v2665 = vadd.f32 0.0, %v2664
  %v2666 = vpop.f32.mrf.mxu0
  %v2667 = vpop.f32.mrf.mxu0
  %2668 = vdwg.mxu0
  %2669 = vmatprep.subr.bf16.mxu0 %v2482
  %2670 = vmatpush1.bf16.msra.mxu0 %v2481
  %2671 = vmatprep.subr.bf16.mxu0 %v2478
  %2672 = vmatpush1.bf16.msra.mxu0 %v2477
  %2673 = vmatprep.subr.bf16.mxu0 %v2474
  %2674 = vmatpush1.bf16.msra.mxu0 %v2473
  %2675 = vmatprep.subr.bf16.mxu0 %v2470
  %2676 = vmatpush1.bf16.msra.mxu0 %v2469
  %2677 = vmatprep.subr.bf16.mxu0 %v2466
  %2678 = vmatpush1.bf16.msra.mxu0 %v2465
  %2679 = vmatprep.subr.bf16.mxu0 %v2462
  %2680 = vmatpush1.bf16.msra.mxu0 %v2461
  %2681 = vmatprep.subr.bf16.mxu0 %v2458
  %2682 = vmatpush1.bf16.msra.mxu0 %v2457
  %2683 = vmatprep.subr.bf16.mxu0 %v2454
  %2684 = vmatpush1.bf16.msra.mxu0 %v2453
  %2685 = vmatprep.subr.bf16.mxu0 0
  %2686 = vmatpush2.bf16.msra.mxu0 0
  %2687 = vmatprep.subr.bf16.mxu0 0
  %2688 = vmatpush2.bf16.msra.mxu0 0
  %2689 = vmatprep.subr.bf16.mxu0 0
  %2690 = vmatpush2.bf16.msra.mxu0 0
  %2691 = vmatprep.subr.bf16.mxu0 0
  %2692 = vmatpush2.bf16.msra.mxu0 0
  %2693 = vmatprep.subr.bf16.mxu0 0
  %2694 = vmatpush2.bf16.msra.mxu0 0
  %2695 = vmatprep.subr.bf16.mxu0 0
  %2696 = vmatpush2.bf16.msra.mxu0 0
  %2697 = vmatprep.subr.bf16.mxu0 0
  %2698 = vmatpush2.bf16.msra.mxu0 0
  %2699 = vmatprep.subr.bf16.mxu0 0
  %2700 = vmatpush2.bf16.msra.mxu0 0
  %2701 = vmatprep.mubr.bf16.mxu0 0
  %2702 = vmatmul.mubr.bf16.gmra.mxu0 %v2627
  %v2703 = vpop.f32.mrf.mxu0
  %v2704 = vadd.f32 0.0, %v2703
  %v2705 = vpop.f32.mrf.mxu0
  %v2706 = vadd.f32 0.0, %v2705
  %v2707 = vpop.f32.mrf.mxu0
  %v2708 = vpop.f32.mrf.mxu0
  %2709 = vdwg.mxu0
  %v2710 = vadd.f32 %v2623, %v2663
  %v2711 = vadd.f32 %v2624, %v2665
  %v2712 = vadd.f32 %v2625, %v2704
  %v2713 = vadd.f32 %v2626, %v2706
  %v2714 = vsub.f32 0.0, %v2710
  %v2715 = vmul.f32 %v2714, 1.442695
  %v2716 = vpow.pop %v2715
  %v2717 = vadd.f32 %v2716, 1.0
  %v2718 = vrcp.pop %v2717
  %v2719 = vsub.f32 0.0, %v2711
  %v2720 = vmul.f32 %v2719, 1.442695
  %v2721 = vpow.pop %v2720
  %v2722 = vadd.f32 %v2721, 1.0
  %v2723 = vrcp.pop %v2722
  %v2724 = vtanh.pop %v2712
  %v2725 = vsub.f32 0.0, %v2713
  %v2726 = vmul.f32 %v2725, 1.442695
  %v2727 = vpow.pop %v2726
  %v2728 = vadd.f32 %v2727, 1.0
  %v2729 = vrcp.pop %v2728
  %v2730 = vmul.f32 %v2723, %v2619
  %v2731 = vmul.f32 %v2718, %v2724
  %v2732 = vadd.f32 %v2730, %v2731
  %v2733 = vtanh.pop %v2732
  %v2734 = vmul.f32 %v2729, %v2733
  %2735 = vst [vmem:[#allocation4 + $0x8] sm:$0xff] %v2734
  %v2736 = vld [vmem:[#allocation3 + $0x40] sm:$0xff]
  %v2737 = vld [vmem:[#allocation3 + $0x48] sm:$0xff]
  %v2738 = vld [vmem:[#allocation3 + $0x50] sm:$0xff]
  %v2739 = vld [vmem:[#allocation3 + $0x58] sm:$0xff]
  %v2740 = vpack.c.bf16 %v2734, %v2734
  %2741 = vmatprep.subr.bf16.mxu0 %v2480
  %2742 = vmatpush1.bf16.msra.mxu0 %v2479
  %2743 = vmatprep.subr.bf16.mxu0 %v2476
  %2744 = vmatpush1.bf16.msra.mxu0 %v2475
  %2745 = vmatprep.subr.bf16.mxu0 %v2472
  %2746 = vmatpush1.bf16.msra.mxu0 %v2471
  %2747 = vmatprep.subr.bf16.mxu0 %v2468
  %2748 = vmatpush1.bf16.msra.mxu0 %v2467
  %2749 = vmatprep.subr.bf16.mxu0 %v2464
  %2750 = vmatpush1.bf16.msra.mxu0 %v2463
  %2751 = vmatprep.subr.bf16.mxu0 %v2460
  %2752 = vmatpush1.bf16.msra.mxu0 %v2459
  %2753 = vmatprep.subr.bf16.mxu0 %v2456
  %2754 = vmatpush1.bf16.msra.mxu0 %v2455
  %2755 = vmatprep.subr.bf16.mxu0 %v2452
  %2756 = vmatpush1.bf16.msra.mxu0 %v2451
  %2757 = vmatprep.subr.bf16.mxu0 0
  %2758 = vmatpush2.bf16.msra.mxu0 0
  %2759 = vmatprep.subr.bf16.mxu0 0
  %2760 = vmatpush2.bf16.msra.mxu0 0
  %2761 = vmatprep.subr.bf16.mxu0 0
  %2762 = vmatpush2.bf16.msra.mxu0 0
  %2763 = vmatprep.subr.bf16.mxu0 0
  %2764 = vmatpush2.bf16.msra.mxu0 0
  %2765 = vmatprep.subr.bf16.mxu0 0
  %2766 = vmatpush2.bf16.msra.mxu0 0
  %2767 = vmatprep.subr.bf16.mxu0 0
  %2768 = vmatpush2.bf16.msra.mxu0 0
  %2769 = vmatprep.subr.bf16.mxu0 0
  %2770 = vmatpush2.bf16.msra.mxu0 0
  %2771 = vmatprep.subr.bf16.mxu0 0
  %2772 = vmatpush2.bf16.msra.mxu0 0
  %2773 = vmatprep.mubr.bf16.mxu0 0
  %2774 = vmatmul.mubr.bf16.gmra.mxu0 %v2740
  %v2775 = vpop.f32.mrf.mxu0
  %v2776 = vadd.f32 0.0, %v2775
  %v2777 = vpop.f32.mrf.mxu0
  %v2778 = vadd.f32 0.0, %v2777
  %v2779 = vpop.f32.mrf.mxu0
  %v2780 = vpop.f32.mrf.mxu0
  %2781 = vdwg.mxu0
  %2782 = vmatprep.subr.bf16.mxu0 %v2482
  %2783 = vmatpush1.bf16.msra.mxu0 %v2481
  %2784 = vmatprep.subr.bf16.mxu0 %v2478
  %2785 = vmatpush1.bf16.msra.mxu0 %v2477
  %2786 = vmatprep.subr.bf16.mxu0 %v2474
  %2787 = vmatpush1.bf16.msra.mxu0 %v2473
  %2788 = vmatprep.subr.bf16.mxu0 %v2470
  %2789 = vmatpush1.bf16.msra.mxu0 %v2469
  %2790 = vmatprep.subr.bf16.mxu0 %v2466
  %2791 = vmatpush1.bf16.msra.mxu0 %v2465
  %2792 = vmatprep.subr.bf16.mxu0 %v2462
  %2793 = vmatpush1.bf16.msra.mxu0 %v2461
  %2794 = vmatprep.subr.bf16.mxu0 %v2458
  %2795 = vmatpush1.bf16.msra.mxu0 %v2457
  %2796 = vmatprep.subr.bf16.mxu0 %v2454
  %2797 = vmatpush1.bf16.msra.mxu0 %v2453
  %2798 = vmatprep.subr.bf16.mxu0 0
  %2799 = vmatpush2.bf16.msra.mxu0 0
  %2800 = vmatprep.subr.bf16.mxu0 0
  %2801 = vmatpush2.bf16.msra.mxu0 0
  %2802 = vmatprep.subr.bf16.mxu0 0
  %2803 = vmatpush2.bf16.msra.mxu0 0
  %2804 = vmatprep.subr.bf16.mxu0 0
  %2805 = vmatpush2.bf16.msra.mxu0 0
  %2806 = vmatprep.subr.bf16.mxu0 0
  %2807 = vmatpush2.bf16.msra.mxu0 0
  %2808 = vmatprep.subr.bf16.mxu0 0
  %2809 = vmatpush2.bf16.msra.mxu0 0
  %2810 = vmatprep.subr.bf16.mxu0 0
  %2811 = vmatpush2.bf16.msra.mxu0 0
  %2812 = vmatprep.subr.bf16.mxu0 0
  %2813 = vmatpush2.bf16.msra.mxu0 0
  %2814 = vmatprep.mubr.bf16.mxu0 0
  %2815 = vmatmul.mubr.bf16.gmra.mxu0 %v2740
  %v2816 = vpop.f32.mrf.mxu0
  %v2817 = vadd.f32 0.0, %v2816
  %v2818 = vpop.f32.mrf.mxu0
  %v2819 = vadd.f32 0.0, %v2818
  %v2820 = vpop.f32.mrf.mxu0
  %v2821 = vpop.f32.mrf.mxu0
  %2822 = vdwg.mxu0
  %v2823 = vadd.f32 %v2736, %v2776
  %v2824 = vadd.f32 %v2737, %v2778
  %v2825 = vadd.f32 %v2738, %v2817
  %v2826 = vadd.f32 %v2739, %v2819
  %v2827 = vsub.f32 0.0, %v2823
  %v2828 = vmul.f32 %v2827, 1.442695
  %v2829 = vpow.pop %v2828
  %v2830 = vadd.f32 %v2829, 1.0
  %v2831 = vrcp.pop %v2830
  %v2832 = vsub.f32 0.0, %v2824
  %v2833 = vmul.f32 %v2832, 1.442695
  %v2834 = vpow.pop %v2833
  %v2835 = vadd.f32 %v2834, 1.0
  %v2836 = vrcp.pop %v2835
  %v2837 = vtanh.pop %v2825
  %v2838 = vsub.f32 0.0, %v2826
  %v2839 = vmul.f32 %v2838, 1.442695
  %v2840 = vpow.pop %v2839
  %v2841 = vadd.f32 %v2840, 1.0
  %v2842 = vrcp.pop %v2841
  %v2843 = vmul.f32 %v2836, %v2732
  %v2844 = vmul.f32 %v2831, %v2837
  %v2845 = vadd.f32 %v2843, %v2844
  %v2846 = vtanh.pop %v2845
  %v2847 = vmul.f32 %v2842, %v2846
  %2848 = vst [vmem:[#allocation4 + $0x10] sm:$0xff] %v2847
  %v2849 = vld [vmem:[#allocation3 + $0x60] sm:$0xff]
  %v2850 = vld [vmem:[#allocation3 + $0x68] sm:$0xff]
  %v2851 = vld [vmem:[#allocation3 + $0x70] sm:$0xff]
  %v2852 = vld [vmem:[#allocation3 + $0x78] sm:$0xff]
  %v2853 = vpack.c.bf16 %v2847, %v2847
  %2854 = vmatprep.subr.bf16.mxu0 %v2480
  %2855 = vmatpush1.bf16.msra.mxu0 %v2479
  %2856 = vmatprep.subr.bf16.mxu0 %v2476
  %2857 = vmatpush1.bf16.msra.mxu0 %v2475
  %2858 = vmatprep.subr.bf16.mxu0 %v2472
  %2859 = vmatpush1.bf16.msra.mxu0 %v2471
  %2860 = vmatprep.subr.bf16.mxu0 %v2468
  %2861 = vmatpush1.bf16.msra.mxu0 %v2467
  %2862 = vmatprep.subr.bf16.mxu0 %v2464
  %2863 = vmatpush1.bf16.msra.mxu0 %v2463
  %2864 = vmatprep.subr.bf16.mxu0 %v2460
  %2865 = vmatpush1.bf16.msra.mxu0 %v2459
  %2866 = vmatprep.subr.bf16.mxu0 %v2456
  %2867 = vmatpush1.bf16.msra.mxu0 %v2455
  %2868 = vmatprep.subr.bf16.mxu0 %v2452
  %2869 = vmatpush1.bf16.msra.mxu0 %v2451
  %2870 = vmatprep.subr.bf16.mxu0 0
  %2871 = vmatpush2.bf16.msra.mxu0 0
  %2872 = vmatprep.subr.bf16.mxu0 0
  %2873 = vmatpush2.bf16.msra.mxu0 0
  %2874 = vmatprep.subr.bf16.mxu0 0
  %2875 = vmatpush2.bf16.msra.mxu0 0
  %2876 = vmatprep.subr.bf16.mxu0 0
  %2877 = vmatpush2.bf16.msra.mxu0 0
  %2878 = vmatprep.subr.bf16.mxu0 0
  %2879 = vmatpush2.bf16.msra.mxu0 0
  %2880 = vmatprep.subr.bf16.mxu0 0
  %2881 = vmatpush2.bf16.msra.mxu0 0
  %2882 = vmatprep.subr.bf16.mxu0 0
  %2883 = vmatpush2.bf16.msra.mxu0 0
  %2884 = vmatprep.subr.bf16.mxu0 0
  %2885 = vmatpush2.bf16.msra.mxu0 0
  %2886 = vmatprep.mubr.bf16.mxu0 0
  %2887 = vmatmul.mubr.bf16.gmra.mxu0 %v2853
  %v2888 = vpop.f32.mrf.mxu0
  %v2889 = vadd.f32 0.0, %v2888
  %v2890 = vpop.f32.mrf.mxu0
  %v2891 = vadd.f32 0.0, %v2890
  %v2892 = vpop.f32.mrf.mxu0
  %v2893 = vpop.f32.mrf.mxu0
  %2894 = vdwg.mxu0
  %2895 = vmatprep.subr.bf16.mxu0 %v2482
  %2896 = vmatpush1.bf16.msra.mxu0 %v2481
  %2897 = vmatprep.subr.bf16.mxu0 %v2478
  %2898 = vmatpush1.bf16.msra.mxu0 %v2477
  %2899 = vmatprep.subr.bf16.mxu0 %v2474
  %2900 = vmatpush1.bf16.msra.mxu0 %v2473
  %2901 = vmatprep.subr.bf16.mxu0 %v2470
  %2902 = vmatpush1.bf16.msra.mxu0 %v2469
  %2903 = vmatprep.subr.bf16.mxu0 %v2466
  %2904 = vmatpush1.bf16.msra.mxu0 %v2465
  %2905 = vmatprep.subr.bf16.mxu0 %v2462
  %2906 = vmatpush1.bf16.msra.mxu0 %v2461
  %2907 = vmatprep.subr.bf16.mxu0 %v2458
  %2908 = vmatpush1.bf16.msra.mxu0 %v2457
  %2909 = vmatprep.subr.bf16.mxu0 %v2454
  %2910 = vmatpush1.bf16.msra.mxu0 %v2453
  %2911 = vmatprep.subr.bf16.mxu0 0
  %2912 = vmatpush2.bf16.msra.mxu0 0
  %2913 = vmatprep.subr.bf16.mxu0 0
  %2914 = vmatpush2.bf16.msra.mxu0 0
  %2915 = vmatprep.subr.bf16.mxu0 0
  %2916 = vmatpush2.bf16.msra.mxu0 0
  %2917 = vmatprep.subr.bf16.mxu0 0
  %2918 = vmatpush2.bf16.msra.mxu0 0
  %2919 = vmatprep.subr.bf16.mxu0 0
  %2920 = vmatpush2.bf16.msra.mxu0 0
  %2921 = vmatprep.subr.bf16.mxu0 0
  %2922 = vmatpush2.bf16.msra.mxu0 0
  %2923 = vmatprep.subr.bf16.mxu0 0
  %2924 = vmatpush2.bf16.msra.mxu0 0
  %2925 = vmatprep.subr.bf16.mxu0 0
  %2926 = vmatpush2.bf16.msra.mxu0 0
  %2927 = vmatprep.mubr.bf16.mxu0 0
  %2928 = vmatmul.mubr.bf16.gmra.mxu0 %v2853
  %v2929 = vpop.f32.mrf.mxu0
  %v2930 = vadd.f32 0.0, %v2929
  %v2931 = vpop.f32.mrf.mxu0
  %v2932 = vadd.f32 0.0, %v2931
  %v2933 = vpop.f32.mrf.mxu0
  %v2934 = vpop.f32.mrf.mxu0
  %2935 = vdwg.mxu0
  %v2936 = vadd.f32 %v2849, %v2889
  %v2937 = vadd.f32 %v2850, %v2891
  %v2938 = vadd.f32 %v2851, %v2930
  %v2939 = vadd.f32 %v2852, %v2932
  %v2940 = vsub.f32 0.0, %v2936
  %v2941 = vmul.f32 %v2940, 1.442695
  %v2942 = vpow.pop %v2941
  %v2943 = vadd.f32 %v2942, 1.0
  %v2944 = vrcp.pop %v2943
  %v2945 = vsub.f32 0.0, %v2937
  %v2946 = vmul.f32 %v2945, 1.442695
  %v2947 = vpow.pop %v2946
  %v2948 = vadd.f32 %v2947, 1.0
  %v2949 = vrcp.pop %v2948
  %v2950 = vtanh.pop %v2938
  %v2951 = vsub.f32 0.0, %v2939
  %v2952 = vmul.f32 %v2951, 1.442695
  %v2953 = vpow.pop %v2952
  %v2954 = vadd.f32 %v2953, 1.0
  %v2955 = vrcp.pop %v2954
  %v2956 = vmul.f32 %v2949, %v2845
  %v2957 = vmul.f32 %v2944, %v2950
  %v2958 = vadd.f32 %v2956, %v2957
  %v2959 = vtanh.pop %v2958
  %v2960 = vmul.f32 %v2955, %v2959
  %2961 = vst [vmem:[#allocation4 + $0x18] sm:$0xff] %v2960
  %v2962 = vld [vmem:[#allocation3 + $0x80] sm:$0xff]
  %v2963 = vld [vmem:[#allocation3 + $0x88] sm:$0xff]
  %v2964 = vld [vmem:[#allocation3 + $0x90] sm:$0xff]
  %v2965 = vld [vmem:[#allocation3 + $0x98] sm:$0xff]
  %v2966 = vpack.c.bf16 %v2960, %v2960
  %2967 = vmatprep.subr.bf16.mxu0 %v2480
  %2968 = vmatpush1.bf16.msra.mxu0 %v2479
  %2969 = vmatprep.subr.bf16.mxu0 %v2476
  %2970 = vmatpush1.bf16.msra.mxu0 %v2475
  %2971 = vmatprep.subr.bf16.mxu0 %v2472
  %2972 = vmatpush1.bf16.msra.mxu0 %v2471
  %2973 = vmatprep.subr.bf16.mxu0 %v2468
  %2974 = vmatpush1.bf16.msra.mxu0 %v2467
  %2975 = vmatprep.subr.bf16.mxu0 %v2464
  %2976 = vmatpush1.bf16.msra.mxu0 %v2463
  %2977 = vmatprep.subr.bf16.mxu0 %v2460
  %2978 = vmatpush1.bf16.msra.mxu0 %v2459
  %2979 = vmatprep.subr.bf16.mxu0 %v2456
  %2980 = vmatpush1.bf16.msra.mxu0 %v2455
  %2981 = vmatprep.subr.bf16.mxu0 %v2452
  %2982 = vmatpush1.bf16.msra.mxu0 %v2451
  %2983 = vmatprep.subr.bf16.mxu0 0
  %2984 = vmatpush2.bf16.msra.mxu0 0
  %2985 = vmatprep.subr.bf16.mxu0 0
  %2986 = vmatpush2.bf16.msra.mxu0 0
  %2987 = vmatprep.subr.bf16.mxu0 0
  %2988 = vmatpush2.bf16.msra.mxu0 0
  %2989 = vmatprep.subr.bf16.mxu0 0
  %2990 = vmatpush2.bf16.msra.mxu0 0
  %2991 = vmatprep.subr.bf16.mxu0 0
  %2992 = vmatpush2.bf16.msra.mxu0 0
  %2993 = vmatprep.subr.bf16.mxu0 0
  %2994 = vmatpush2.bf16.msra.mxu0 0
  %2995 = vmatprep.subr.bf16.mxu0 0
  %2996 = vmatpush2.bf16.msra.mxu0 0
  %2997 = vmatprep.subr.bf16.mxu0 0
  %2998 = vmatpush2.bf16.msra.mxu0 0
  %2999 = vmatprep.mubr.bf16.mxu0 0
  %3000 = vmatmul.mubr.bf16.gmra.mxu0 %v2966
  %v3001 = vpop.f32.mrf.mxu0
  %v3002 = vadd.f32 0.0, %v3001
  %v3003 = vpop.f32.mrf.mxu0
  %v3004 = vadd.f32 0.0, %v3003
  %v3005 = vpop.f32.mrf.mxu0
  %v3006 = vpop.f32.mrf.mxu0
  %3007 = vdwg.mxu0
  %3008 = vmatprep.subr.bf16.mxu0 %v2482
  %3009 = vmatpush1.bf16.msra.mxu0 %v2481
  %3010 = vmatprep.subr.bf16.mxu0 %v2478
  %3011 = vmatpush1.bf16.msra.mxu0 %v2477
  %3012 = vmatprep.subr.bf16.mxu0 %v2474
  %3013 = vmatpush1.bf16.msra.mxu0 %v2473
  %3014 = vmatprep.subr.bf16.mxu0 %v2470
  %3015 = vmatpush1.bf16.msra.mxu0 %v2469
  %3016 = vmatprep.subr.bf16.mxu0 %v2466
  %3017 = vmatpush1.bf16.msra.mxu0 %v2465
  %3018 = vmatprep.subr.bf16.mxu0 %v2462
  %3019 = vmatpush1.bf16.msra.mxu0 %v2461
  %3020 = vmatprep.subr.bf16.mxu0 %v2458
  %3021 = vmatpush1.bf16.msra.mxu0 %v2457
  %3022 = vmatprep.subr.bf16.mxu0 %v2454
  %3023 = vmatpush1.bf16.msra.mxu0 %v2453
  %3024 = vmatprep.subr.bf16.mxu0 0
  %3025 = vmatpush2.bf16.msra.mxu0 0
  %3026 = vmatprep.subr.bf16.mxu0 0
  %3027 = vmatpush2.bf16.msra.mxu0 0
  %3028 = vmatprep.subr.bf16.mxu0 0
  %3029 = vmatpush2.bf16.msra.mxu0 0
  %3030 = vmatprep.subr.bf16.mxu0 0
  %3031 = vmatpush2.bf16.msra.mxu0 0
  %3032 = vmatprep.subr.bf16.mxu0 0
  %3033 = vmatpush2.bf16.msra.mxu0 0
  %3034 = vmatprep.subr.bf16.mxu0 0
  %3035 = vmatpush2.bf16.msra.mxu0 0
  %3036 = vmatprep.subr.bf16.mxu0 0
  %3037 = vmatpush2.bf16.msra.mxu0 0
  %3038 = vmatprep.subr.bf16.mxu0 0
  %3039 = vmatpush2.bf16.msra.mxu0 0
  %3040 = vmatprep.mubr.bf16.mxu0 0
  %3041 = vmatmul.mubr.bf16.gmra.mxu0 %v2966
  %v3042 = vpop.f32.mrf.mxu0
  %v3043 = vadd.f32 0.0, %v3042
  %v3044 = vpop.f32.mrf.mxu0
  %v3045 = vadd.f32 0.0, %v3044
  %v3046 = vpop.f32.mrf.mxu0
  %v3047 = vpop.f32.mrf.mxu0
  %3048 = vdwg.mxu0
  %v3049 = vadd.f32 %v2962, %v3002
  %v3050 = vadd.f32 %v2963, %v3004
  %v3051 = vadd.f32 %v2964, %v3043
  %v3052 = vadd.f32 %v2965, %v3045
  %v3053 = vsub.f32 0.0, %v3049
  %v3054 = vmul.f32 %v3053, 1.442695
  %v3055 = vpow.pop %v3054
  %v3056 = vadd.f32 %v3055, 1.0
  %v3057 = vrcp.pop %v3056
  %v3058 = vsub.f32 0.0, %v3050
  %v3059 = vmul.f32 %v3058, 1.442695
  %v3060 = vpow.pop %v3059
  %v3061 = vadd.f32 %v3060, 1.0
  %v3062 = vrcp.pop %v3061
  %v3063 = vtanh.pop %v3051
  %v3064 = vsub.f32 0.0, %v3052
  %v3065 = vmul.f32 %v3064, 1.442695
  %v3066 = vpow.pop %v3065
  %v3067 = vadd.f32 %v3066, 1.0
  %v3068 = vrcp.pop %v3067
  %v3069 = vmul.f32 %v3062, %v2958
  %v3070 = vmul.f32 %v3057, %v3063
  %v3071 = vadd.f32 %v3069, %v3070
  %v3072 = vtanh.pop %v3071
  %v3073 = vmul.f32 %v3068, %v3072
  %3074 = vst [vmem:[#allocation4 + $0x20] sm:$0xff] %v3073
  %v3075 = vld [vmem:[#allocation3 + $0xa0] sm:$0xff]
  %v3076 = vld [vmem:[#allocation3 + $0xa8] sm:$0xff]
  %v3077 = vld [vmem:[#allocation3 + $0xb0] sm:$0xff]
  %v3078 = vld [vmem:[#allocation3 + $0xb8] sm:$0xff]
  %v3079 = vpack.c.bf16 %v3073, %v3073
  %3080 = vmatprep.subr.bf16.mxu0 %v2480
  %3081 = vmatpush1.bf16.msra.mxu0 %v2479
  %3082 = vmatprep.subr.bf16.mxu0 %v2476
  %3083 = vmatpush1.bf16.msra.mxu0 %v2475
  %3084 = vmatprep.subr.bf16.mxu0 %v2472
  %3085 = vmatpush1.bf16.msra.mxu0 %v2471
  %3086 = vmatprep.subr.bf16.mxu0 %v2468
  %3087 = vmatpush1.bf16.msra.mxu0 %v2467
  %3088 = vmatprep.subr.bf16.mxu0 %v2464
  %3089 = vmatpush1.bf16.msra.mxu0 %v2463
  %3090 = vmatprep.subr.bf16.mxu0 %v2460
  %3091 = vmatpush1.bf16.msra.mxu0 %v2459
  %3092 = vmatprep.subr.bf16.mxu0 %v2456
  %3093 = vmatpush1.bf16.msra.mxu0 %v2455
  %3094 = vmatprep.subr.bf16.mxu0 %v2452
  %3095 = vmatpush1.bf16.msra.mxu0 %v2451
  %3096 = vmatprep.subr.bf16.mxu0 0
  %3097 = vmatpush2.bf16.msra.mxu0 0
  %3098 = vmatprep.subr.bf16.mxu0 0
  %3099 = vmatpush2.bf16.msra.mxu0 0
  %3100 = vmatprep.subr.bf16.mxu0 0
  %3101 = vmatpush2.bf16.msra.mxu0 0
  %3102 = vmatprep.subr.bf16.mxu0 0
  %3103 = vmatpush2.bf16.msra.mxu0 0
  %3104 = vmatprep.subr.bf16.mxu0 0
  %3105 = vmatpush2.bf16.msra.mxu0 0
  %3106 = vmatprep.subr.bf16.mxu0 0
  %3107 = vmatpush2.bf16.msra.mxu0 0
  %3108 = vmatprep.subr.bf16.mxu0 0
  %3109 = vmatpush2.bf16.msra.mxu0 0
  %3110 = vmatprep.subr.bf16.mxu0 0
  %3111 = vmatpush2.bf16.msra.mxu0 0
  %3112 = vmatprep.mubr.bf16.mxu0 0
  %3113 = vmatmul.mubr.bf16.gmra.mxu0 %v3079
  %v3114 = vpop.f32.mrf.mxu0
  %v3115 = vadd.f32 0.0, %v3114
  %v3116 = vpop.f32.mrf.mxu0
  %v3117 = vadd.f32 0.0, %v3116
  %v3118 = vpop.f32.mrf.mxu0
  %v3119 = vpop.f32.mrf.mxu0
  %3120 = vdwg.mxu0
  %3121 = vmatprep.subr.bf16.mxu0 %v2482
  %3122 = vmatpush1.bf16.msra.mxu0 %v2481
  %3123 = vmatprep.subr.bf16.mxu0 %v2478
  %3124 = vmatpush1.bf16.msra.mxu0 %v2477
  %3125 = vmatprep.subr.bf16.mxu0 %v2474
  %3126 = vmatpush1.bf16.msra.mxu0 %v2473
  %3127 = vmatprep.subr.bf16.mxu0 %v2470
  %3128 = vmatpush1.bf16.msra.mxu0 %v2469
  %3129 = vmatprep.subr.bf16.mxu0 %v2466
  %3130 = vmatpush1.bf16.msra.mxu0 %v2465
  %3131 = vmatprep.subr.bf16.mxu0 %v2462
  %3132 = vmatpush1.bf16.msra.mxu0 %v2461
  %3133 = vmatprep.subr.bf16.mxu0 %v2458
  %3134 = vmatpush1.bf16.msra.mxu0 %v2457
  %3135 = vmatprep.subr.bf16.mxu0 %v2454
  %3136 = vmatpush1.bf16.msra.mxu0 %v2453
  %3137 = vmatprep.subr.bf16.mxu0 0
  %3138 = vmatpush2.bf16.msra.mxu0 0
  %3139 = vmatprep.subr.bf16.mxu0 0
  %3140 = vmatpush2.bf16.msra.mxu0 0
  %3141 = vmatprep.subr.bf16.mxu0 0
  %3142 = vmatpush2.bf16.msra.mxu0 0
  %3143 = vmatprep.subr.bf16.mxu0 0
  %3144 = vmatpush2.bf16.msra.mxu0 0
  %3145 = vmatprep.subr.bf16.mxu0 0
  %3146 = vmatpush2.bf16.msra.mxu0 0
  %3147 = vmatprep.subr.bf16.mxu0 0
  %3148 = vmatpush2.bf16.msra.mxu0 0
  %3149 = vmatprep.subr.bf16.mxu0 0
  %3150 = vmatpush2.bf16.msra.mxu0 0
  %3151 = vmatprep.subr.bf16.mxu0 0
  %3152 = vmatpush2.bf16.msra.mxu0 0
  %3153 = vmatprep.mubr.bf16.mxu0 0
  %3154 = vmatmul.mubr.bf16.gmra.mxu0 %v3079
  %v3155 = vpop.f32.mrf.mxu0
  %v3156 = vadd.f32 0.0, %v3155
  %v3157 = vpop.f32.mrf.mxu0
  %v3158 = vadd.f32 0.0, %v3157
  %v3159 = vpop.f32.mrf.mxu0
  %v3160 = vpop.f32.mrf.mxu0
  %3161 = vdwg.mxu0
  %v3162 = vadd.f32 %v3075, %v3115
  %v3163 = vadd.f32 %v3076, %v3117
  %v3164 = vadd.f32 %v3077, %v3156
  %v3165 = vadd.f32 %v3078, %v3158
  %v3166 = vsub.f32 0.0, %v3162
  %v3167 = vmul.f32 %v3166, 1.442695
  %v3168 = vpow.pop %v3167
  %v3169 = vadd.f32 %v3168, 1.0
  %v3170 = vrcp.pop %v3169
  %v3171 = vsub.f32 0.0, %v3163
  %v3172 = vmul.f32 %v3171, 1.442695
  %v3173 = vpow.pop %v3172
  %v3174 = vadd.f32 %v3173, 1.0
  %v3175 = vrcp.pop %v3174
  %v3176 = vtanh.pop %v3164
  %v3177 = vsub.f32 0.0, %v3165
  %v3178 = vmul.f32 %v3177, 1.442695
  %v3179 = vpow.pop %v3178
  %v3180 = vadd.f32 %v3179, 1.0
  %v3181 = vrcp.pop %v3180
  %v3182 = vmul.f32 %v3175, %v3071
  %v3183 = vmul.f32 %v3170, %v3176
  %v3184 = vadd.f32 %v3182, %v3183
  %v3185 = vtanh.pop %v3184
  %v3186 = vmul.f32 %v3181, %v3185
  %3187 = vst [vmem:[#allocation4 + $0x28] sm:$0xff] %v3186
  %v3188 = vld [vmem:[#allocation3 + $0xc0] sm:$0xff]
  %v3189 = vld [vmem:[#allocation3 + $0xc8] sm:$0xff]
  %v3190 = vld [vmem:[#allocation3 + $0xd0] sm:$0xff]
  %v3191 = vld [vmem:[#allocation3 + $0xd8] sm:$0xff]
  %v3192 = vpack.c.bf16 %v3186, %v3186
  %3193 = vmatprep.subr.bf16.mxu0 %v2480
  %3194 = vmatpush1.bf16.msra.mxu0 %v2479
  %3195 = vmatprep.subr.bf16.mxu0 %v2476
  %3196 = vmatpush1.bf16.msra.mxu0 %v2475
  %3197 = vmatprep.subr.bf16.mxu0 %v2472
  %3198 = vmatpush1.bf16.msra.mxu0 %v2471
  %3199 = vmatprep.subr.bf16.mxu0 %v2468
  %3200 = vmatpush1.bf16.msra.mxu0 %v2467
  %3201 = vmatprep.subr.bf16.mxu0 %v2464
  %3202 = vmatpush1.bf16.msra.mxu0 %v2463
  %3203 = vmatprep.subr.bf16.mxu0 %v2460
  %3204 = vmatpush1.bf16.msra.mxu0 %v2459
  %3205 = vmatprep.subr.bf16.mxu0 %v2456
  %3206 = vmatpush1.bf16.msra.mxu0 %v2455
  %3207 = vmatprep.subr.bf16.mxu0 %v2452
  %3208 = vmatpush1.bf16.msra.mxu0 %v2451
  %3209 = vmatprep.subr.bf16.mxu0 0
  %3210 = vmatpush2.bf16.msra.mxu0 0
  %3211 = vmatprep.subr.bf16.mxu0 0
  %3212 = vmatpush2.bf16.msra.mxu0 0
  %3213 = vmatprep.subr.bf16.mxu0 0
  %3214 = vmatpush2.bf16.msra.mxu0 0
  %3215 = vmatprep.subr.bf16.mxu0 0
  %3216 = vmatpush2.bf16.msra.mxu0 0
  %3217 = vmatprep.subr.bf16.mxu0 0
  %3218 = vmatpush2.bf16.msra.mxu0 0
  %3219 = vmatprep.subr.bf16.mxu0 0
  %3220 = vmatpush2.bf16.msra.mxu0 0
  %3221 = vmatprep.subr.bf16.mxu0 0
  %3222 = vmatpush2.bf16.msra.mxu0 0
  %3223 = vmatprep.subr.bf16.mxu0 0
  %3224 = vmatpush2.bf16.msra.mxu0 0
  %3225 = vmatprep.mubr.bf16.mxu0 0
  %3226 = vmatmul.mubr.bf16.gmra.mxu0 %v3192
  %v3227 = vpop.f32.mrf.mxu0
  %v3228 = vadd.f32 0.0, %v3227
  %v3229 = vpop.f32.mrf.mxu0
  %v3230 = vadd.f32 0.0, %v3229
  %v3231 = vpop.f32.mrf.mxu0
  %v3232 = vpop.f32.mrf.mxu0
  %3233 = vdwg.mxu0
  %3234 = vmatprep.subr.bf16.mxu0 %v2482
  %3235 = vmatpush1.bf16.msra.mxu0 %v2481
  %3236 = vmatprep.subr.bf16.mxu0 %v2478
  %3237 = vmatpush1.bf16.msra.mxu0 %v2477
  %3238 = vmatprep.subr.bf16.mxu0 %v2474
  %3239 = vmatpush1.bf16.msra.mxu0 %v2473
  %3240 = vmatprep.subr.bf16.mxu0 %v2470
  %3241 = vmatpush1.bf16.msra.mxu0 %v2469
  %3242 = vmatprep.subr.bf16.mxu0 %v2466
  %3243 = vmatpush1.bf16.msra.mxu0 %v2465
  %3244 = vmatprep.subr.bf16.mxu0 %v2462
  %3245 = vmatpush1.bf16.msra.mxu0 %v2461
  %3246 = vmatprep.subr.bf16.mxu0 %v2458
  %3247 = vmatpush1.bf16.msra.mxu0 %v2457
  %3248 = vmatprep.subr.bf16.mxu0 %v2454
  %3249 = vmatpush1.bf16.msra.mxu0 %v2453
  %3250 = vmatprep.subr.bf16.mxu0 0
  %3251 = vmatpush2.bf16.msra.mxu0 0
  %3252 = vmatprep.subr.bf16.mxu0 0
  %3253 = vmatpush2.bf16.msra.mxu0 0
  %3254 = vmatprep.subr.bf16.mxu0 0
  %3255 = vmatpush2.bf16.msra.mxu0 0
  %3256 = vmatprep.subr.bf16.mxu0 0
  %3257 = vmatpush2.bf16.msra.mxu0 0
  %3258 = vmatprep.subr.bf16.mxu0 0
  %3259 = vmatpush2.bf16.msra.mxu0 0
  %3260 = vmatprep.subr.bf16.mxu0 0
  %3261 = vmatpush2.bf16.msra.mxu0 0
  %3262 = vmatprep.subr.bf16.mxu0 0
  %3263 = vmatpush2.bf16.msra.mxu0 0
  %3264 = vmatprep.subr.bf16.mxu0 0
  %3265 = vmatpush2.bf16.msra.mxu0 0
  %3266 = vmatprep.mubr.bf16.mxu0 0
  %3267 = vmatmul.mubr.bf16.gmra.mxu0 %v3192
  %v3268 = vpop.f32.mrf.mxu0
  %v3269 = vadd.f32 0.0, %v3268
  %v3270 = vpop.f32.mrf.mxu0
  %v3271 = vadd.f32 0.0, %v3270
  %v3272 = vpop.f32.mrf.mxu0
  %v3273 = vpop.f32.mrf.mxu0
  %3274 = vdwg.mxu0
  %v3275 = vadd.f32 %v3188, %v3228
  %v3276 = vadd.f32 %v3189, %v3230
  %v3277 = vadd.f32 %v3190, %v3269
  %v3278 = vadd.f32 %v3191, %v3271
  %v3279 = vsub.f32 0.0, %v3275
  %v3280 = vmul.f32 %v3279, 1.442695
  %v3281 = vpow.pop %v3280
  %v3282 = vadd.f32 %v3281, 1.0
  %v3283 = vrcp.pop %v3282
  %v3284 = vsub.f32 0.0, %v3276
  %v3285 = vmul.f32 %v3284, 1.442695
  %v3286 = vpow.pop %v3285
  %v3287 = vadd.f32 %v3286, 1.0
  %v3288 = vrcp.pop %v3287
  %v3289 = vtanh.pop %v3277
  %v3290 = vsub.f32 0.0, %v3278
  %v3291 = vmul.f32 %v3290, 1.442695
  %v3292 = vpow.pop %v3291
  %v3293 = vadd.f32 %v3292, 1.0
  %v3294 = vrcp.pop %v3293
  %v3295 = vmul.f32 %v3288, %v3184
  %v3296 = vmul.f32 %v3283, %v3289
  %v3297 = vadd.f32 %v3295, %v3296
  %v3298 = vtanh.pop %v3297
  %v3299 = vmul.f32 %v3294, %v3298
  %3300 = vst [vmem:[#allocation4 + $0x30] sm:$0xff] %v3299
  %v3301 = vld [vmem:[#allocation3 + $0xe0] sm:$0xff]
  %v3302 = vld [vmem:[#allocation3 + $0xe8] sm:$0xff]
  %v3303 = vld [vmem:[#allocation3 + $0xf0] sm:$0xff]
  %v3304 = vld [vmem:[#allocation3 + $0xf8] sm:$0xff]
  %v3305 = vpack.c.bf16 %v3299, %v3299
  %3306 = vmatprep.subr.bf16.mxu0 %v2480
  %3307 = vmatpush1.bf16.msra.mxu0 %v2479
  %3308 = vmatprep.subr.bf16.mxu0 %v2476
  %3309 = vmatpush1.bf16.msra.mxu0 %v2475
  %3310 = vmatprep.subr.bf16.mxu0 %v2472
  %3311 = vmatpush1.bf16.msra.mxu0 %v2471
  %3312 = vmatprep.subr.bf16.mxu0 %v2468
  %3313 = vmatpush1.bf16.msra.mxu0 %v2467
  %3314 = vmatprep.subr.bf16.mxu0 %v2464
  %3315 = vmatpush1.bf16.msra.mxu0 %v2463
  %3316 = vmatprep.subr.bf16.mxu0 %v2460
  %3317 = vmatpush1.bf16.msra.mxu0 %v2459
  %3318 = vmatprep.subr.bf16.mxu0 %v2456
  %3319 = vmatpush1.bf16.msra.mxu0 %v2455
  %3320 = vmatprep.subr.bf16.mxu0 %v2452
  %3321 = vmatpush1.bf16.msra.mxu0 %v2451
  %3322 = vmatprep.subr.bf16.mxu0 0
  %3323 = vmatpush2.bf16.msra.mxu0 0
  %3324 = vmatprep.subr.bf16.mxu0 0
  %3325 = vmatpush2.bf16.msra.mxu0 0
  %3326 = vmatprep.subr.bf16.mxu0 0
  %3327 = vmatpush2.bf16.msra.mxu0 0
  %3328 = vmatprep.subr.bf16.mxu0 0
  %3329 = vmatpush2.bf16.msra.mxu0 0
  %3330 = vmatprep.subr.bf16.mxu0 0
  %3331 = vmatpush2.bf16.msra.mxu0 0
  %3332 = vmatprep.subr.bf16.mxu0 0
  %3333 = vmatpush2.bf16.msra.mxu0 0
  %3334 = vmatprep.subr.bf16.mxu0 0
  %3335 = vmatpush2.bf16.msra.mxu0 0
  %3336 = vmatprep.subr.bf16.mxu0 0
  %3337 = vmatpush2.bf16.msra.mxu0 0
  %3338 = vmatprep.mubr.bf16.mxu0 0
  %3339 = vmatmul.mubr.bf16.gmra.mxu0 %v3305
  %v3340 = vpop.f32.mrf.mxu0
  %v3341 = vadd.f32 0.0, %v3340
  %v3342 = vpop.f32.mrf.mxu0
  %v3343 = vadd.f32 0.0, %v3342
  %v3344 = vpop.f32.mrf.mxu0
  %v3345 = vpop.f32.mrf.mxu0
  %3346 = vdwg.mxu0
  %3347 = vmatprep.subr.bf16.mxu0 %v2482
  %3348 = vmatpush1.bf16.msra.mxu0 %v2481
  %3349 = vmatprep.subr.bf16.mxu0 %v2478
  %3350 = vmatpush1.bf16.msra.mxu0 %v2477
  %3351 = vmatprep.subr.bf16.mxu0 %v2474
  %3352 = vmatpush1.bf16.msra.mxu0 %v2473
  %3353 = vmatprep.subr.bf16.mxu0 %v2470
  %3354 = vmatpush1.bf16.msra.mxu0 %v2469
  %3355 = vmatprep.subr.bf16.mxu0 %v2466
  %3356 = vmatpush1.bf16.msra.mxu0 %v2465
  %3357 = vmatprep.subr.bf16.mxu0 %v2462
  %3358 = vmatpush1.bf16.msra.mxu0 %v2461
  %3359 = vmatprep.subr.bf16.mxu0 %v2458
  %3360 = vmatpush1.bf16.msra.mxu0 %v2457
  %3361 = vmatprep.subr.bf16.mxu0 %v2454
  %3362 = vmatpush1.bf16.msra.mxu0 %v2453
  %3363 = vmatprep.subr.bf16.mxu0 0
  %3364 = vmatpush2.bf16.msra.mxu0 0
  %3365 = vmatprep.subr.bf16.mxu0 0
  %3366 = vmatpush2.bf16.msra.mxu0 0
  %3367 = vmatprep.subr.bf16.mxu0 0
  %3368 = vmatpush2.bf16.msra.mxu0 0
  %3369 = vmatprep.subr.bf16.mxu0 0
  %3370 = vmatpush2.bf16.msra.mxu0 0
  %3371 = vmatprep.subr.bf16.mxu0 0
  %3372 = vmatpush2.bf16.msra.mxu0 0
  %3373 = vmatprep.subr.bf16.mxu0 0
  %3374 = vmatpush2.bf16.msra.mxu0 0
  %3375 = vmatprep.subr.bf16.mxu0 0
  %3376 = vmatpush2.bf16.msra.mxu0 0
  %3377 = vmatprep.subr.bf16.mxu0 0
  %3378 = vmatpush2.bf16.msra.mxu0 0
  %3379 = vmatprep.mubr.bf16.mxu0 0
  %3380 = vmatmul.mubr.bf16.gmra.mxu0 %v3305
  %v3381 = vpop.f32.mrf.mxu0
  %v3382 = vadd.f32 0.0, %v3381
  %v3383 = vpop.f32.mrf.mxu0
  %v3384 = vadd.f32 0.0, %v3383
  %v3385 = vpop.f32.mrf.mxu0
  %v3386 = vpop.f32.mrf.mxu0
  %3387 = vdwg.mxu0
  %v3388 = vadd.f32 %v3301, %v3341
  %v3389 = vadd.f32 %v3302, %v3343
  %v3390 = vadd.f32 %v3303, %v3382
  %v3391 = vadd.f32 %v3304, %v3384
  %v3392 = vsub.f32 0.0, %v3388
  %v3393 = vmul.f32 %v3392, 1.442695
  %v3394 = vpow.pop %v3393
  %v3395 = vadd.f32 %v3394, 1.0
  %v3396 = vrcp.pop %v3395
  %v3397 = vsub.f32 0.0, %v3389
  %v3398 = vmul.f32 %v3397, 1.442695
  %v3399 = vpow.pop %v3398
  %v3400 = vadd.f32 %v3399, 1.0
  %v3401 = vrcp.pop %v3400
  %v3402 = vtanh.pop %v3390
  %v3403 = vsub.f32 0.0, %v3391
  %v3404 = vmul.f32 %v3403, 1.442695
  %v3405 = vpow.pop %v3404
  %v3406 = vadd.f32 %v3405, 1.0
  %v3407 = vrcp.pop %v3406
  %v3408 = vmul.f32 %v3401, %v3297
  %v3409 = vmul.f32 %v3396, %v3402
  %v3410 = vadd.f32 %v3408, %v3409
  %v3411 = vtanh.pop %v3410
  %v3412 = vmul.f32 %v3407, %v3411
  %3413 = vst [vmem:[#allocation4 + $0x38] sm:$0xff] %v3412
  %v3414 = vld [vmem:[#allocation4] sm:$0xff]
  %v3415 = vld [vmem:[#allocation4 + $0x8] sm:$0xff]
  %v3416 = vld [vmem:[#allocation4 + $0x10] sm:$0xff]
  %v3417 = vld [vmem:[#allocation4 + $0x18] sm:$0xff]
  %v3418 = vld [vmem:[#allocation4 + $0x20] sm:$0xff]
  %v3419 = vld [vmem:[#allocation4 + $0x28] sm:$0xff]
  %v3420 = vld [vmem:[#allocation4 + $0x30] sm:$0xff]
  %v3421 = vld [vmem:[#allocation4 + $0x38] sm:$0xff]
  %v3422 = vpack.c.bf16 %v3415, %v3414
  %v3423 = vpack.c.bf16 %v3417, %v3416
  %v3424 = vpack.c.bf16 %v3419, %v3418
  %v3425 = vpack.c.bf16 %v3421, %v3420
  %v3426 = vld [vmem:[%s9] sm:$0xf]
  %v3427 = vld [vmem:[%s9 + $0x4] sm:$0xf]
  %v3428 = vld [vmem:[%s9 + $0x8] sm:$0xf]
  %v3429 = vld [vmem:[%s9 + $0xc] sm:$0xf]
  %v3430 = vld [vmem:[%s9 + $0x10] sm:$0xf]
  %v3431 = vld [vmem:[%s9 + $0x14] sm:$0xf]
  %v3432 = vld [vmem:[%s9 + $0x18] sm:$0xf]
  %v3433 = vld [vmem:[%s9 + $0x1c] sm:$0xf]
  %v3434 = vld [vmem:[%s9 + $0x20] sm:$0xf]
  %v3435 = vld [vmem:[%s9 + $0x24] sm:$0xf]
  %v3436 = vld [vmem:[%s9 + $0x28] sm:$0xf]
  %v3437 = vld [vmem:[%s9 + $0x2c] sm:$0xf]
  %v3438 = vld [vmem:[%s9 + $0x30] sm:$0xf]
  %v3439 = vld [vmem:[%s9 + $0x34] sm:$0xf]
  %v3440 = vld [vmem:[%s9 + $0x38] sm:$0xf]
  %v3441 = vld [vmem:[%s9 + $0x3c] sm:$0xf]
  %v3442 = vld [vmem:[%s10] sm:$0x1]
  %v3444 = vlaneseq
  %v3445 = vshrl.u32 %v3444, 7
  %v3446 = vsub.s32 0, %v3445
  %v3447 = vrot.slane %v3442, %v3446
  %v3465 = vunpack.c.l.b16 %v3426
  %v3466 = vunpack.c.l.b16 %v3427
  %v3467 = vunpack.c.l.b16 %v3428
  %v3468 = vunpack.c.l.b16 %v3429
  %v3469 = vunpack.c.l.b16 %v3430
  %v3470 = vunpack.c.l.b16 %v3431
  %v3471 = vunpack.c.l.b16 %v3432
  %v3472 = vunpack.c.l.b16 %v3433
  %v3473 = vunpack.c.l.b16 %v3434
  %v3474 = vunpack.c.l.b16 %v3435
  %v3475 = vunpack.c.l.b16 %v3436
  %v3476 = vunpack.c.l.b16 %v3437
  %v3477 = vunpack.c.l.b16 %v3438
  %v3478 = vunpack.c.l.b16 %v3439
  %v3479 = vunpack.c.l.b16 %v3440
  %v3480 = vunpack.c.l.b16 %v3441
  %v3481 = vpack.c.b16 %v3466, %v3465
  %v3482 = vpack.c.b16 %v3468, %v3467
  %v3483 = vpack.c.b16 %v3470, %v3469
  %v3484 = vpack.c.b16 %v3472, %v3471
  %v3485 = vpack.c.b16 %v3474, %v3473
  %v3486 = vpack.c.b16 %v3476, %v3475
  %v3487 = vpack.c.b16 %v3478, %v3477
  %v3488 = vpack.c.b16 %v3480, %v3479
  %3497 = vmatprep.subr.bf16.mxu0 0
  %3498 = vmatpush1.bf16.msra.mxu0 %v3488
  %3499 = vmatprep.subr.bf16.mxu0 0
  %3500 = vmatpush1.bf16.msra.mxu0 %v3487
  %3501 = vmatprep.subr.bf16.mxu0 0
  %3502 = vmatpush1.bf16.msra.mxu0 %v3486
  %3503 = vmatprep.subr.bf16.mxu0 0
  %3504 = vmatpush1.bf16.msra.mxu0 %v3485
  %3505 = vmatprep.subr.bf16.mxu0 0
  %3506 = vmatpush1.bf16.msra.mxu0 %v3484
  %3507 = vmatprep.subr.bf16.mxu0 0
  %3508 = vmatpush1.bf16.msra.mxu0 %v3483
  %3509 = vmatprep.subr.bf16.mxu0 0
  %3510 = vmatpush1.bf16.msra.mxu0 %v3482
  %3511 = vmatprep.subr.bf16.mxu0 0
  %3512 = vmatpush1.bf16.msra.mxu0 %v3481
  %3513 = vmatprep.subr.bf16.mxu0 0
  %3514 = vmatpush2.bf16.msra.mxu0 0
  %3515 = vmatprep.subr.bf16.mxu0 0
  %3516 = vmatpush2.bf16.msra.mxu0 0
  %3517 = vmatprep.subr.bf16.mxu0 0
  %3518 = vmatpush2.bf16.msra.mxu0 0
  %3519 = vmatprep.subr.bf16.mxu0 0
  %3520 = vmatpush2.bf16.msra.mxu0 0
  %3521 = vmatprep.subr.bf16.mxu0 0
  %3522 = vmatpush2.bf16.msra.mxu0 0
  %3523 = vmatprep.subr.bf16.mxu0 0
  %3524 = vmatpush2.bf16.msra.mxu0 0
  %3525 = vmatprep.subr.bf16.mxu0 0
  %3526 = vmatpush2.bf16.msra.mxu0 0
  %3527 = vmatprep.subr.bf16.mxu0 0
  %3528 = vmatpush2.bf16.msra.mxu0 0
  %3529 = vmatprep.mubr.bf16.mxu0 0
  %3530 = vmatmul.mubr.bf16.gmra.mxu0 %v3422
  %v3531 = vpop.f32.mrf.mxu0
  %v3532 = vadd.f32 %v3447, %v3531
  %v3533 = vpop.f32.mrf.mxu0
  %v3534 = vpop.f32.mrf.mxu0
  %v3535 = vadd.f32 %v3447, %v3534
  %v3536 = vpop.f32.mrf.mxu0
  %3537 = vmatprep.mubr.bf16.mxu0 0
  %3538 = vmatmul.mubr.bf16.gmra.mxu0 %v3423
  %v3539 = vpop.f32.mrf.mxu0
  %v3540 = vadd.f32 %v3447, %v3539
  %v3541 = vpop.f32.mrf.mxu0
  %v3542 = vpop.f32.mrf.mxu0
  %v3543 = vadd.f32 %v3447, %v3542
  %v3544 = vpop.f32.mrf.mxu0
  %3545 = vmatprep.mubr.bf16.mxu0 0
  %3546 = vmatmul.mubr.bf16.gmra.mxu0 %v3424
  %v3547 = vpop.f32.mrf.mxu0
  %v3548 = vadd.f32 %v3447, %v3547
  %v3549 = vpop.f32.mrf.mxu0
  %v3550 = vpop.f32.mrf.mxu0
  %v3551 = vadd.f32 %v3447, %v3550
  %v3552 = vpop.f32.mrf.mxu0
  %3553 = vmatprep.mubr.bf16.mxu0 0
  %3554 = vmatmul.mubr.bf16.gmra.mxu0 %v3425
  %v3555 = vpop.f32.mrf.mxu0
  %v3556 = vadd.f32 %v3447, %v3555
  %v3557 = vpop.f32.mrf.mxu0
  %v3558 = vpop.f32.mrf.mxu0
  %v3559 = vadd.f32 %v3447, %v3558
  %v3560 = vpop.f32.mrf.mxu0
  %3561 = vdwg.mxu0
  %v3562 = vpack.c.bf16 %v3535, %v3532
  %v3563 = vpack.c.bf16 %v3543, %v3540
  %v3564 = vpack.c.bf16 %v3551, %v3548
  %v3565 = vpack.c.bf16 %v3559, %v3556
  %v3566 = vld [vmem:[%s11] sm:$0xf]
  %v3567 = vld [vmem:[%s11 + $0x4] sm:$0xf]
  %v3568 = vld [vmem:[%s11 + $0x8] sm:$0xf]
  %v3569 = vld [vmem:[%s11 + $0xc] sm:$0xf]
  %v3570 = vld [vmem:[%s11 + $0x10] sm:$0xf]
  %v3571 = vld [vmem:[%s11 + $0x14] sm:$0xf]
  %v3572 = vld [vmem:[%s11 + $0x18] sm:$0xf]
  %v3573 = vld [vmem:[%s11 + $0x1c] sm:$0xf]
  %v3574 = vld [vmem:[%s12] sm:$0x1]
  %v3576 = vlaneseq
  %v3577 = vshrl.u32 %v3576, 7
  %v3578 = vsub.s32 0, %v3577
  %v3579 = vrot.slane %v3574, %v3578
  %v3589 = vunpack.c.l.b16 %v3566
  %v3590 = vunpack.c.l.b16 %v3567
  %v3591 = vunpack.c.l.b16 %v3568
  %v3592 = vunpack.c.l.b16 %v3569
  %v3593 = vunpack.c.l.b16 %v3570
  %v3594 = vunpack.c.l.b16 %v3571
  %v3595 = vunpack.c.l.b16 %v3572
  %v3596 = vunpack.c.l.b16 %v3573
  %v3597 = vpack.c.b16 %v3590, %v3589
  %v3598 = vpack.c.b16 %v3592, %v3591
  %v3599 = vpack.c.b16 %v3594, %v3593
  %v3600 = vpack.c.b16 %v3596, %v3595
  %vm3605 = vcmask 523264
  %v3607 = vsel %vm3605, %v3562, 0
  %v3610 = vsel %vm3605, %v3563, 0
  %v3613 = vsel %vm3605, %v3564, 0
  %v3616 = vsel %vm3605, %v3565, 0
  %3618 = vmatprep.subr.bf16.mxu0 0
  %3619 = vmatpush1.bf16.msra.mxu0 0
  %3620 = vmatprep.subr.bf16.mxu0 0
  %3621 = vmatpush1.bf16.msra.mxu0 0
  %3622 = vmatprep.subr.bf16.mxu0 0
  %3623 = vmatpush1.bf16.msra.mxu0 0
  %3624 = vmatprep.subr.bf16.mxu0 0
  %3625 = vmatpush1.bf16.msra.mxu0 0
  %3626 = vmatprep.subr.bf16.mxu0 0
  %3627 = vmatpush1.bf16.msra.mxu0 %v3600
  %3628 = vmatprep.subr.bf16.mxu0 0
  %3629 = vmatpush1.bf16.msra.mxu0 %v3599
  %3630 = vmatprep.subr.bf16.mxu0 0
  %3631 = vmatpush1.bf16.msra.mxu0 %v3598
  %3632 = vmatprep.subr.bf16.mxu0 0
  %3633 = vmatpush1.bf16.msra.mxu0 %v3597
  %3634 = vmatprep.subr.bf16.mxu0 0
  %3635 = vmatpush2.bf16.msra.mxu0 0
  %3636 = vmatprep.subr.bf16.mxu0 0
  %3637 = vmatpush2.bf16.msra.mxu0 0
  %3638 = vmatprep.subr.bf16.mxu0 0
  %3639 = vmatpush2.bf16.msra.mxu0 0
  %3640 = vmatprep.subr.bf16.mxu0 0
  %3641 = vmatpush2.bf16.msra.mxu0 0
  %3642 = vmatprep.subr.bf16.mxu0 0
  %3643 = vmatpush2.bf16.msra.mxu0 0
  %3644 = vmatprep.subr.bf16.mxu0 0
  %3645 = vmatpush2.bf16.msra.mxu0 0
  %3646 = vmatprep.subr.bf16.mxu0 0
  %3647 = vmatpush2.bf16.msra.mxu0 0
  %3648 = vmatprep.subr.bf16.mxu0 0
  %3649 = vmatpush2.bf16.msra.mxu0 0
  %3650 = vmatprep.mubr.bf16.mxu0 0
  %3651 = vmatmul.mubr.bf16.gmra.mxu0 %v3607
  %v3652 = vpop.f32.mrf.mxu0
  %v3653 = vadd.f32 %v3579, %v3652
  %v3654 = vpop.f32.mrf.mxu0
  %v3655 = vpop.f32.mrf.mxu0
  %v3656 = vadd.f32 %v3579, %v3655
  %v3657 = vpop.f32.mrf.mxu0
  %3658 = vmatprep.mubr.bf16.mxu0 0
  %3659 = vmatmul.mubr.bf16.gmra.mxu0 %v3610
  %v3660 = vpop.f32.mrf.mxu0
  %v3661 = vadd.f32 %v3579, %v3660
  %v3662 = vpop.f32.mrf.mxu0
  %v3663 = vpop.f32.mrf.mxu0
  %v3664 = vadd.f32 %v3579, %v3663
  %v3665 = vpop.f32.mrf.mxu0
  %3666 = vmatprep.mubr.bf16.mxu0 0
  %3667 = vmatmul.mubr.bf16.gmra.mxu0 %v3613
  %v3668 = vpop.f32.mrf.mxu0
  %v3669 = vadd.f32 %v3579, %v3668
  %v3670 = vpop.f32.mrf.mxu0
  %v3671 = vpop.f32.mrf.mxu0
  %v3672 = vadd.f32 %v3579, %v3671
  %v3673 = vpop.f32.mrf.mxu0
  %3674 = vmatprep.mubr.bf16.mxu0 0
  %3675 = vmatmul.mubr.bf16.gmra.mxu0 %v3616
  %v3676 = vpop.f32.mrf.mxu0
  %v3677 = vadd.f32 %v3579, %v3676
  %v3678 = vpop.f32.mrf.mxu0
  %v3679 = vpop.f32.mrf.mxu0
  %v3680 = vadd.f32 %v3579, %v3679
  %v3681 = vpop.f32.mrf.mxu0
  %3682 = vdwg.mxu0
  %v3683 = vmax.f32 %v3653, 0.0
  %v3684 = vmax.f32 %v3656, 0.0
  %v3685 = vmax.f32 %v3661, 0.0
  %v3686 = vmax.f32 %v3664, 0.0
  %v3687 = vmax.f32 %v3669, 0.0
  %v3688 = vmax.f32 %v3672, 0.0
  %v3689 = vmax.f32 %v3677, 0.0
  %v3690 = vmax.f32 %v3680, 0.0
  %v3691 = vand.u32 2147483647, %v3653
  %v3692 = vand.u32 2147483647, %v3656
  %v3693 = vand.u32 2147483647, %v3661
  %v3694 = vand.u32 2147483647, %v3664
  %v3695 = vand.u32 2147483647, %v3669
  %v3696 = vand.u32 2147483647, %v3672
  %v3697 = vand.u32 2147483647, %v3677
  %v3698 = vand.u32 2147483647, %v3680
  %v3699 = vsub.f32 0.0, %v3691
  %v3700 = vsub.f32 0.0, %v3692
  %v3701 = vsub.f32 0.0, %v3693
  %v3702 = vsub.f32 0.0, %v3694
  %v3703 = vsub.f32 0.0, %v3695
  %v3704 = vsub.f32 0.0, %v3696
  %v3705 = vsub.f32 0.0, %v3697
  %v3706 = vsub.f32 0.0, %v3698
  %v3707 = vmul.f32 %v3699, 1.442695
  %v3708 = vpow.pop %v3707
  %v3709 = vmul.f32 %v3700, 1.442695
  %v3710 = vpow.pop %v3709
  %v3711 = vmul.f32 %v3701, 1.442695
  %v3712 = vpow.pop %v3711
  %v3713 = vmul.f32 %v3702, 1.442695
  %v3714 = vpow.pop %v3713
  %v3715 = vmul.f32 %v3703, 1.442695
  %v3716 = vpow.pop %v3715
  %v3717 = vmul.f32 %v3704, 1.442695
  %v3718 = vpow.pop %v3717
  %v3719 = vmul.f32 %v3705, 1.442695
  %v3720 = vpow.pop %v3719
  %v3721 = vmul.f32 %v3706, 1.442695
  %v3722 = vpow.pop %v3721
  %v3723 = vadd.f32 %v3708, 1.0
  %v3724 = vadd.f32 %v3710, 1.0
  %v3725 = vadd.f32 %v3712, 1.0
  %v3726 = vadd.f32 %v3714, 1.0
  %v3727 = vadd.f32 %v3716, 1.0
  %v3728 = vadd.f32 %v3718, 1.0
  %v3729 = vadd.f32 %v3720, 1.0
  %v3730 = vadd.f32 %v3722, 1.0
  %v3731 = vlog2.pop %v3723
  %v3732 = vmul.f32 %v3731, 0.6931472
  %v3733 = vlog2.pop %v3724
  %v3734 = vmul.f32 %v3733, 0.6931472
  %v3735 = vlog2.pop %v3725
  %v3736 = vmul.f32 %v3735, 0.6931472
  %v3737 = vlog2.pop %v3726
  %v3738 = vmul.f32 %v3737, 0.6931472
  %v3739 = vlog2.pop %v3727
  %v3740 = vmul.f32 %v3739, 0.6931472
  %v3741 = vlog2.pop %v3728
  %v3742 = vmul.f32 %v3741, 0.6931472
  %v3743 = vlog2.pop %v3729
  %v3744 = vmul.f32 %v3743, 0.6931472
  %v3745 = vlog2.pop %v3730
  %v3746 = vmul.f32 %v3745, 0.6931472
  %v3747 = vadd.f32 %v3683, %v3732
  %v3748 = vadd.f32 %v3684, %v3734
  %v3749 = vadd.f32 %v3685, %v3736
  %v3750 = vadd.f32 %v3686, %v3738
  %v3751 = vadd.f32 %v3687, %v3740
  %v3752 = vadd.f32 %v3688, %v3742
  %v3753 = vadd.f32 %v3689, %v3744
  %v3754 = vadd.f32 %v3690, %v3746
  %v3755 = vtanh.pop %v3747
  %v3756 = vtanh.pop %v3748
  %v3757 = vtanh.pop %v3749
  %v3758 = vtanh.pop %v3750
  %v3759 = vtanh.pop %v3751
  %v3760 = vtanh.pop %v3752
  %v3761 = vtanh.pop %v3753
  %v3762 = vtanh.pop %v3754
  %v3763 = vmul.f32 %v3653, %v3755
  %v3764 = vmul.f32 %v3656, %v3756
  %v3765 = vmul.f32 %v3661, %v3757
  %v3766 = vmul.f32 %v3664, %v3758
  %v3767 = vmul.f32 %v3669, %v3759
  %v3768 = vmul.f32 %v3672, %v3760
  %v3769 = vmul.f32 %v3677, %v3761
  %v3770 = vmul.f32 %v3680, %v3762
  %v3771 = vpack.c.bf16 %v3764, %v3763
  %v3772 = vpack.c.bf16 %v3766, %v3765
  %v3773 = vpack.c.bf16 %v3768, %v3767
  %v3774 = vpack.c.bf16 %v3770, %v3769
  %v3775 = vld [vmem:[%s13] sm:$0xf]
  %v3776 = vld [vmem:[%s13 + $0x4] sm:$0xf]
  %v3777 = vld [vmem:[%s13 + $0x8] sm:$0xf]
  %v3778 = vld [vmem:[%s13 + $0xc] sm:$0xf]
  %v3779 = vld [vmem:[%s13 + $0x10] sm:$0xf]
  %v3780 = vld [vmem:[%s13 + $0x14] sm:$0xf]
  %v3781 = vld [vmem:[%s13 + $0x18] sm:$0xf]
  %v3782 = vld [vmem:[%s13 + $0x1c] sm:$0xf]
  %v3783 = vld [vmem:[%s13 + $0x20] sm:$0xf]
  %v3784 = vld [vmem:[%s13 + $0x24] sm:$0xf]
  %v3785 = vld [vmem:[%s13 + $0x28] sm:$0xf]
  %v3786 = vld [vmem:[%s13 + $0x2c] sm:$0xf]
  %v3787 = vld [vmem:[%s13 + $0x30] sm:$0xf]
  %v3788 = vld [vmem:[%s13 + $0x34] sm:$0xf]
  %v3789 = vld [vmem:[%s13 + $0x38] sm:$0xf]
  %v3790 = vld [vmem:[%s13 + $0x3c] sm:$0xf]
  %v3791 = vld [vmem:[%s14] sm:$0x1]
  %v3793 = vlaneseq
  %v3794 = vshrl.u32 %v3793, 7
  %v3795 = vsub.s32 0, %v3794
  %v3796 = vrot.slane %v3791, %v3795
  %v3814 = vunpack.c.l.b16 %v3775
  %v3815 = vunpack.c.l.b16 %v3776
  %v3816 = vunpack.c.l.b16 %v3777
  %v3817 = vunpack.c.l.b16 %v3778
  %v3818 = vunpack.c.l.b16 %v3779
  %v3819 = vunpack.c.l.b16 %v3780
  %v3820 = vunpack.c.l.b16 %v3781
  %v3821 = vunpack.c.l.b16 %v3782
  %v3822 = vunpack.c.l.b16 %v3783
  %v3823 = vunpack.c.l.b16 %v3784
  %v3824 = vunpack.c.l.b16 %v3785
  %v3825 = vunpack.c.l.b16 %v3786
  %v3826 = vunpack.c.l.b16 %v3787
  %v3827 = vunpack.c.l.b16 %v3788
  %v3828 = vunpack.c.l.b16 %v3789
  %v3829 = vunpack.c.l.b16 %v3790
  %v3830 = vpack.c.b16 %v3815, %v3814
  %v3831 = vpack.c.b16 %v3817, %v3816
  %v3832 = vpack.c.b16 %v3819, %v3818
  %v3833 = vpack.c.b16 %v3821, %v3820
  %v3834 = vpack.c.b16 %v3823, %v3822
  %v3835 = vpack.c.b16 %v3825, %v3824
  %v3836 = vpack.c.b16 %v3827, %v3826
  %v3837 = vpack.c.b16 %v3829, %v3828
  %3846 = vmatprep.subr.bf16.mxu0 0
  %3847 = vmatpush1.bf16.msra.mxu0 %v3837
  %3848 = vmatprep.subr.bf16.mxu0 0
  %3849 = vmatpush1.bf16.msra.mxu0 %v3836
  %3850 = vmatprep.subr.bf16.mxu0 0
  %3851 = vmatpush1.bf16.msra.mxu0 %v3835
  %3852 = vmatprep.subr.bf16.mxu0 0
  %3853 = vmatpush1.bf16.msra.mxu0 %v3834
  %3854 = vmatprep.subr.bf16.mxu0 0
  %3855 = vmatpush1.bf16.msra.mxu0 %v3833
  %3856 = vmatprep.subr.bf16.mxu0 0
  %3857 = vmatpush1.bf16.msra.mxu0 %v3832
  %3858 = vmatprep.subr.bf16.mxu0 0
  %3859 = vmatpush1.bf16.msra.mxu0 %v3831
  %3860 = vmatprep.subr.bf16.mxu0 0
  %3861 = vmatpush1.bf16.msra.mxu0 %v3830
  %3862 = vmatprep.subr.bf16.mxu0 0
  %3863 = vmatpush2.bf16.msra.mxu0 0
  %3864 = vmatprep.subr.bf16.mxu0 0
  %3865 = vmatpush2.bf16.msra.mxu0 0
  %3866 = vmatprep.subr.bf16.mxu0 0
  %3867 = vmatpush2.bf16.msra.mxu0 0
  %3868 = vmatprep.subr.bf16.mxu0 0
  %3869 = vmatpush2.bf16.msra.mxu0 0
  %3870 = vmatprep.subr.bf16.mxu0 0
  %3871 = vmatpush2.bf16.msra.mxu0 0
  %3872 = vmatprep.subr.bf16.mxu0 0
  %3873 = vmatpush2.bf16.msra.mxu0 0
  %3874 = vmatprep.subr.bf16.mxu0 0
  %3875 = vmatpush2.bf16.msra.mxu0 0
  %3876 = vmatprep.subr.bf16.mxu0 0
  %3877 = vmatpush2.bf16.msra.mxu0 0
  %3878 = vmatprep.mubr.bf16.mxu0 0
  %3879 = vmatmul.mubr.bf16.gmra.mxu0 %v3771
  %v3880 = vpop.f32.mrf.mxu0
  %v3881 = vadd.f32 %v3796, %v3880
  %v3882 = vpop.f32.mrf.mxu0
  %v3883 = vpop.f32.mrf.mxu0
  %v3884 = vadd.f32 %v3796, %v3883
  %v3885 = vpop.f32.mrf.mxu0
  %3886 = vmatprep.mubr.bf16.mxu0 0
  %3887 = vmatmul.mubr.bf16.gmra.mxu0 %v3772
  %v3888 = vpop.f32.mrf.mxu0
  %v3889 = vadd.f32 %v3796, %v3888
  %v3890 = vpop.f32.mrf.mxu0
  %v3891 = vpop.f32.mrf.mxu0
  %v3892 = vadd.f32 %v3796, %v3891
  %v3893 = vpop.f32.mrf.mxu0
  %3894 = vmatprep.mubr.bf16.mxu0 0
  %3895 = vmatmul.mubr.bf16.gmra.mxu0 %v3773
  %v3896 = vpop.f32.mrf.mxu0
  %v3897 = vadd.f32 %v3796, %v3896
  %v3898 = vpop.f32.mrf.mxu0
  %v3899 = vpop.f32.mrf.mxu0
  %v3900 = vadd.f32 %v3796, %v3899
  %v3901 = vpop.f32.mrf.mxu0
  %3902 = vmatprep.mubr.bf16.mxu0 0
  %3903 = vmatmul.mubr.bf16.gmra.mxu0 %v3774
  %v3904 = vpop.f32.mrf.mxu0
  %v3905 = vadd.f32 %v3796, %v3904
  %v3906 = vpop.f32.mrf.mxu0
  %v3907 = vpop.f32.mrf.mxu0
  %v3908 = vadd.f32 %v3796, %v3907
  %v3909 = vpop.f32.mrf.mxu0
  %3910 = vdwg.mxu0
  %v3911 = vmax.f32 %v3881, 0.0
  %v3912 = vmax.f32 %v3884, 0.0
  %v3913 = vmax.f32 %v3889, 0.0
  %v3914 = vmax.f32 %v3892, 0.0
  %v3915 = vmax.f32 %v3897, 0.0
  %v3916 = vmax.f32 %v3900, 0.0
  %v3917 = vmax.f32 %v3905, 0.0
  %v3918 = vmax.f32 %v3908, 0.0
  %v3919 = vand.u32 2147483647, %v3881
  %v3920 = vand.u32 2147483647, %v3884
  %v3921 = vand.u32 2147483647, %v3889
  %v3922 = vand.u32 2147483647, %v3892
  %v3923 = vand.u32 2147483647, %v3897
  %v3924 = vand.u32 2147483647, %v3900
  %v3925 = vand.u32 2147483647, %v3905
  %v3926 = vand.u32 2147483647, %v3908
  %v3927 = vsub.f32 0.0, %v3919
  %v3928 = vsub.f32 0.0, %v3920
  %v3929 = vsub.f32 0.0, %v3921
  %v3930 = vsub.f32 0.0, %v3922
  %v3931 = vsub.f32 0.0, %v3923
  %v3932 = vsub.f32 0.0, %v3924
  %v3933 = vsub.f32 0.0, %v3925
  %v3934 = vsub.f32 0.0, %v3926
  %v3935 = vmul.f32 %v3927, 1.442695
  %v3936 = vpow.pop %v3935
  %v3937 = vmul.f32 %v3928, 1.442695
  %v3938 = vpow.pop %v3937
  %v3939 = vmul.f32 %v3929, 1.442695
  %v3940 = vpow.pop %v3939
  %v3941 = vmul.f32 %v3930, 1.442695
  %v3942 = vpow.pop %v3941
  %v3943 = vmul.f32 %v3931, 1.442695
  %v3944 = vpow.pop %v3943
  %v3945 = vmul.f32 %v3932, 1.442695
  %v3946 = vpow.pop %v3945
  %v3947 = vmul.f32 %v3933, 1.442695
  %v3948 = vpow.pop %v3947
  %v3949 = vmul.f32 %v3934, 1.442695
  %v3950 = vpow.pop %v3949
  %v3951 = vadd.f32 %v3936, 1.0
  %v3952 = vadd.f32 %v3938, 1.0
  %v3953 = vadd.f32 %v3940, 1.0
  %v3954 = vadd.f32 %v3942, 1.0
  %v3955 = vadd.f32 %v3944, 1.0
  %v3956 = vadd.f32 %v3946, 1.0
  %v3957 = vadd.f32 %v3948, 1.0
  %v3958 = vadd.f32 %v3950, 1.0
  %v3959 = vlog2.pop %v3951
  %v3960 = vmul.f32 %v3959, 0.6931472
  %v3961 = vlog2.pop %v3952
  %v3962 = vmul.f32 %v3961, 0.6931472
  %v3963 = vlog2.pop %v3953
  %v3964 = vmul.f32 %v3963, 0.6931472
  %v3965 = vlog2.pop %v3954
  %v3966 = vmul.f32 %v3965, 0.6931472
  %v3967 = vlog2.pop %v3955
  %v3968 = vmul.f32 %v3967, 0.6931472
  %v3969 = vlog2.pop %v3956
  %v3970 = vmul.f32 %v3969, 0.6931472
  %v3971 = vlog2.pop %v3957
  %v3972 = vmul.f32 %v3971, 0.6931472
  %v3973 = vlog2.pop %v3958
  %v3974 = vmul.f32 %v3973, 0.6931472
  %v3975 = vadd.f32 %v3911, %v3960
  %v3976 = vadd.f32 %v3912, %v3962
  %v3977 = vadd.f32 %v3913, %v3964
  %v3978 = vadd.f32 %v3914, %v3966
  %v3979 = vadd.f32 %v3915, %v3968
  %v3980 = vadd.f32 %v3916, %v3970
  %v3981 = vadd.f32 %v3917, %v3972
  %v3982 = vadd.f32 %v3918, %v3974
  %v3983 = vtanh.pop %v3975
  %v3984 = vtanh.pop %v3976
  %v3985 = vtanh.pop %v3977
  %v3986 = vtanh.pop %v3978
  %v3987 = vtanh.pop %v3979
  %v3988 = vtanh.pop %v3980
  %v3989 = vtanh.pop %v3981
  %v3990 = vtanh.pop %v3982
  %v3991 = vmul.f32 %v3881, %v3983
  %v3992 = vmul.f32 %v3884, %v3984
  %v3993 = vmul.f32 %v3889, %v3985
  %v3994 = vmul.f32 %v3892, %v3986
  %v3995 = vmul.f32 %v3897, %v3987
  %v3996 = vmul.f32 %v3900, %v3988
  %v3997 = vmul.f32 %v3905, %v3989
  %v3998 = vmul.f32 %v3908, %v3990
  %v3999 = vpack.c.bf16 %v3992, %v3991
  %v4000 = vpack.c.bf16 %v3994, %v3993
  %v4001 = vpack.c.bf16 %v3996, %v3995
  %v4002 = vpack.c.bf16 %v3998, %v3997
  %v4003 = vld [vmem:[%s15] sm:$0xf]
  %v4004 = vld [vmem:[%s15 + $0x4] sm:$0xf]
  %v4005 = vld [vmem:[%s15 + $0x8] sm:$0xf]
  %v4006 = vld [vmem:[%s15 + $0xc] sm:$0xf]
  %v4007 = vld [vmem:[%s15 + $0x10] sm:$0xf]
  %v4008 = vld [vmem:[%s15 + $0x14] sm:$0xf]
  %v4009 = vld [vmem:[%s15 + $0x18] sm:$0xf]
  %v4010 = vld [vmem:[%s15 + $0x1c] sm:$0xf]
  %v4011 = vld [vmem:[%s16] sm:$0x1]
  %v4013 = vlaneseq
  %v4014 = vshrl.u32 %v4013, 7
  %v4015 = vsub.s32 0, %v4014
  %v4016 = vrot.slane %v4011, %v4015
  %v4026 = vunpack.c.l.b16 %v4003
  %v4027 = vunpack.c.l.b16 %v4004
  %v4028 = vunpack.c.l.b16 %v4005
  %v4029 = vunpack.c.l.b16 %v4006
  %v4030 = vunpack.c.l.b16 %v4007
  %v4031 = vunpack.c.l.b16 %v4008
  %v4032 = vunpack.c.l.b16 %v4009
  %v4033 = vunpack.c.l.b16 %v4010
  %v4034 = vpack.c.b16 %v4027, %v4026
  %v4035 = vpack.c.b16 %v4029, %v4028
  %v4036 = vpack.c.b16 %v4031, %v4030
  %v4037 = vpack.c.b16 %v4033, %v4032
  %v4043 = vsel %vm3605, %v3999, 0
  %v4046 = vsel %vm3605, %v4000, 0
  %v4049 = vsel %vm3605, %v4001, 0
  %v4052 = vsel %vm3605, %v4002, 0
  %4054 = vmatprep.subr.bf16.mxu0 0
  %4055 = vmatpush1.bf16.msra.mxu0 0
  %4056 = vmatprep.subr.bf16.mxu0 0
  %4057 = vmatpush1.bf16.msra.mxu0 0
  %4058 = vmatprep.subr.bf16.mxu0 0
  %4059 = vmatpush1.bf16.msra.mxu0 0
  %4060 = vmatprep.subr.bf16.mxu0 0
  %4061 = vmatpush1.bf16.msra.mxu0 0
  %4062 = vmatprep.subr.bf16.mxu0 0
  %4063 = vmatpush1.bf16.msra.mxu0 %v4037
  %4064 = vmatprep.subr.bf16.mxu0 0
  %4065 = vmatpush1.bf16.msra.mxu0 %v4036
  %4066 = vmatprep.subr.bf16.mxu0 0
  %4067 = vmatpush1.bf16.msra.mxu0 %v4035
  %4068 = vmatprep.subr.bf16.mxu0 0
  %4069 = vmatpush1.bf16.msra.mxu0 %v4034
  %4070 = vmatprep.subr.bf16.mxu0 0
  %4071 = vmatpush2.bf16.msra.mxu0 0
  %4072 = vmatprep.subr.bf16.mxu0 0
  %4073 = vmatpush2.bf16.msra.mxu0 0
  %4074 = vmatprep.subr.bf16.mxu0 0
  %4075 = vmatpush2.bf16.msra.mxu0 0
  %4076 = vmatprep.subr.bf16.mxu0 0
  %4077 = vmatpush2.bf16.msra.mxu0 0
  %4078 = vmatprep.subr.bf16.mxu0 0
  %4079 = vmatpush2.bf16.msra.mxu0 0
  %4080 = vmatprep.subr.bf16.mxu0 0
  %4081 = vmatpush2.bf16.msra.mxu0 0
  %4082 = vmatprep.subr.bf16.mxu0 0
  %4083 = vmatpush2.bf16.msra.mxu0 0
  %4084 = vmatprep.subr.bf16.mxu0 0
  %4085 = vmatpush2.bf16.msra.mxu0 0
  %4086 = vmatprep.mubr.bf16.mxu0 0
  %4087 = vmatmul.mubr.bf16.gmra.mxu0 %v4043
  %v4088 = vpop.f32.mrf.mxu0
  %v4089 = vadd.f32 %v4016, %v4088
  %v4090 = vpop.f32.mrf.mxu0
  %v4091 = vpop.f32.mrf.mxu0
  %v4092 = vadd.f32 %v4016, %v4091
  %v4093 = vpop.f32.mrf.mxu0
  %4094 = vmatprep.mubr.bf16.mxu0 0
  %4095 = vmatmul.mubr.bf16.gmra.mxu0 %v4046
  %v4096 = vpop.f32.mrf.mxu0
  %v4097 = vadd.f32 %v4016, %v4096
  %v4098 = vpop.f32.mrf.mxu0
  %v4099 = vpop.f32.mrf.mxu0
  %v4100 = vadd.f32 %v4016, %v4099
  %v4101 = vpop.f32.mrf.mxu0
  %4102 = vmatprep.mubr.bf16.mxu0 0
  %4103 = vmatmul.mubr.bf16.gmra.mxu0 %v4049
  %v4104 = vpop.f32.mrf.mxu0
  %v4105 = vadd.f32 %v4016, %v4104
  %v4106 = vpop.f32.mrf.mxu0
  %v4107 = vpop.f32.mrf.mxu0
  %v4108 = vadd.f32 %v4016, %v4107
  %v4109 = vpop.f32.mrf.mxu0
  %4110 = vmatprep.mubr.bf16.mxu0 0
  %4111 = vmatmul.mubr.bf16.gmra.mxu0 %v4052
  %v4112 = vpop.f32.mrf.mxu0
  %v4113 = vadd.f32 %v4016, %v4112
  %v4114 = vpop.f32.mrf.mxu0
  %v4115 = vpop.f32.mrf.mxu0
  %v4116 = vadd.f32 %v4016, %v4115
  %v4117 = vpop.f32.mrf.mxu0
  %4118 = vdwg.mxu0
  %4119 = vst [vmem:[%s17] sm:$0xff] %v4089
  %s4120 = scalar_lea.vmem %s17, 8
  %4121 = vst [vmem:[%s4120] sm:$0xff] %v4092
  %s4122 = scalar_lea.vmem %s17, 16
  %4123 = vst [vmem:[%s4122] sm:$0xff] %v4097
  %s4124 = scalar_lea.vmem %s17, 24
  %4125 = vst [vmem:[%s4124] sm:$0xff] %v4100
  %s4126 = scalar_lea.vmem %s17, 32
  %4127 = vst [vmem:[%s4126] sm:$0xff] %v4105
  %s4128 = scalar_lea.vmem %s17, 40
  %4129 = vst [vmem:[%s4128] sm:$0xff] %v4108
  %s4130 = scalar_lea.vmem %s17, 48
  %4131 = vst [vmem:[%s4130] sm:$0xff] %v4113
  %s4132 = scalar_lea.vmem %s17, 56
  %4133 = vst [vmem:[%s4132] sm:$0xff] %v4116
  // Predicated region
  $region70: #{cnn_lstm_decoder.1} parent=0 // pred_check
    _
  $region71: #{cnn_lstm_decoder.1} parent=0 // pred_check_branch
    %4135 = sbr.rel (0) target = $region73
  $region72: #{cnn_lstm_decoder.1} parent=0 // pred_region
    _
  $region73: #{cnn_lstm_decoder.1} parent=0 // pred_fallthru
    _
  // Predicated region
  $region74: #{cnn_lstm_decoder.1} parent=0 // pred_check
    _
  $region75: #{cnn_lstm_decoder.1} parent=0 // pred_check_branch
    %4137 = sbr.rel (0) target = $region77
  $region76: #{cnn_lstm_decoder.1} parent=0 // pred_region
    _
  $region77: #{cnn_lstm_decoder.1} parent=0 // pred_fallthru
    _

</llo_original>
